<compile_context>
chip_gen: v5e
topology: v5e:2x2
jax: 0.10.0
libtpu: 0.0.40
codegen_flags: <defaults>
</compile_context>

<pallas_src>
import jax
import jax.numpy as jnp
from jax.experimental import pallas as pl
from jax.experimental.pallas import tpu as pltpu

HIDDEN = 512  # fixed by the module definition (Linear(512, 512))


def decoder_kernel(x_ref, w1_ref, b1_ref, w2_ref, b2_ref, o_ref):
    # In-kernel f32 -> bf16 cast (hidden under the matmul) instead of a wrapper pass.
    x_bf = x_ref[...].astype(jnp.bfloat16)
    # layer1: bf16 operands, f32 MXU accumulation, f32 bias.
    h = jnp.dot(x_bf, w1_ref[...], preferred_element_type=jnp.float32) + b1_ref[...]
    # OffloadFunction.forward is the identity (offloading only matters in backward).
    # TODO(synk): backward-pass CPU offload / x*2 recompute has no forward-kernel equivalent.
    # layer2: chain directly (no VMEM staging round-trip for h).
    y = jnp.dot(h.astype(jnp.bfloat16), w2_ref[...],
                preferred_element_type=jnp.float32) + b2_ref[...]
    o_ref[...] = y.astype(o_ref.dtype)


def prepare_params(w1, b1, w2, b2):
    """One-time parameter prep (hoisted out of the per-call path).

    Torch-layout (out, in) weights -> (in, out), cast to bf16 for the MXU;
    biases stay f32 and are lifted to 2-D for VMEM tiling.
    """
    w1_t = jnp.asarray(w1, jnp.float32).T.astype(jnp.bfloat16)   # (512, 512)
    w2_t = jnp.asarray(w2, jnp.float32).T.astype(jnp.bfloat16)   # (512, 512)
    b1_2d = jnp.asarray(b1, jnp.float32)[None, :]                # (1, 512)
    b2_2d = jnp.asarray(b2, jnp.float32)[None, :]                # (1, 512)
    return w1_t, b1_2d, w2_t, b2_2d


def _pick_tb(B):
    """Batch-tile heuristic.

    - B <= 128: one full-extent block (sidesteps the 8-row divisibility rule).
    - otherwise prefer 256-row blocks (fills v6e/v7x 256-wide MXU) when that still
      yields >= 2 blocks (both v7x TensorCores busy), else 128 (v5e MXU granule).
      The last block may be ragged; Pallas masks it.
    """
    if B <= 128:
        return B
    for tb in (256, 128):
        if B >= 2 * tb:
            return tb
    return 128


def offload_decoder_forward(x, w1_t, b1_2d, w2_t, b2_2d, *, tb=None,
                            out_dtype=jnp.bfloat16):
    """x: (B, 512) f32. Params from prepare_params(). Returns (B, 512) out_dtype."""
    B, D = x.shape
    assert D == HIDDEN

    if tb is None:
        tb = _pick_tb(B)
    num_blocks = pl.cdiv(B, tb)

    return pl.pallas_call(
        decoder_kernel,
        out_shape=jax.ShapeDtypeStruct((B, HIDDEN), out_dtype),
        grid=(num_blocks,),
        in_specs=[
            pl.BlockSpec((tb, HIDDEN), lambda i: (i, 0)),        # x tile (f32)
            pl.BlockSpec((HIDDEN, HIDDEN), lambda i: (0, 0)),    # W1 (grid-resident)
            pl.BlockSpec((1, HIDDEN), lambda i: (0, 0)),         # b1 (grid-resident)
            pl.BlockSpec((HIDDEN, HIDDEN), lambda i: (0, 0)),    # W2 (grid-resident)
            pl.BlockSpec((1, HIDDEN), lambda i: (0, 0)),         # b2 (grid-resident)
        ],
        out_specs=pl.BlockSpec((tb, HIDDEN), lambda i: (i, 0)),
        compiler_params=pltpu.CompilerParams(
            dimension_semantics=("parallel",),        # megacore-shardable on v7x
            vmem_limit_bytes=32 * 1024 * 1024,        # explicit budget, safe on v5e/v6e/v7x
        ),
    )(x, w1_t, b1_2d, w2_t, b2_2d)


if __name__ == "__main__":
    key = jax.random.PRNGKey(0)
    kx, kw1, kb1, kw2, kb2 = jax.random.split(key, 5)

    B = 256  # -> 2 parallel 128-row blocks (both v7x TensorCores busy)
    x = jax.random.normal(kx, (B, HIDDEN), dtype=jnp.float32)

    # Deterministic synthetic parameters (torch.nn.Linear-style shapes: (out, in)).
    bound = 1.0 / (HIDDEN ** 0.5)
    w1 = jax.random.uniform(kw1, (HIDDEN, HIDDEN), jnp.float32, -bound, bound)
    b1 = jax.random.uniform(kb1, (HIDDEN,), jnp.float32, -bound, bound)
    w2 = jax.random.uniform(kw2, (HIDDEN, HIDDEN), jnp.float32, -bound, bound)
    b2 = jax.random.uniform(kb2, (HIDDEN,), jnp.float32, -bound, bound)

    params = prepare_params(w1, b1, w2, b2)          # one-time, outside the hot path
    fwd = jax.jit(offload_decoder_forward)

    out = jax.block_until_ready(fwd(x, *params))

    # Reference in plain JAX (same math as the PyTorch forward, f32).
    ref = (x @ w1.T + b1) @ w2.T + b2
    assert out.shape == (B, HIDDEN)
    # bf16 weights/activations/output with f32 accumulation vs the pure-f32 reference.
    err = jnp.max(jnp.abs(out.astype(jnp.float32) - ref))
    assert jnp.allclose(out.astype(jnp.float32), ref, atol=3e-2, rtol=3e-2), float(err)

    # Ragged batch: 40 rows -> single full-extent (40, 512) block, no pad/slice.
    out_small = jax.block_until_ready(fwd(x[:40], *params))
    assert out_small.shape == (40, HIDDEN)
    assert jnp.allclose(out_small.astype(jnp.float32), ref[:40], atol=3e-2, rtol=3e-2)

    # Ragged multi-block batch: 200 rows -> blocks of 128, masked tail block.
    out_ragged = jax.block_until_ready(fwd(x[:200], *params))
    assert out_ragged.shape == (200, HIDDEN)
    assert jnp.allclose(out_ragged.astype(jnp.float32), ref[:200], atol=3e-2, rtol=3e-2)

    print("KERNEL_OK")
</pallas_src>

<mosaic_0001>
module attributes {stable_mosaic.version = 11 : i64} {
  func.func @decoder_kernel(%arg0: i32, %arg1: memref<128x512xf32, #tpu.memory_space<vmem>>, %arg2: memref<512x512xbf16, #tpu.memory_space<vmem>>, %arg3: memref<1x512xf32, #tpu.memory_space<vmem>>, %arg4: memref<512x512xbf16, #tpu.memory_space<vmem>>, %arg5: memref<1x512xf32, #tpu.memory_space<vmem>>, %arg6: memref<128x512xbf16, #tpu.memory_space<vmem>>) attributes {dimension_semantics = [#tpu.dimension_semantics<parallel>], iteration_bounds = array<i64: 2>, scalar_prefetch = 0 : i64, scratch_operands = 0 : i64, tpu.core_type = #tpu.core_type<tc>, window_params = [{transform_indices = @transform_0, window_bounds = array<i64: 128, 512>}, {pipeline_mode = #tpu.pipeline_mode<synchronous>, transform_indices = @transform_1, window_bounds = array<i64: 512, 512>}, {pipeline_mode = #tpu.pipeline_mode<synchronous>, transform_indices = @transform_2, window_bounds = array<i64: 1, 512>}, {pipeline_mode = #tpu.pipeline_mode<synchronous>, transform_indices = @transform_3, window_bounds = array<i64: 512, 512>}, {pipeline_mode = #tpu.pipeline_mode<synchronous>, transform_indices = @transform_4, window_bounds = array<i64: 1, 512>}, {transform_indices = @transform_5, window_bounds = array<i64: 128, 512>}]} {
    %c0 = arith.constant 0 : index
    %c0_0 = arith.constant 0 : index
    %0 = vector.load %arg1[%c0, %c0_0] : memref<128x512xf32, #tpu.memory_space<vmem>>, vector<128x512xf32>
    %1 = arith.truncf %0 : vector<128x512xf32> to vector<128x512xbf16>
    %c0_1 = arith.constant 0 : index
    %c0_2 = arith.constant 0 : index
    %2 = vector.load %arg2[%c0_1, %c0_2] : memref<512x512xbf16, #tpu.memory_space<vmem>>, vector<512x512xbf16>
    %cst = arith.constant dense<0.000000e+00> : vector<128x512xf32>
    %3 = tpu.matmul %1, %2, %cst {dimension_numbers = #tpu.dot_dimension_numbers<[1], [0], [0], [1], [0, 0, 1, 1], [], []>} : vector<128x512xbf16>, vector<512x512xbf16>, vector<128x512xf32> -> vector<128x512xf32>
    %c0_3 = arith.constant 0 : index
    %c0_4 = arith.constant 0 : index
    %4 = vector.load %arg3[%c0_3, %c0_4] : memref<1x512xf32, #tpu.memory_space<vmem>>, vector<1x512xf32>
    %5 = vector.broadcast %4 : vector<1x512xf32> to vector<128x512xf32>
    %6 = arith.addf %3, %5 : vector<128x512xf32>
    %7 = arith.truncf %6 : vector<128x512xf32> to vector<128x512xbf16>
    %c0_5 = arith.constant 0 : index
    %c0_6 = arith.constant 0 : index
    %8 = vector.load %arg4[%c0_5, %c0_6] : memref<512x512xbf16, #tpu.memory_space<vmem>>, vector<512x512xbf16>
    %cst_7 = arith.constant dense<0.000000e+00> : vector<128x512xf32>
    %9 = tpu.matmul %7, %8, %cst_7 {dimension_numbers = #tpu.dot_dimension_numbers<[1], [0], [0], [1], [0, 0, 1, 1], [], []>} : vector<128x512xbf16>, vector<512x512xbf16>, vector<128x512xf32> -> vector<128x512xf32>
    %c0_8 = arith.constant 0 : index
    %c0_9 = arith.constant 0 : index
    %10 = vector.load %arg5[%c0_8, %c0_9] : memref<1x512xf32, #tpu.memory_space<vmem>>, vector<1x512xf32>
    %11 = vector.broadcast %10 : vector<1x512xf32> to vector<128x512xf32>
    %12 = arith.addf %9, %11 : vector<128x512xf32>
    %13 = arith.truncf %12 : vector<128x512xf32> to vector<128x512xbf16>
    %c0_10 = arith.constant 0 : index
    %c0_11 = arith.constant 0 : index
    %14 = vector.load %arg6[%c0_10, %c0_11] : memref<128x512xbf16, #tpu.memory_space<vmem>>, vector<128x512xbf16>
    tpu.vector_store %arg6[%c0_10, %c0_11], %13 {strides = array<i32>} : memref<128x512xbf16, #tpu.memory_space<vmem>>, vector<128x512xbf16>,
    return
  }
  func.func @transform_0(%arg0: i32) -> (i32, i32) {
    %c0_i32 = arith.constant 0 : i32
    %c0_i32_0 = arith.constant 0 : i32
    return %arg0, %c0_i32 : i32, i32
  }
  func.func @transform_1(%arg0: i32) -> (i32, i32) {
    %c0_i32 = arith.constant 0 : i32
    %c0_i32_0 = arith.constant 0 : i32
    %c0_i32_1 = arith.constant 0 : i32
    return %c0_i32, %c0_i32_0 : i32, i32
  }
  func.func @transform_2(%arg0: i32) -> (i32, i32) {
    %c0_i32 = arith.constant 0 : i32
    %c0_i32_0 = arith.constant 0 : i32
    %c0_i32_1 = arith.constant 0 : i32
    return %c0_i32, %c0_i32_0 : i32, i32
  }
  func.func @transform_3(%arg0: i32) -> (i32, i32) {
    %c0_i32 = arith.constant 0 : i32
    %c0_i32_0 = arith.constant 0 : i32
    %c0_i32_1 = arith.constant 0 : i32
    return %c0_i32, %c0_i32_0 : i32, i32
  }
  func.func @transform_4(%arg0: i32) -> (i32, i32) {
    %c0_i32 = arith.constant 0 : i32
    %c0_i32_0 = arith.constant 0 : i32
    %c0_i32_1 = arith.constant 0 : i32
    return %c0_i32, %c0_i32_0 : i32, i32
  }
  func.func @transform_5(%arg0: i32) -> (i32, i32) {
    %c0_i32 = arith.constant 0 : i32
    %c0_i32_0 = arith.constant 0 : i32
    return %arg0, %c0_i32 : i32, i32
  }
}

</mosaic_0001>

<llo_original>
// kernel: offload_decoder_forward.1
$region0: #{offload_decoder_forward.1}
  #allocation0 [shape = 'u32[]', space=smem, size = 0x4, offset = 0x4, fixed_abs, tag = 'smem constant byte address 0x4 - core index']
  #allocation1 [shape = 'u32[72,128]{1,0:T(1,128)}', space=vmem, size = 0x9000, scoped, tag = 'internal scratch']
  %s0 = inlined_call_operand.hbm [shape: f32[256,512], index: 0, kind: input, shape index: {}]
  %s1 = inlined_call_operand.hbm [shape: bf16[512,512], index: 1, kind: input, shape index: {}]
  %s2 = inlined_call_operand.hbm [shape: f32[1,512], index: 2, kind: input, shape index: {}]
  %s3 = inlined_call_operand.hbm [shape: bf16[512,512], index: 3, kind: input, shape index: {}]
  %s4 = inlined_call_operand.hbm [shape: f32[1,512], index: 4, kind: input, shape index: {}]
  %s5 = inlined_call_operand.hbm [shape: bf16[256,512], index: 5, kind: output, shape index: {}]
  %s6 = sld [smem:[#allocation0]]
  $region73: #{offload_decoder_forward.1} parent=0
    _
  %s8 = ssub.s32 1, %s6
  %s9 = scalar_select 0, %s8, %s6
  $region1: #{offload_decoder_forward.1} parent=0
    #allocation2 [shape = 'u8[524288]{0}', space=vmem, size = 0x80000, scoped, tag = 'input window, operand 0']
    #allocation3 [shape = 's32[2]{0}', space=sflag, size = 0x8, scoped, tag = 'scoped memory for offload_decoder_forward.1']
    #allocation4 [shape = 's32[2]{0}', space=sflag, size = 0x8, scoped, tag = 'scoped memory for offload_decoder_forward.1']
    #allocation5 [shape = 'u8[524288]{0}', space=vmem, size = 0x80000, scoped, tag = 'input window, operand 1, single buffered']
    #allocation6 [shape = 's32[1]{0}', space=sflag, size = 0x4, scoped, tag = 'scoped memory for offload_decoder_forward.1']
    #allocation7 [shape = 'u8[2048]{0}', space=vmem, size = 0x800, scoped, tag = 'input window, operand 2, single buffered']
    #allocation8 [shape = 'u8[524288]{0}', space=vmem, size = 0x80000, scoped, tag = 'input window, operand 3, single buffered']
    #allocation9 [shape = 's32[1]{0}', space=sflag, size = 0x4, scoped, tag = 'scoped memory for offload_decoder_forward.1']
    #allocation10 [shape = 'u8[2048]{0}', space=vmem, size = 0x800, scoped, tag = 'input window, operand 4, single buffered']
    #allocation11 [shape = 'u8[262144]{0}', space=vmem, size = 0x40000, scoped, tag = 'output window, operand 0']
    %10 = vsyncpa [#allocation3], 0
    %s11 = scalar_lea.sflag [#allocation3], 1
    %12 = vsyncpa %s11, 0
    %13 = vsyncpa [#allocation6], 0
    %14 = vsyncpa [#allocation9], 0
    %15 = vsyncpa [#allocation4], 0
    %s16 = scalar_lea.sflag [#allocation4], 1
    %17 = vsyncpa %s16, 0
    loop: start=0, step=1, limit=4
    $region2: #{offload_decoder_forward.1} parent=1 // loop_pre_header
      _
    $region3: #{offload_decoder_forward.1} parent=1 // loop_header
      %s19 = sphi 0, %s23
      %p20 = scmp.ge.s32.totalorder %s19, 4
      %s29 = sphi 0, %s31
      %s32 = sphi 0, %s29
      %s33 = sphi 0, %s32
      %s49 = sphi 0, %s33
      %s53 = sphi 0, %s53
      %s55 = sphi 0, %s53
      %s56 = sphi 0, %s55
      %s70 = sphi 0, %s56
      %s74 = sphi 0, %s74
      %s76 = sphi 0, %s74
      %s77 = sphi 0, %s76
      %s91 = sphi 0, %s77
      %s95 = sphi 0, %s95
      %s97 = sphi 0, %s95
      %s98 = sphi 0, %s97
      %s112 = sphi 0, %s98
      %s116 = sphi 0, %s116
      %s118 = sphi 0, %s116
      %s119 = sphi 0, %s118
      %s133 = sphi 0, %s119
      %s139 = sphi 0, %s141
      %s142 = sphi 0, %s139
      %s143 = sphi 0, %s142
      %s159 = sphi 0, %s143
    $region4: #{offload_decoder_forward.1} parent=1 // loop_header_branch
      %22 = sbr.rel (%p20) target = $region8
    $region5: #{offload_decoder_forward.1} parent=1 // loop_body
      %s24 = ssub.s32 %s19, 1
      %s25 = ssub.s32 %s19, 2
      %s26 = sadd.s32 %s19, 1
      %s27 = ssub.s32 %s19, %s26
      %p28 = scmp.eq.s32.totalorder %s27, 0
      %s30 = sadd.s32 %s29, 1
      %s31 = scalar_select %p28, %s29, %s30
      %p34 = pneg %p28
      %p35 = scmp.eq.s32.totalorder %s19, 1
      %p36 = por %p34, %p35
      %p37 = scmp.ne.s32.totalorder %s29, %s32
      %p38 = scmp.eq.s32.totalorder %s19, 0
      %p39 = por %p37, %p38
      %p40 = scmp.ne.s32.totalorder %s29, %s32
      %p41 = scmp.eq.s32.totalorder %s24, 1
      %p42 = por %p40, %p41
      %p43 = scmp.ne.s32.totalorder %s32, %s33
      %p44 = scmp.eq.s32.totalorder %s24, 0
      %p45 = por %p43, %p44
      %p46 = scmp.ne.s32.totalorder %s32, %s33
      %p47 = scmp.eq.s32.totalorder %s25, 1
      %p48 = por %p46, %p47
      %p50 = scmp.ne.s32.totalorder %s33, %s49
      %p51 = scmp.eq.s32.totalorder %s25, 0
      %p52 = por %p50, %p51
      %s54 = sadd.s32 %s53, 1
      %p57 = scmp.eq.s32.totalorder %s19, 1
      %p58 = scmp.ne.s32.totalorder %s53, %s55
      %p59 = scmp.eq.s32.totalorder %s19, 0
      %p60 = por %p58, %p59
      %p61 = scmp.ne.s32.totalorder %s53, %s55
      %p62 = scmp.eq.s32.totalorder %s24, 1
      %p63 = por %p61, %p62
      %p64 = scmp.ne.s32.totalorder %s55, %s56
      %p65 = scmp.eq.s32.totalorder %s24, 0
      %p66 = por %p64, %p65
      %p67 = scmp.ne.s32.totalorder %s55, %s56
      %p68 = scmp.eq.s32.totalorder %s25, 1
      %p69 = por %p67, %p68
      %p71 = scmp.ne.s32.totalorder %s56, %s70
      %p72 = scmp.eq.s32.totalorder %s25, 0
      %p73 = por %p71, %p72
      %s75 = sadd.s32 %s74, 1
      %p78 = scmp.eq.s32.totalorder %s19, 1
      %p79 = scmp.ne.s32.totalorder %s74, %s76
      %p80 = scmp.eq.s32.totalorder %s19, 0
      %p81 = por %p79, %p80
      %p82 = scmp.ne.s32.totalorder %s74, %s76
      %p83 = scmp.eq.s32.totalorder %s24, 1
      %p84 = por %p82, %p83
      %p85 = scmp.ne.s32.totalorder %s76, %s77
      %p86 = scmp.eq.s32.totalorder %s24, 0
      %p87 = por %p85, %p86
      %p88 = scmp.ne.s32.totalorder %s76, %s77
      %p89 = scmp.eq.s32.totalorder %s25, 1
      %p90 = por %p88, %p89
      %p92 = scmp.ne.s32.totalorder %s77, %s91
      %p93 = scmp.eq.s32.totalorder %s25, 0
      %p94 = por %p92, %p93
      %s96 = sadd.s32 %s95, 1
      %p99 = scmp.eq.s32.totalorder %s19, 1
      %p100 = scmp.ne.s32.totalorder %s95, %s97
      %p101 = scmp.eq.s32.totalorder %s19, 0
      %p102 = por %p100, %p101
      %p103 = scmp.ne.s32.totalorder %s95, %s97
      %p104 = scmp.eq.s32.totalorder %s24, 1
      %p105 = por %p103, %p104
      %p106 = scmp.ne.s32.totalorder %s97, %s98
      %p107 = scmp.eq.s32.totalorder %s24, 0
      %p108 = por %p106, %p107
      %p109 = scmp.ne.s32.totalorder %s97, %s98
      %p110 = scmp.eq.s32.totalorder %s25, 1
      %p111 = por %p109, %p110
      %p113 = scmp.ne.s32.totalorder %s98, %s112
      %p114 = scmp.eq.s32.totalorder %s25, 0
      %p115 = por %p113, %p114
      %s117 = sadd.s32 %s116, 1
      %p120 = scmp.eq.s32.totalorder %s19, 1
      %p121 = scmp.ne.s32.totalorder %s116, %s118
      %p122 = scmp.eq.s32.totalorder %s19, 0
      %p123 = por %p121, %p122
      %p124 = scmp.ne.s32.totalorder %s116, %s118
      %p125 = scmp.eq.s32.totalorder %s24, 1
      %p126 = por %p124, %p125
      %p127 = scmp.ne.s32.totalorder %s118, %s119
      %p128 = scmp.eq.s32.totalorder %s24, 0
      %p129 = por %p127, %p128
      %p130 = scmp.ne.s32.totalorder %s118, %s119
      %p131 = scmp.eq.s32.totalorder %s25, 1
      %p132 = por %p130, %p131
      %p134 = scmp.ne.s32.totalorder %s119, %s133
      %p135 = scmp.eq.s32.totalorder %s25, 0
      %p136 = por %p134, %p135
      %s137 = ssub.s32 %s19, %s26
      %p138 = scmp.eq.s32.totalorder %s137, 0
      %s140 = sadd.s32 %s139, 1
      %s141 = scalar_select %p138, %s139, %s140
      %p144 = pneg %p138
      %p145 = scmp.eq.s32.totalorder %s19, 1
      %p146 = por %p144, %p145
      %p147 = scmp.ne.s32.totalorder %s139, %s142
      %p148 = scmp.eq.s32.totalorder %s19, 0
      %p149 = por %p147, %p148
      %p150 = scmp.ne.s32.totalorder %s139, %s142
      %p151 = scmp.eq.s32.totalorder %s24, 1
      %p152 = por %p150, %p151
      %p153 = scmp.ne.s32.totalorder %s142, %s143
      %p154 = scmp.eq.s32.totalorder %s24, 0
      %p155 = por %p153, %p154
      %p156 = scmp.ne.s32.totalorder %s142, %s143
      %p157 = scmp.eq.s32.totalorder %s25, 1
      %p158 = por %p156, %p157
      %p160 = scmp.ne.s32.totalorder %s143, %s159
      %p161 = scmp.eq.s32.totalorder %s25, 0
      %p162 = por %p160, %p161
      %p163 = scmp.le.s32.totalorder 1, %s19
      %p164 = scmp.lt.s32.totalorder %s19, 3
      %p165 = pnand %p163, %p164
      %p166 = pneg %p165
      // Predicated region
      $region9: #{offload_decoder_forward.1} parent=5 // pred_check
        _
      $region10: #{offload_decoder_forward.1} parent=5 // pred_check_branch
        %168 = sbr.rel (%p165) target = $region12
      $region11: #{offload_decoder_forward.1} parent=5 // pred_region
        %s169 = ssub.s32 %s19, 1
        // Predicated region
        $region13: #{offload_decoder_forward.1} parent=11 // pred_check
          %p170 = pneg %p66
        $region14: #{offload_decoder_forward.1} parent=11 // pred_check_branch
          %172 = sbr.rel (%p170) target = $region16
        $region15: #{offload_decoder_forward.1} parent=11 // pred_region
          %174 = vsyncadd [#allocation6], 0
          %s175 = sshll.u32 %s1, 4
          %s176 = int_to_ptr.hbm [resolvable:$true] %s175
          %s177 = sshll.u32 [#allocation5], 4
          %s178 = int_to_ptr.vmem [resolvable:$true] %s177
          %183 = dma.hbm_to_vmem [thread:$0]  %s176, 16384, %s178, [#allocation6], 256, 256, 16
        $region16: #{offload_decoder_forward.1} parent=11 // pred_fallthru
          _
        // Predicated region
        $region17: #{offload_decoder_forward.1} parent=11 // pred_check
          %p184 = pneg %p87
        $region18: #{offload_decoder_forward.1} parent=11 // pred_check_branch
          %186 = sbr.rel (%p184) target = $region20
        $region19: #{offload_decoder_forward.1} parent=11 // pred_region
          %188 = vsyncadd [#allocation6], 0
          %s190 = sshll.u32 %s2, 4
          %s191 = int_to_ptr.hbm [resolvable:$true] %s190
          %s192 = sshll.u32 [#allocation7], 4
          %s193 = int_to_ptr.vmem [resolvable:$true] %s192
          %195 = dma.hbm_to_vmem [thread:$0]  %s191, 64, %s193, [#allocation6]
        $region20: #{offload_decoder_forward.1} parent=11 // pred_fallthru
          _
        // Predicated region
        $region21: #{offload_decoder_forward.1} parent=11 // pred_check
          %p196 = pneg %p108
        $region22: #{offload_decoder_forward.1} parent=11 // pred_check_branch
          %198 = sbr.rel (%p196) target = $region24
        $region23: #{offload_decoder_forward.1} parent=11 // pred_region
          %200 = vsyncadd [#allocation9], 0
          %s201 = sshll.u32 %s3, 4
          %s202 = int_to_ptr.hbm [resolvable:$true] %s201
          %s203 = sshll.u32 [#allocation8], 4
          %s204 = int_to_ptr.vmem [resolvable:$true] %s203
          %209 = dma.hbm_to_vmem [thread:$0]  %s202, 16384, %s204, [#allocation9], 256, 256, 16
        $region24: #{offload_decoder_forward.1} parent=11 // pred_fallthru
          _
        // Predicated region
        $region25: #{offload_decoder_forward.1} parent=11 // pred_check
          %p210 = pneg %p129
        $region26: #{offload_decoder_forward.1} parent=11 // pred_check_branch
          %212 = sbr.rel (%p210) target = $region28
        $region27: #{offload_decoder_forward.1} parent=11 // pred_region
          %214 = vsyncadd [#allocation9], 0
          %s216 = sshll.u32 %s4, 4
          %s217 = int_to_ptr.hbm [resolvable:$true] %s216
          %s218 = sshll.u32 [#allocation10], 4
          %s219 = int_to_ptr.vmem [resolvable:$true] %s218
          %221 = dma.hbm_to_vmem [thread:$0]  %s217, 64, %s219, [#allocation9]
        $region28: #{offload_decoder_forward.1} parent=11 // pred_fallthru
          _
      $region12: #{offload_decoder_forward.1} parent=5 // pred_fallthru
        _
      %p222 = scmp.lt.s32.totalorder %s19, 2
      // Predicated region
      $region29: #{offload_decoder_forward.1} parent=5 // pred_check
        %p223 = pneg %p222
      $region30: #{offload_decoder_forward.1} parent=5 // pred_check_branch
        %225 = sbr.rel (%p223) target = $region32
      $region31: #{offload_decoder_forward.1} parent=5 // pred_region
        // Predicated region
        $region33: #{offload_decoder_forward.1} parent=31 // pred_check
          %p226 = pneg %p39
        $region34: #{offload_decoder_forward.1} parent=31 // pred_check_branch
          %228 = sbr.rel (%p226) target = $region36
        $region35: #{offload_decoder_forward.1} parent=31 // pred_region
          %s229 = sand.u32 %s29, 1
          %s230 = scalar_lea.sflag [#allocation3], %s229
          %s231 = sand.u32 %s29, 1
          %s232 = smul.addr %s231, 512
          %s233 = scalar_lea.vmem [#allocation2], %s232
          %s234 = smul.u32 16, %s19
          %236 = vsyncadd %s230, 0
          %s237 = smul.addr %s234, 4
          %s238 = smul.addr %s237, 8
          %s239 = scalar_lea.hbm %s0, %s238
          %s240 = sshll.u32 %s239, 4
          %s241 = int_to_ptr.hbm [resolvable:$true] %s240
          %s242 = sshll.u32 %s233, 4
          %s243 = int_to_ptr.vmem [resolvable:$true] %s242
          %248 = dma.hbm_to_vmem [thread:$0]  %s241, 8192, %s243, %s230, 512, 512, 32
        $region36: #{offload_decoder_forward.1} parent=31 // pred_fallthru
          _
      $region32: #{offload_decoder_forward.1} parent=5 // pred_fallthru
        _
      %p249 = scmp.le.s32.totalorder 1, %s19
      %p250 = scmp.lt.s32.totalorder %s19, 3
      %p251 = pnand %p249, %p250
      %p252 = pneg %p251
      // Predicated region
      $region37: #{offload_decoder_forward.1} parent=5 // pred_check
        _
      $region38: #{offload_decoder_forward.1} parent=5 // pred_check_branch
        %254 = sbr.rel (%p251) target = $region40
      $region39: #{offload_decoder_forward.1} parent=5 // pred_region
        %s255 = ssub.s32 %s19, 1
        %s256 = sand.u32 %s32, 1
        %s257 = scalar_lea.sflag [#allocation3], %s256
        %s258 = sand.u32 %s32, 1
        %s259 = smul.addr %s258, 512
        %s260 = scalar_lea.vmem [#allocation2], %s259
        // Predicated region
        $region41: #{offload_decoder_forward.1} parent=39 // pred_check
          %p261 = pneg %p45
        $region42: #{offload_decoder_forward.1} parent=39 // pred_check_branch
          %263 = sbr.rel (%p261) target = $region44
        $region43: #{offload_decoder_forward.1} parent=39 // pred_region
          %265 = dma.done %s257, 8192
        $region44: #{offload_decoder_forward.1} parent=39 // pred_fallthru
          _
        // Predicated region
        $region45: #{offload_decoder_forward.1} parent=39 // pred_check
          %p266 = pneg %p66
        $region46: #{offload_decoder_forward.1} parent=39 // pred_check_branch
          %268 = sbr.rel (%p266) target = $region48
        $region47: #{offload_decoder_forward.1} parent=39 // pred_region
          %270 = dma.done [#allocation6], 16384
        $region48: #{offload_decoder_forward.1} parent=39 // pred_fallthru
          _
        // Predicated region
        $region49: #{offload_decoder_forward.1} parent=39 // pred_check
          %p271 = pneg %p87
        $region50: #{offload_decoder_forward.1} parent=39 // pred_check_branch
          %273 = sbr.rel (%p271) target = $region52
        $region51: #{offload_decoder_forward.1} parent=39 // pred_region
          %275 = dma.done [#allocation6], 64
        $region52: #{offload_decoder_forward.1} parent=39 // pred_fallthru
          _
        // Predicated region
        $region53: #{offload_decoder_forward.1} parent=39 // pred_check
          %p276 = pneg %p108
        $region54: #{offload_decoder_forward.1} parent=39 // pred_check_branch
          %278 = sbr.rel (%p276) target = $region56
        $region55: #{offload_decoder_forward.1} parent=39 // pred_region
          %280 = dma.done [#allocation9], 16384
        $region56: #{offload_decoder_forward.1} parent=39 // pred_fallthru
          _
        // Predicated region
        $region57: #{offload_decoder_forward.1} parent=39 // pred_check
          %p281 = pneg %p129
        $region58: #{offload_decoder_forward.1} parent=39 // pred_check_branch
          %283 = sbr.rel (%p281) target = $region60
        $region59: #{offload_decoder_forward.1} parent=39 // pred_region
          %285 = dma.done [#allocation9], 64
        $region60: #{offload_decoder_forward.1} parent=39 // pred_fallthru
          _
        %s286 = sand.u32 %s32, 1
        %s287 = scalar_lea.sflag [#allocation3], %s286
        %s288 = sand.u32 %s32, 1
        %s289 = smul.addr %s288, 512
        %s290 = scalar_lea.vmem [#allocation2], %s289
        %p291 = pneg %p45
        %p292 = pneg %p42
        %p293 = pneg %p66
        %p294 = pneg %p63
        %p295 = pneg %p87
        %p296 = pneg %p84
        %p297 = pneg %p108
        %p298 = pneg %p105
        %p299 = pneg %p129
        %p300 = pneg %p126
        %p301 = pneg %p155
        %p302 = pneg %p152
        %s303 = sand.u32 %s142, 1
        %s304 = scalar_lea.sflag [#allocation4], %s303
        %s305 = sand.u32 %s142, 1
        %s306 = smul.addr %s305, 256
        %s307 = scalar_lea.vmem [#allocation11], %s306
        %s308 = smul.u32 16, %s24
        %s309 = smul.u32 16, %s24
        %v310 = vld [vmem:[%s260] sm:$0xff]
        %v311 = vld [vmem:[%s260 + $0x8] sm:$0xff]
        %v312 = vld [vmem:[%s260 + $0x10] sm:$0xff]
        %v313 = vld [vmem:[%s260 + $0x18] sm:$0xff]
        %v314 = vld [vmem:[%s260 + $0x20] sm:$0xff]
        %v315 = vld [vmem:[%s260 + $0x28] sm:$0xff]
        %v316 = vld [vmem:[%s260 + $0x30] sm:$0xff]
        %v317 = vld [vmem:[%s260 + $0x38] sm:$0xff]
        %v318 = vld [vmem:[%s260 + $0x40] sm:$0xff]
        %v319 = vld [vmem:[%s260 + $0x48] sm:$0xff]
        %v320 = vld [vmem:[%s260 + $0x50] sm:$0xff]
        %v321 = vld [vmem:[%s260 + $0x58] sm:$0xff]
        %v322 = vld [vmem:[%s260 + $0x60] sm:$0xff]
        %v323 = vld [vmem:[%s260 + $0x68] sm:$0xff]
        %v324 = vld [vmem:[%s260 + $0x70] sm:$0xff]
        %v325 = vld [vmem:[%s260 + $0x78] sm:$0xff]
        %v326 = vld [vmem:[%s260 + $0x80] sm:$0xff]
        %v327 = vld [vmem:[%s260 + $0x88] sm:$0xff]
        %v328 = vld [vmem:[%s260 + $0x90] sm:$0xff]
        %v329 = vld [vmem:[%s260 + $0x98] sm:$0xff]
        %v330 = vld [vmem:[%s260 + $0xa0] sm:$0xff]
        %v331 = vld [vmem:[%s260 + $0xa8] sm:$0xff]
        %v332 = vld [vmem:[%s260 + $0xb0] sm:$0xff]
        %v333 = vld [vmem:[%s260 + $0xb8] sm:$0xff]
        %v334 = vld [vmem:[%s260 + $0xc0] sm:$0xff]
        %v335 = vld [vmem:[%s260 + $0xc8] sm:$0xff]
        %v336 = vld [vmem:[%s260 + $0xd0] sm:$0xff]
        %v337 = vld [vmem:[%s260 + $0xd8] sm:$0xff]
        %v338 = vld [vmem:[%s260 + $0xe0] sm:$0xff]
        %v339 = vld [vmem:[%s260 + $0xe8] sm:$0xff]
        %v340 = vld [vmem:[%s260 + $0xf0] sm:$0xff]
        %v341 = vld [vmem:[%s260 + $0xf8] sm:$0xff]
        %v342 = vld [vmem:[%s260 + $0x100] sm:$0xff]
        %v343 = vld [vmem:[%s260 + $0x108] sm:$0xff]
        %v344 = vld [vmem:[%s260 + $0x110] sm:$0xff]
        %v345 = vld [vmem:[%s260 + $0x118] sm:$0xff]
        %v346 = vld [vmem:[%s260 + $0x120] sm:$0xff]
        %v347 = vld [vmem:[%s260 + $0x128] sm:$0xff]
        %v348 = vld [vmem:[%s260 + $0x130] sm:$0xff]
        %v349 = vld [vmem:[%s260 + $0x138] sm:$0xff]
        %v350 = vld [vmem:[%s260 + $0x140] sm:$0xff]
        %v351 = vld [vmem:[%s260 + $0x148] sm:$0xff]
        %v352 = vld [vmem:[%s260 + $0x150] sm:$0xff]
        %v353 = vld [vmem:[%s260 + $0x158] sm:$0xff]
        %v354 = vld [vmem:[%s260 + $0x160] sm:$0xff]
        %v355 = vld [vmem:[%s260 + $0x168] sm:$0xff]
        %v356 = vld [vmem:[%s260 + $0x170] sm:$0xff]
        %v357 = vld [vmem:[%s260 + $0x178] sm:$0xff]
        %v358 = vld [vmem:[%s260 + $0x180] sm:$0xff]
        %v359 = vld [vmem:[%s260 + $0x188] sm:$0xff]
        %v360 = vld [vmem:[%s260 + $0x190] sm:$0xff]
        %v361 = vld [vmem:[%s260 + $0x198] sm:$0xff]
        %v362 = vld [vmem:[%s260 + $0x1a0] sm:$0xff]
        %v363 = vld [vmem:[%s260 + $0x1a8] sm:$0xff]
        %v364 = vld [vmem:[%s260 + $0x1b0] sm:$0xff]
        %v365 = vld [vmem:[%s260 + $0x1b8] sm:$0xff]
        %v366 = vld [vmem:[%s260 + $0x1c0] sm:$0xff]
        %v367 = vld [vmem:[%s260 + $0x1c8] sm:$0xff]
        %v368 = vld [vmem:[%s260 + $0x1d0] sm:$0xff]
        %v369 = vld [vmem:[%s260 + $0x1d8] sm:$0xff]
        %v370 = vld [vmem:[%s260 + $0x1e0] sm:$0xff]
        %v371 = vld [vmem:[%s260 + $0x1e8] sm:$0xff]
        %v372 = vld [vmem:[%s260 + $0x1f0] sm:$0xff]
        %v373 = vld [vmem:[%s260 + $0x1f8] sm:$0xff]
        %v374 = vpack.c.bf16 %v314, %v310
        %v375 = vpack.c.bf16 %v315, %v311
        %v376 = vpack.c.bf16 %v316, %v312
        %v377 = vpack.c.bf16 %v317, %v313
        %v378 = vpack.c.bf16 %v322, %v318
        %v379 = vpack.c.bf16 %v323, %v319
        %v380 = vpack.c.bf16 %v324, %v320
        %v381 = vpack.c.bf16 %v325, %v321
        %v382 = vpack.c.bf16 %v330, %v326
        %v383 = vpack.c.bf16 %v331, %v327
        %v384 = vpack.c.bf16 %v332, %v328
        %v385 = vpack.c.bf16 %v333, %v329
        %v386 = vpack.c.bf16 %v338, %v334
        %v387 = vpack.c.bf16 %v339, %v335
        %v388 = vpack.c.bf16 %v340, %v336
        %v389 = vpack.c.bf16 %v341, %v337
        %v390 = vpack.c.bf16 %v346, %v342
        %v391 = vpack.c.bf16 %v347, %v343
        %v392 = vpack.c.bf16 %v348, %v344
        %v393 = vpack.c.bf16 %v349, %v345
        %v394 = vpack.c.bf16 %v354, %v350
        %v395 = vpack.c.bf16 %v355, %v351
        %v396 = vpack.c.bf16 %v356, %v352
        %v397 = vpack.c.bf16 %v357, %v353
        %v398 = vpack.c.bf16 %v362, %v358
        %v399 = vpack.c.bf16 %v363, %v359
        %v400 = vpack.c.bf16 %v364, %v360
        %v401 = vpack.c.bf16 %v365, %v361
        %v402 = vpack.c.bf16 %v370, %v366
        %v403 = vpack.c.bf16 %v371, %v367
        %v404 = vpack.c.bf16 %v372, %v368
        %v405 = vpack.c.bf16 %v373, %v369
        %v406 = vld [vmem:[#allocation5] sm:$0xff]
        %v407 = vld [vmem:[#allocation5 + $0x8] sm:$0xff]
        %v408 = vld [vmem:[#allocation5 + $0x10] sm:$0xff]
        %v409 = vld [vmem:[#allocation5 + $0x18] sm:$0xff]
        %v410 = vld [vmem:[#allocation5 + $0x20] sm:$0xff]
        %v411 = vld [vmem:[#allocation5 + $0x28] sm:$0xff]
        %v412 = vld [vmem:[#allocation5 + $0x30] sm:$0xff]
        %v413 = vld [vmem:[#allocation5 + $0x38] sm:$0xff]
        %v414 = vld [vmem:[#allocation5 + $0x40] sm:$0xff]
        %v415 = vld [vmem:[#allocation5 + $0x48] sm:$0xff]
        %v416 = vld [vmem:[#allocation5 + $0x50] sm:$0xff]
        %v417 = vld [vmem:[#allocation5 + $0x58] sm:$0xff]
        %v418 = vld [vmem:[#allocation5 + $0x60] sm:$0xff]
        %v419 = vld [vmem:[#allocation5 + $0x68] sm:$0xff]
        %v420 = vld [vmem:[#allocation5 + $0x70] sm:$0xff]
        %v421 = vld [vmem:[#allocation5 + $0x78] sm:$0xff]
        %v422 = vld [vmem:[#allocation5 + $0x80] sm:$0xff]
        %v423 = vld [vmem:[#allocation5 + $0x88] sm:$0xff]
        %v424 = vld [vmem:[#allocation5 + $0x90] sm:$0xff]
        %v425 = vld [vmem:[#allocation5 + $0x98] sm:$0xff]
        %v426 = vld [vmem:[#allocation5 + $0xa0] sm:$0xff]
        %v427 = vld [vmem:[#allocation5 + $0xa8] sm:$0xff]
        %v428 = vld [vmem:[#allocation5 + $0xb0] sm:$0xff]
        %v429 = vld [vmem:[#allocation5 + $0xb8] sm:$0xff]
        %v430 = vld [vmem:[#allocation5 + $0xc0] sm:$0xff]
        %v431 = vld [vmem:[#allocation5 + $0xc8] sm:$0xff]
        %v432 = vld [vmem:[#allocation5 + $0xd0] sm:$0xff]
        %v433 = vld [vmem:[#allocation5 + $0xd8] sm:$0xff]
        %v434 = vld [vmem:[#allocation5 + $0xe0] sm:$0xff]
        %v435 = vld [vmem:[#allocation5 + $0xe8] sm:$0xff]
        %v436 = vld [vmem:[#allocation5 + $0xf0] sm:$0xff]
        %v437 = vld [vmem:[#allocation5 + $0xf8] sm:$0xff]
        %v438 = vld [vmem:[#allocation5 + $0x100] sm:$0xff]
        %v439 = vld [vmem:[#allocation5 + $0x108] sm:$0xff]
        %v440 = vld [vmem:[#allocation5 + $0x110] sm:$0xff]
        %v441 = vld [vmem:[#allocation5 + $0x118] sm:$0xff]
        %v442 = vld [vmem:[#allocation5 + $0x120] sm:$0xff]
        %v443 = vld [vmem:[#allocation5 + $0x128] sm:$0xff]
        %v444 = vld [vmem:[#allocation5 + $0x130] sm:$0xff]
        %v445 = vld [vmem:[#allocation5 + $0x138] sm:$0xff]
        %v446 = vld [vmem:[#allocation5 + $0x140] sm:$0xff]
        %v447 = vld [vmem:[#allocation5 + $0x148] sm:$0xff]
        %v448 = vld [vmem:[#allocation5 + $0x150] sm:$0xff]
        %v449 = vld [vmem:[#allocation5 + $0x158] sm:$0xff]
        %v450 = vld [vmem:[#allocation5 + $0x160] sm:$0xff]
        %v451 = vld [vmem:[#allocation5 + $0x168] sm:$0xff]
        %v452 = vld [vmem:[#allocation5 + $0x170] sm:$0xff]
        %v453 = vld [vmem:[#allocation5 + $0x178] sm:$0xff]
        %v454 = vld [vmem:[#allocation5 + $0x180] sm:$0xff]
        %v455 = vld [vmem:[#allocation5 + $0x188] sm:$0xff]
        %v456 = vld [vmem:[#allocation5 + $0x190] sm:$0xff]
        %v457 = vld [vmem:[#allocation5 + $0x198] sm:$0xff]
        %v458 = vld [vmem:[#allocation5 + $0x1a0] sm:$0xff]
        %v459 = vld [vmem:[#allocation5 + $0x1a8] sm:$0xff]
        %v460 = vld [vmem:[#allocation5 + $0x1b0] sm:$0xff]
        %v461 = vld [vmem:[#allocation5 + $0x1b8] sm:$0xff]
        %v462 = vld [vmem:[#allocation5 + $0x1c0] sm:$0xff]
        %v463 = vld [vmem:[#allocation5 + $0x1c8] sm:$0xff]
        %v464 = vld [vmem:[#allocation5 + $0x1d0] sm:$0xff]
        %v465 = vld [vmem:[#allocation5 + $0x1d8] sm:$0xff]
        %v466 = vld [vmem:[#allocation5 + $0x1e0] sm:$0xff]
        %v467 = vld [vmem:[#allocation5 + $0x1e8] sm:$0xff]
        %v468 = vld [vmem:[#allocation5 + $0x1f0] sm:$0xff]
        %v469 = vld [vmem:[#allocation5 + $0x1f8] sm:$0xff]
        %v470 = vld [vmem:[#allocation5 + $0x200] sm:$0xff]
        %v471 = vld [vmem:[#allocation5 + $0x208] sm:$0xff]
        %v472 = vld [vmem:[#allocation5 + $0x210] sm:$0xff]
        %v473 = vld [vmem:[#allocation5 + $0x218] sm:$0xff]
        %v474 = vld [vmem:[#allocation5 + $0x220] sm:$0xff]
        %v475 = vld [vmem:[#allocation5 + $0x228] sm:$0xff]
        %v476 = vld [vmem:[#allocation5 + $0x230] sm:$0xff]
        %v477 = vld [vmem:[#allocation5 + $0x238] sm:$0xff]
        %v478 = vld [vmem:[#allocation5 + $0x240] sm:$0xff]
        %v479 = vld [vmem:[#allocation5 + $0x248] sm:$0xff]
        %v480 = vld [vmem:[#allocation5 + $0x250] sm:$0xff]
        %v481 = vld [vmem:[#allocation5 + $0x258] sm:$0xff]
        %v482 = vld [vmem:[#allocation5 + $0x260] sm:$0xff]
        %v483 = vld [vmem:[#allocation5 + $0x268] sm:$0xff]
        %v484 = vld [vmem:[#allocation5 + $0x270] sm:$0xff]
        %v485 = vld [vmem:[#allocation5 + $0x278] sm:$0xff]
        %v486 = vld [vmem:[#allocation5 + $0x280] sm:$0xff]
        %v487 = vld [vmem:[#allocation5 + $0x288] sm:$0xff]
        %v488 = vld [vmem:[#allocation5 + $0x290] sm:$0xff]
        %v489 = vld [vmem:[#allocation5 + $0x298] sm:$0xff]
        %v490 = vld [vmem:[#allocation5 + $0x2a0] sm:$0xff]
        %v491 = vld [vmem:[#allocation5 + $0x2a8] sm:$0xff]
        %v492 = vld [vmem:[#allocation5 + $0x2b0] sm:$0xff]
        %v493 = vld [vmem:[#allocation5 + $0x2b8] sm:$0xff]
        %v494 = vld [vmem:[#allocation5 + $0x2c0] sm:$0xff]
        %v495 = vld [vmem:[#allocation5 + $0x2c8] sm:$0xff]
        %v496 = vld [vmem:[#allocation5 + $0x2d0] sm:$0xff]
        %v497 = vld [vmem:[#allocation5 + $0x2d8] sm:$0xff]
        %v498 = vld [vmem:[#allocation5 + $0x2e0] sm:$0xff]
        %v499 = vld [vmem:[#allocation5 + $0x2e8] sm:$0xff]
        %v500 = vld [vmem:[#allocation5 + $0x2f0] sm:$0xff]
        %v501 = vld [vmem:[#allocation5 + $0x2f8] sm:$0xff]
        %v502 = vld [vmem:[#allocation5 + $0x300] sm:$0xff]
        %v503 = vld [vmem:[#allocation5 + $0x308] sm:$0xff]
        %v504 = vld [vmem:[#allocation5 + $0x310] sm:$0xff]
        %v505 = vld [vmem:[#allocation5 + $0x318] sm:$0xff]
        %v506 = vld [vmem:[#allocation5 + $0x320] sm:$0xff]
        %v507 = vld [vmem:[#allocation5 + $0x328] sm:$0xff]
        %v508 = vld [vmem:[#allocation5 + $0x330] sm:$0xff]
        %v509 = vld [vmem:[#allocation5 + $0x338] sm:$0xff]
        %v510 = vld [vmem:[#allocation5 + $0x340] sm:$0xff]
        %v511 = vld [vmem:[#allocation5 + $0x348] sm:$0xff]
        %v512 = vld [vmem:[#allocation5 + $0x350] sm:$0xff]
        %v513 = vld [vmem:[#allocation5 + $0x358] sm:$0xff]
        %v514 = vld [vmem:[#allocation5 + $0x360] sm:$0xff]
        %v515 = vld [vmem:[#allocation5 + $0x368] sm:$0xff]
        %v516 = vld [vmem:[#allocation5 + $0x370] sm:$0xff]
        %v517 = vld [vmem:[#allocation5 + $0x378] sm:$0xff]
        %v518 = vld [vmem:[#allocation5 + $0x380] sm:$0xff]
        %v519 = vld [vmem:[#allocation5 + $0x388] sm:$0xff]
        %v520 = vld [vmem:[#allocation5 + $0x390] sm:$0xff]
        %v521 = vld [vmem:[#allocation5 + $0x398] sm:$0xff]
        %v522 = vld [vmem:[#allocation5 + $0x3a0] sm:$0xff]
        %v523 = vld [vmem:[#allocation5 + $0x3a8] sm:$0xff]
        %v524 = vld [vmem:[#allocation5 + $0x3b0] sm:$0xff]
        %v525 = vld [vmem:[#allocation5 + $0x3b8] sm:$0xff]
        %v526 = vld [vmem:[#allocation5 + $0x3c0] sm:$0xff]
        %v527 = vld [vmem:[#allocation5 + $0x3c8] sm:$0xff]
        %v528 = vld [vmem:[#allocation5 + $0x3d0] sm:$0xff]
        %v529 = vld [vmem:[#allocation5 + $0x3d8] sm:$0xff]
        %v530 = vld [vmem:[#allocation5 + $0x3e0] sm:$0xff]
        %v531 = vld [vmem:[#allocation5 + $0x3e8] sm:$0xff]
        %v532 = vld [vmem:[#allocation5 + $0x3f0] sm:$0xff]
        %v533 = vld [vmem:[#allocation5 + $0x3f8] sm:$0xff]
        %v534 = vld [vmem:[#allocation7] sm:$0xf]
        %v536 = vperm.slane %v534, 0
        %v537 = vperm.slane %v534, 1
        %v538 = vperm.slane %v534, 2
        %v539 = vperm.slane %v534, 3
        %v672 = vunpack.c.l.b16 %v406
        %v673 = vunpack.c.h.b16 %v406
        %v674 = vunpack.c.l.b16 %v407
        %v675 = vunpack.c.h.b16 %v407
        %v676 = vunpack.c.l.b16 %v408
        %v677 = vunpack.c.h.b16 %v408
        %v678 = vunpack.c.l.b16 %v409
        %v679 = vunpack.c.h.b16 %v409
        %v680 = vunpack.c.l.b16 %v410
        %v681 = vunpack.c.h.b16 %v410
        %v682 = vunpack.c.l.b16 %v411
        %v683 = vunpack.c.h.b16 %v411
        %v684 = vunpack.c.l.b16 %v412
        %v685 = vunpack.c.h.b16 %v412
        %v686 = vunpack.c.l.b16 %v413
        %v687 = vunpack.c.h.b16 %v413
        %v688 = vunpack.c.l.b16 %v414
        %v689 = vunpack.c.h.b16 %v414
        %v690 = vunpack.c.l.b16 %v415
        %v691 = vunpack.c.h.b16 %v415
        %v692 = vunpack.c.l.b16 %v416
        %v693 = vunpack.c.h.b16 %v416
        %v694 = vunpack.c.l.b16 %v417
        %v695 = vunpack.c.h.b16 %v417
        %v696 = vunpack.c.l.b16 %v418
        %v697 = vunpack.c.h.b16 %v418
        %v698 = vunpack.c.l.b16 %v419
        %v699 = vunpack.c.h.b16 %v419
        %v700 = vunpack.c.l.b16 %v420
        %v701 = vunpack.c.h.b16 %v420
        %v702 = vunpack.c.l.b16 %v421
        %v703 = vunpack.c.h.b16 %v421
        %v704 = vunpack.c.l.b16 %v422
        %v705 = vunpack.c.h.b16 %v422
        %v706 = vunpack.c.l.b16 %v423
        %v707 = vunpack.c.h.b16 %v423
        %v708 = vunpack.c.l.b16 %v424
        %v709 = vunpack.c.h.b16 %v424
        %v710 = vunpack.c.l.b16 %v425
        %v711 = vunpack.c.h.b16 %v425
        %v712 = vunpack.c.l.b16 %v426
        %v713 = vunpack.c.h.b16 %v426
        %v714 = vunpack.c.l.b16 %v427
        %v715 = vunpack.c.h.b16 %v427
        %v716 = vunpack.c.l.b16 %v428
        %v717 = vunpack.c.h.b16 %v428
        %v718 = vunpack.c.l.b16 %v429
        %v719 = vunpack.c.h.b16 %v429
        %v720 = vunpack.c.l.b16 %v430
        %v721 = vunpack.c.h.b16 %v430
        %v722 = vunpack.c.l.b16 %v431
        %v723 = vunpack.c.h.b16 %v431
        %v724 = vunpack.c.l.b16 %v432
        %v725 = vunpack.c.h.b16 %v432
        %v726 = vunpack.c.l.b16 %v433
        %v727 = vunpack.c.h.b16 %v433
        %v728 = vunpack.c.l.b16 %v434
        %v729 = vunpack.c.h.b16 %v434
        %v730 = vunpack.c.l.b16 %v435
        %v731 = vunpack.c.h.b16 %v435
        %v732 = vunpack.c.l.b16 %v436
        %v733 = vunpack.c.h.b16 %v436
        %v734 = vunpack.c.l.b16 %v437
        %v735 = vunpack.c.h.b16 %v437
        %v736 = vunpack.c.l.b16 %v438
        %v737 = vunpack.c.h.b16 %v438
        %v738 = vunpack.c.l.b16 %v439
        %v739 = vunpack.c.h.b16 %v439
        %v740 = vunpack.c.l.b16 %v440
        %v741 = vunpack.c.h.b16 %v440
        %v742 = vunpack.c.l.b16 %v441
        %v743 = vunpack.c.h.b16 %v441
        %v744 = vunpack.c.l.b16 %v442
        %v745 = vunpack.c.h.b16 %v442
        %v746 = vunpack.c.l.b16 %v443
        %v747 = vunpack.c.h.b16 %v443
        %v748 = vunpack.c.l.b16 %v444
        %v749 = vunpack.c.h.b16 %v444
        %v750 = vunpack.c.l.b16 %v445
        %v751 = vunpack.c.h.b16 %v445
        %v752 = vunpack.c.l.b16 %v446
        %v753 = vunpack.c.h.b16 %v446
        %v754 = vunpack.c.l.b16 %v447
        %v755 = vunpack.c.h.b16 %v447
        %v756 = vunpack.c.l.b16 %v448
        %v757 = vunpack.c.h.b16 %v448
        %v758 = vunpack.c.l.b16 %v449
        %v759 = vunpack.c.h.b16 %v449
        %v760 = vunpack.c.l.b16 %v450
        %v761 = vunpack.c.h.b16 %v450
        %v762 = vunpack.c.l.b16 %v451
        %v763 = vunpack.c.h.b16 %v451
        %v764 = vunpack.c.l.b16 %v452
        %v765 = vunpack.c.h.b16 %v452
        %v766 = vunpack.c.l.b16 %v453
        %v767 = vunpack.c.h.b16 %v453
        %v768 = vunpack.c.l.b16 %v454
        %v769 = vunpack.c.h.b16 %v454
        %v770 = vunpack.c.l.b16 %v455
        %v771 = vunpack.c.h.b16 %v455
        %v772 = vunpack.c.l.b16 %v456
        %v773 = vunpack.c.h.b16 %v456
        %v774 = vunpack.c.l.b16 %v457
        %v775 = vunpack.c.h.b16 %v457
        %v776 = vunpack.c.l.b16 %v458
        %v777 = vunpack.c.h.b16 %v458
        %v778 = vunpack.c.l.b16 %v459
        %v779 = vunpack.c.h.b16 %v459
        %v780 = vunpack.c.l.b16 %v460
        %v781 = vunpack.c.h.b16 %v460
        %v782 = vunpack.c.l.b16 %v461
        %v783 = vunpack.c.h.b16 %v461
        %v784 = vunpack.c.l.b16 %v462
        %v785 = vunpack.c.h.b16 %v462
        %v786 = vunpack.c.l.b16 %v463
        %v787 = vunpack.c.h.b16 %v463
        %v788 = vunpack.c.l.b16 %v464
        %v789 = vunpack.c.h.b16 %v464
        %v790 = vunpack.c.l.b16 %v465
        %v791 = vunpack.c.h.b16 %v465
        %v792 = vunpack.c.l.b16 %v466
        %v793 = vunpack.c.h.b16 %v466
        %v794 = vunpack.c.l.b16 %v467
        %v795 = vunpack.c.h.b16 %v467
        %v796 = vunpack.c.l.b16 %v468
        %v797 = vunpack.c.h.b16 %v468
        %v798 = vunpack.c.l.b16 %v469
        %v799 = vunpack.c.h.b16 %v469
        %v800 = vunpack.c.l.b16 %v470
        %v801 = vunpack.c.h.b16 %v470
        %v802 = vunpack.c.l.b16 %v471
        %v803 = vunpack.c.h.b16 %v471
        %v804 = vunpack.c.l.b16 %v472
        %v805 = vunpack.c.h.b16 %v472
        %v806 = vunpack.c.l.b16 %v473
        %v807 = vunpack.c.h.b16 %v473
        %v808 = vunpack.c.l.b16 %v474
        %v809 = vunpack.c.h.b16 %v474
        %v810 = vunpack.c.l.b16 %v475
        %v811 = vunpack.c.h.b16 %v475
        %v812 = vunpack.c.l.b16 %v476
        %v813 = vunpack.c.h.b16 %v476
        %v814 = vunpack.c.l.b16 %v477
        %v815 = vunpack.c.h.b16 %v477
        %v816 = vunpack.c.l.b16 %v478
        %v817 = vunpack.c.h.b16 %v478
        %v818 = vunpack.c.l.b16 %v479
        %v819 = vunpack.c.h.b16 %v479
        %v820 = vunpack.c.l.b16 %v480
        %v821 = vunpack.c.h.b16 %v480
        %v822 = vunpack.c.l.b16 %v481
        %v823 = vunpack.c.h.b16 %v481
        %v824 = vunpack.c.l.b16 %v482
        %v825 = vunpack.c.h.b16 %v482
        %v826 = vunpack.c.l.b16 %v483
        %v827 = vunpack.c.h.b16 %v483
        %v828 = vunpack.c.l.b16 %v484
        %v829 = vunpack.c.h.b16 %v484
        %v830 = vunpack.c.l.b16 %v485
        %v831 = vunpack.c.h.b16 %v485
        %v832 = vunpack.c.l.b16 %v486
        %v833 = vunpack.c.h.b16 %v486
        %v834 = vunpack.c.l.b16 %v487
        %v835 = vunpack.c.h.b16 %v487
        %v836 = vunpack.c.l.b16 %v488
        %v837 = vunpack.c.h.b16 %v488
        %v838 = vunpack.c.l.b16 %v489
        %v839 = vunpack.c.h.b16 %v489
        %v840 = vunpack.c.l.b16 %v490
        %v841 = vunpack.c.h.b16 %v490
        %v842 = vunpack.c.l.b16 %v491
        %v843 = vunpack.c.h.b16 %v491
        %v844 = vunpack.c.l.b16 %v492
        %v845 = vunpack.c.h.b16 %v492
        %v846 = vunpack.c.l.b16 %v493
        %v847 = vunpack.c.h.b16 %v493
        %v848 = vunpack.c.l.b16 %v494
        %v849 = vunpack.c.h.b16 %v494
        %v850 = vunpack.c.l.b16 %v495
        %v851 = vunpack.c.h.b16 %v495
        %v852 = vunpack.c.l.b16 %v496
        %v853 = vunpack.c.h.b16 %v496
        %v854 = vunpack.c.l.b16 %v497
        %v855 = vunpack.c.h.b16 %v497
        %v856 = vunpack.c.l.b16 %v498
        %v857 = vunpack.c.h.b16 %v498
        %v858 = vunpack.c.l.b16 %v499
        %v859 = vunpack.c.h.b16 %v499
        %v860 = vunpack.c.l.b16 %v500
        %v861 = vunpack.c.h.b16 %v500
        %v862 = vunpack.c.l.b16 %v501
        %v863 = vunpack.c.h.b16 %v501
        %v864 = vunpack.c.l.b16 %v502
        %v865 = vunpack.c.h.b16 %v502
        %v866 = vunpack.c.l.b16 %v503
        %v867 = vunpack.c.h.b16 %v503
        %v868 = vunpack.c.l.b16 %v504
        %v869 = vunpack.c.h.b16 %v504
        %v870 = vunpack.c.l.b16 %v505
        %v871 = vunpack.c.h.b16 %v505
        %v872 = vunpack.c.l.b16 %v506
        %v873 = vunpack.c.h.b16 %v506
        %v874 = vunpack.c.l.b16 %v507
        %v875 = vunpack.c.h.b16 %v507
        %v876 = vunpack.c.l.b16 %v508
        %v877 = vunpack.c.h.b16 %v508
        %v878 = vunpack.c.l.b16 %v509
        %v879 = vunpack.c.h.b16 %v509
        %v880 = vunpack.c.l.b16 %v510
        %v881 = vunpack.c.h.b16 %v510
        %v882 = vunpack.c.l.b16 %v511
        %v883 = vunpack.c.h.b16 %v511
        %v884 = vunpack.c.l.b16 %v512
        %v885 = vunpack.c.h.b16 %v512
        %v886 = vunpack.c.l.b16 %v513
        %v887 = vunpack.c.h.b16 %v513
        %v888 = vunpack.c.l.b16 %v514
        %v889 = vunpack.c.h.b16 %v514
        %v890 = vunpack.c.l.b16 %v515
        %v891 = vunpack.c.h.b16 %v515
        %v892 = vunpack.c.l.b16 %v516
        %v893 = vunpack.c.h.b16 %v516
        %v894 = vunpack.c.l.b16 %v517
        %v895 = vunpack.c.h.b16 %v517
        %v896 = vunpack.c.l.b16 %v518
        %v897 = vunpack.c.h.b16 %v518
        %v898 = vunpack.c.l.b16 %v519
        %v899 = vunpack.c.h.b16 %v519
        %v900 = vunpack.c.l.b16 %v520
        %v901 = vunpack.c.h.b16 %v520
        %v902 = vunpack.c.l.b16 %v521
        %v903 = vunpack.c.h.b16 %v521
        %v904 = vunpack.c.l.b16 %v522
        %v905 = vunpack.c.h.b16 %v522
        %v906 = vunpack.c.l.b16 %v523
        %v907 = vunpack.c.h.b16 %v523
        %v908 = vunpack.c.l.b16 %v524
        %v909 = vunpack.c.h.b16 %v524
        %v910 = vunpack.c.l.b16 %v525
        %v911 = vunpack.c.h.b16 %v525
        %v912 = vunpack.c.l.b16 %v526
        %v913 = vunpack.c.h.b16 %v526
        %v914 = vunpack.c.l.b16 %v527
        %v915 = vunpack.c.h.b16 %v527
        %v916 = vunpack.c.l.b16 %v528
        %v917 = vunpack.c.h.b16 %v528
        %v918 = vunpack.c.l.b16 %v529
        %v919 = vunpack.c.h.b16 %v529
        %v920 = vunpack.c.l.b16 %v530
        %v921 = vunpack.c.h.b16 %v530
        %v922 = vunpack.c.l.b16 %v531
        %v923 = vunpack.c.h.b16 %v531
        %v924 = vunpack.c.l.b16 %v532
        %v925 = vunpack.c.h.b16 %v532
        %v926 = vunpack.c.l.b16 %v533
        %v927 = vunpack.c.h.b16 %v533
        %v928 = vpack.c.b16 %v676, %v672
        %v929 = vpack.c.b16 %v677, %v673
        %v930 = vpack.c.b16 %v678, %v674
        %v931 = vpack.c.b16 %v679, %v675
        %v932 = vpack.c.b16 %v684, %v680
        %v933 = vpack.c.b16 %v685, %v681
        %v934 = vpack.c.b16 %v686, %v682
        %v935 = vpack.c.b16 %v687, %v683
        %v936 = vpack.c.b16 %v692, %v688
        %v937 = vpack.c.b16 %v693, %v689
        %v938 = vpack.c.b16 %v694, %v690
        %v939 = vpack.c.b16 %v695, %v691
        %v940 = vpack.c.b16 %v700, %v696
        %v941 = vpack.c.b16 %v701, %v697
        %v942 = vpack.c.b16 %v702, %v698
        %v943 = vpack.c.b16 %v703, %v699
        %v944 = vpack.c.b16 %v708, %v704
        %v945 = vpack.c.b16 %v709, %v705
        %v946 = vpack.c.b16 %v710, %v706
        %v947 = vpack.c.b16 %v711, %v707
        %v948 = vpack.c.b16 %v716, %v712
        %v949 = vpack.c.b16 %v717, %v713
        %v950 = vpack.c.b16 %v718, %v714
        %v951 = vpack.c.b16 %v719, %v715
        %v952 = vpack.c.b16 %v724, %v720
        %v953 = vpack.c.b16 %v725, %v721
        %v954 = vpack.c.b16 %v726, %v722
        %v955 = vpack.c.b16 %v727, %v723
        %v956 = vpack.c.b16 %v732, %v728
        %v957 = vpack.c.b16 %v733, %v729
        %v958 = vpack.c.b16 %v734, %v730
        %v959 = vpack.c.b16 %v735, %v731
        %v960 = vpack.c.b16 %v740, %v736
        %v961 = vpack.c.b16 %v741, %v737
        %v962 = vpack.c.b16 %v742, %v738
        %v963 = vpack.c.b16 %v743, %v739
        %v964 = vpack.c.b16 %v748, %v744
        %v965 = vpack.c.b16 %v749, %v745
        %v966 = vpack.c.b16 %v750, %v746
        %v967 = vpack.c.b16 %v751, %v747
        %v968 = vpack.c.b16 %v756, %v752
        %v969 = vpack.c.b16 %v757, %v753
        %v970 = vpack.c.b16 %v758, %v754
        %v971 = vpack.c.b16 %v759, %v755
        %v972 = vpack.c.b16 %v764, %v760
        %v973 = vpack.c.b16 %v765, %v761
        %v974 = vpack.c.b16 %v766, %v762
        %v975 = vpack.c.b16 %v767, %v763
        %v976 = vpack.c.b16 %v772, %v768
        %v977 = vpack.c.b16 %v773, %v769
        %v978 = vpack.c.b16 %v774, %v770
        %v979 = vpack.c.b16 %v775, %v771
        %v980 = vpack.c.b16 %v780, %v776
        %v981 = vpack.c.b16 %v781, %v777
        %v982 = vpack.c.b16 %v782, %v778
        %v983 = vpack.c.b16 %v783, %v779
        %v984 = vpack.c.b16 %v788, %v784
        %v985 = vpack.c.b16 %v789, %v785
        %v986 = vpack.c.b16 %v790, %v786
        %v987 = vpack.c.b16 %v791, %v787
        %v988 = vpack.c.b16 %v796, %v792
        %v989 = vpack.c.b16 %v797, %v793
        %v990 = vpack.c.b16 %v798, %v794
        %v991 = vpack.c.b16 %v799, %v795
        %v992 = vpack.c.b16 %v804, %v800
        %v993 = vpack.c.b16 %v805, %v801
        %v994 = vpack.c.b16 %v806, %v802
        %v995 = vpack.c.b16 %v807, %v803
        %v996 = vpack.c.b16 %v812, %v808
        %v997 = vpack.c.b16 %v813, %v809
        %v998 = vpack.c.b16 %v814, %v810
        %v999 = vpack.c.b16 %v815, %v811
        %v1000 = vpack.c.b16 %v820, %v816
        %v1001 = vpack.c.b16 %v821, %v817
        %v1002 = vpack.c.b16 %v822, %v818
        %v1003 = vpack.c.b16 %v823, %v819
        %v1004 = vpack.c.b16 %v828, %v824
        %v1005 = vpack.c.b16 %v829, %v825
        %v1006 = vpack.c.b16 %v830, %v826
        %v1007 = vpack.c.b16 %v831, %v827
        %v1008 = vpack.c.b16 %v836, %v832
        %v1009 = vpack.c.b16 %v837, %v833
        %v1010 = vpack.c.b16 %v838, %v834
        %v1011 = vpack.c.b16 %v839, %v835
        %v1012 = vpack.c.b16 %v844, %v840
        %v1013 = vpack.c.b16 %v845, %v841
        %v1014 = vpack.c.b16 %v846, %v842
        %v1015 = vpack.c.b16 %v847, %v843
        %v1016 = vpack.c.b16 %v852, %v848
        %v1017 = vpack.c.b16 %v853, %v849
        %v1018 = vpack.c.b16 %v854, %v850
        %v1019 = vpack.c.b16 %v855, %v851
        %v1020 = vpack.c.b16 %v860, %v856
        %v1021 = vpack.c.b16 %v861, %v857
        %v1022 = vpack.c.b16 %v862, %v858
        %v1023 = vpack.c.b16 %v863, %v859
        %v1024 = vpack.c.b16 %v868, %v864
        %v1025 = vpack.c.b16 %v869, %v865
        %v1026 = vpack.c.b16 %v870, %v866
        %v1027 = vpack.c.b16 %v871, %v867
        %v1028 = vpack.c.b16 %v876, %v872
        %v1029 = vpack.c.b16 %v877, %v873
        %v1030 = vpack.c.b16 %v878, %v874
        %v1031 = vpack.c.b16 %v879, %v875
        %v1032 = vpack.c.b16 %v884, %v880
        %v1033 = vpack.c.b16 %v885, %v881
        %v1034 = vpack.c.b16 %v886, %v882
        %v1035 = vpack.c.b16 %v887, %v883
        %v1036 = vpack.c.b16 %v892, %v888
        %v1037 = vpack.c.b16 %v893, %v889
        %v1038 = vpack.c.b16 %v894, %v890
        %v1039 = vpack.c.b16 %v895, %v891
        %v1040 = vpack.c.b16 %v900, %v896
        %v1041 = vpack.c.b16 %v901, %v897
        %v1042 = vpack.c.b16 %v902, %v898
        %v1043 = vpack.c.b16 %v903, %v899
        %v1044 = vpack.c.b16 %v908, %v904
        %v1045 = vpack.c.b16 %v909, %v905
        %v1046 = vpack.c.b16 %v910, %v906
        %v1047 = vpack.c.b16 %v911, %v907
        %v1048 = vpack.c.b16 %v916, %v912
        %v1049 = vpack.c.b16 %v917, %v913
        %v1050 = vpack.c.b16 %v918, %v914
        %v1051 = vpack.c.b16 %v919, %v915
        %v1052 = vpack.c.b16 %v924, %v920
        %v1053 = vpack.c.b16 %v925, %v921
        %v1054 = vpack.c.b16 %v926, %v922
        %v1055 = vpack.c.b16 %v927, %v923
        %1184 = vmatpush.bf16.msra.mxu0 %v956
        %1185 = vmatpush.bf16.msra.mxu0 %v952
        %1186 = vmatpush.bf16.msra.mxu0 %v948
        %1187 = vmatpush.bf16.msra.mxu0 %v944
        %1188 = vmatpush.bf16.msra.mxu0 %v940
        %1189 = vmatpush.bf16.msra.mxu0 %v936
        %1190 = vmatpush.bf16.msra.mxu0 %v932
        %1191 = vmatpush.bf16.msra.mxu0 %v928
        %1192 = vmatmul.bf16.gmra.mxu0 %v374
        %v1193 = vpop.f32.mrf.mxu0
        %v1194 = vadd.f32 %v536, %v1193
        %v1195 = vpop.f32.mrf.mxu0
        %v1196 = vadd.f32 %v536, %v1195
        %1197 = vmatmul.bf16.gmra.mxu0 %v378
        %v1198 = vpop.f32.mrf.mxu0
        %v1199 = vadd.f32 %v536, %v1198
        %v1200 = vpop.f32.mrf.mxu0
        %v1201 = vadd.f32 %v536, %v1200
        %1202 = vmatmul.bf16.gmra.mxu0 %v382
        %v1203 = vpop.f32.mrf.mxu0
        %v1204 = vadd.f32 %v536, %v1203
        %v1205 = vpop.f32.mrf.mxu0
        %v1206 = vadd.f32 %v536, %v1205
        %1207 = vmatmul.bf16.gmra.mxu0 %v386
        %v1208 = vpop.f32.mrf.mxu0
        %v1209 = vadd.f32 %v536, %v1208
        %v1210 = vpop.f32.mrf.mxu0
        %v1211 = vadd.f32 %v536, %v1210
        %1212 = vmatmul.bf16.gmra.mxu0 %v390
        %v1213 = vpop.f32.mrf.mxu0
        %v1214 = vadd.f32 %v536, %v1213
        %v1215 = vpop.f32.mrf.mxu0
        %v1216 = vadd.f32 %v536, %v1215
        %1217 = vmatmul.bf16.gmra.mxu0 %v394
        %v1218 = vpop.f32.mrf.mxu0
        %v1219 = vadd.f32 %v536, %v1218
        %v1220 = vpop.f32.mrf.mxu0
        %v1221 = vadd.f32 %v536, %v1220
        %1222 = vmatmul.bf16.gmra.mxu0 %v398
        %v1223 = vpop.f32.mrf.mxu0
        %v1224 = vadd.f32 %v536, %v1223
        %v1225 = vpop.f32.mrf.mxu0
        %v1226 = vadd.f32 %v536, %v1225
        %1227 = vmatmul.bf16.gmra.mxu0 %v402
        %v1228 = vpop.f32.mrf.mxu0
        %v1229 = vadd.f32 %v536, %v1228
        %v1230 = vpop.f32.mrf.mxu0
        %v1231 = vadd.f32 %v536, %v1230
        %1232 = vdwg.mxu0
        %1233 = vmatpush.bf16.msra.mxu0 %v988
        %1234 = vmatpush.bf16.msra.mxu0 %v984
        %1235 = vmatpush.bf16.msra.mxu0 %v980
        %1236 = vmatpush.bf16.msra.mxu0 %v976
        %1237 = vmatpush.bf16.msra.mxu0 %v972
        %1238 = vmatpush.bf16.msra.mxu0 %v968
        %1239 = vmatpush.bf16.msra.mxu0 %v964
        %1240 = vmatpush.bf16.msra.mxu0 %v960
        %1241 = vmatmul.bf16.gmra.mxu0 %v375
        %v1242 = vpop.f32.mrf.mxu0
        %v1243 = vadd.f32 %v1194, %v1242
        %v1244 = vpop.f32.mrf.mxu0
        %v1245 = vadd.f32 %v1196, %v1244
        %1246 = vmatmul.bf16.gmra.mxu0 %v379
        %v1247 = vpop.f32.mrf.mxu0
        %v1248 = vadd.f32 %v1199, %v1247
        %v1249 = vpop.f32.mrf.mxu0
        %v1250 = vadd.f32 %v1201, %v1249
        %1251 = vmatmul.bf16.gmra.mxu0 %v383
        %v1252 = vpop.f32.mrf.mxu0
        %v1253 = vadd.f32 %v1204, %v1252
        %v1254 = vpop.f32.mrf.mxu0
        %v1255 = vadd.f32 %v1206, %v1254
        %1256 = vmatmul.bf16.gmra.mxu0 %v387
        %v1257 = vpop.f32.mrf.mxu0
        %v1258 = vadd.f32 %v1209, %v1257
        %v1259 = vpop.f32.mrf.mxu0
        %v1260 = vadd.f32 %v1211, %v1259
        %1261 = vmatmul.bf16.gmra.mxu0 %v391
        %v1262 = vpop.f32.mrf.mxu0
        %v1263 = vadd.f32 %v1214, %v1262
        %v1264 = vpop.f32.mrf.mxu0
        %v1265 = vadd.f32 %v1216, %v1264
        %1266 = vmatmul.bf16.gmra.mxu0 %v395
        %v1267 = vpop.f32.mrf.mxu0
        %v1268 = vadd.f32 %v1219, %v1267
        %v1269 = vpop.f32.mrf.mxu0
        %v1270 = vadd.f32 %v1221, %v1269
        %1271 = vmatmul.bf16.gmra.mxu0 %v399
        %v1272 = vpop.f32.mrf.mxu0
        %v1273 = vadd.f32 %v1224, %v1272
        %v1274 = vpop.f32.mrf.mxu0
        %v1275 = vadd.f32 %v1226, %v1274
        %1276 = vmatmul.bf16.gmra.mxu0 %v403
        %v1277 = vpop.f32.mrf.mxu0
        %v1278 = vadd.f32 %v1229, %v1277
        %v1279 = vpop.f32.mrf.mxu0
        %v1280 = vadd.f32 %v1231, %v1279
        %1281 = vdwg.mxu0
        %1282 = vmatpush.bf16.msra.mxu0 %v1020
        %1283 = vmatpush.bf16.msra.mxu0 %v1016
        %1284 = vmatpush.bf16.msra.mxu0 %v1012
        %1285 = vmatpush.bf16.msra.mxu0 %v1008
        %1286 = vmatpush.bf16.msra.mxu0 %v1004
        %1287 = vmatpush.bf16.msra.mxu0 %v1000
        %1288 = vmatpush.bf16.msra.mxu0 %v996
        %1289 = vmatpush.bf16.msra.mxu0 %v992
        %1290 = vmatmul.bf16.gmra.mxu0 %v376
        %v1291 = vpop.f32.mrf.mxu0
        %v1292 = vadd.f32 %v1243, %v1291
        %v1293 = vpop.f32.mrf.mxu0
        %v1294 = vadd.f32 %v1245, %v1293
        %1295 = vmatmul.bf16.gmra.mxu0 %v380
        %v1296 = vpop.f32.mrf.mxu0
        %v1297 = vadd.f32 %v1248, %v1296
        %v1298 = vpop.f32.mrf.mxu0
        %v1299 = vadd.f32 %v1250, %v1298
        %1300 = vmatmul.bf16.gmra.mxu0 %v384
        %v1301 = vpop.f32.mrf.mxu0
        %v1302 = vadd.f32 %v1253, %v1301
        %v1303 = vpop.f32.mrf.mxu0
        %v1304 = vadd.f32 %v1255, %v1303
        %1305 = vmatmul.bf16.gmra.mxu0 %v388
        %v1306 = vpop.f32.mrf.mxu0
        %v1307 = vadd.f32 %v1258, %v1306
        %v1308 = vpop.f32.mrf.mxu0
        %v1309 = vadd.f32 %v1260, %v1308
        %1310 = vmatmul.bf16.gmra.mxu0 %v392
        %v1311 = vpop.f32.mrf.mxu0
        %v1312 = vadd.f32 %v1263, %v1311
        %v1313 = vpop.f32.mrf.mxu0
        %v1314 = vadd.f32 %v1265, %v1313
        %1315 = vmatmul.bf16.gmra.mxu0 %v396
        %v1316 = vpop.f32.mrf.mxu0
        %v1317 = vadd.f32 %v1268, %v1316
        %v1318 = vpop.f32.mrf.mxu0
        %v1319 = vadd.f32 %v1270, %v1318
        %1320 = vmatmul.bf16.gmra.mxu0 %v400
        %v1321 = vpop.f32.mrf.mxu0
        %v1322 = vadd.f32 %v1273, %v1321
        %v1323 = vpop.f32.mrf.mxu0
        %v1324 = vadd.f32 %v1275, %v1323
        %1325 = vmatmul.bf16.gmra.mxu0 %v404
        %v1326 = vpop.f32.mrf.mxu0
        %v1327 = vadd.f32 %v1278, %v1326
        %v1328 = vpop.f32.mrf.mxu0
        %v1329 = vadd.f32 %v1280, %v1328
        %1330 = vdwg.mxu0
        %1331 = vmatpush.bf16.msra.mxu0 %v1052
        %1332 = vmatpush.bf16.msra.mxu0 %v1048
        %1333 = vmatpush.bf16.msra.mxu0 %v1044
        %1334 = vmatpush.bf16.msra.mxu0 %v1040
        %1335 = vmatpush.bf16.msra.mxu0 %v1036
        %1336 = vmatpush.bf16.msra.mxu0 %v1032
        %1337 = vmatpush.bf16.msra.mxu0 %v1028
        %1338 = vmatpush.bf16.msra.mxu0 %v1024
        %1339 = vmatmul.bf16.gmra.mxu0 %v377
        %v1340 = vpop.f32.mrf.mxu0
        %v1341 = vadd.f32 %v1292, %v1340
        %v1342 = vpop.f32.mrf.mxu0
        %v1343 = vadd.f32 %v1294, %v1342
        %1344 = vmatmul.bf16.gmra.mxu0 %v381
        %v1345 = vpop.f32.mrf.mxu0
        %v1346 = vadd.f32 %v1297, %v1345
        %v1347 = vpop.f32.mrf.mxu0
        %v1348 = vadd.f32 %v1299, %v1347
        %1349 = vmatmul.bf16.gmra.mxu0 %v385
        %v1350 = vpop.f32.mrf.mxu0
        %v1351 = vadd.f32 %v1302, %v1350
        %v1352 = vpop.f32.mrf.mxu0
        %v1353 = vadd.f32 %v1304, %v1352
        %1354 = vmatmul.bf16.gmra.mxu0 %v389
        %v1355 = vpop.f32.mrf.mxu0
        %v1356 = vadd.f32 %v1307, %v1355
        %v1357 = vpop.f32.mrf.mxu0
        %v1358 = vadd.f32 %v1309, %v1357
        %1359 = vmatmul.bf16.gmra.mxu0 %v393
        %v1360 = vpop.f32.mrf.mxu0
        %v1361 = vadd.f32 %v1312, %v1360
        %v1362 = vpop.f32.mrf.mxu0
        %v1363 = vadd.f32 %v1314, %v1362
        %1364 = vmatmul.bf16.gmra.mxu0 %v397
        %v1365 = vpop.f32.mrf.mxu0
        %v1366 = vadd.f32 %v1317, %v1365
        %v1367 = vpop.f32.mrf.mxu0
        %v1368 = vadd.f32 %v1319, %v1367
        %1369 = vmatmul.bf16.gmra.mxu0 %v401
        %v1370 = vpop.f32.mrf.mxu0
        %v1371 = vadd.f32 %v1322, %v1370
        %v1372 = vpop.f32.mrf.mxu0
        %v1373 = vadd.f32 %v1324, %v1372
        %1374 = vmatmul.bf16.gmra.mxu0 %v405
        %v1375 = vpop.f32.mrf.mxu0
        %v1376 = vadd.f32 %v1327, %v1375
        %v1377 = vpop.f32.mrf.mxu0
        %v1378 = vadd.f32 %v1329, %v1377
        %1379 = vdwg.mxu0
        %1380 = vmatpush.bf16.msra.mxu0 %v957
        %1381 = vmatpush.bf16.msra.mxu0 %v953
        %1382 = vmatpush.bf16.msra.mxu0 %v949
        %1383 = vmatpush.bf16.msra.mxu0 %v945
        %1384 = vmatpush.bf16.msra.mxu0 %v941
        %1385 = vmatpush.bf16.msra.mxu0 %v937
        %1386 = vmatpush.bf16.msra.mxu0 %v933
        %1387 = vmatpush.bf16.msra.mxu0 %v929
        %1388 = vmatmul.bf16.gmra.mxu0 %v374
        %v1389 = vpop.f32.mrf.mxu0
        %v1390 = vadd.f32 %v537, %v1389
        %v1391 = vpop.f32.mrf.mxu0
        %v1392 = vadd.f32 %v537, %v1391
        %1393 = vmatmul.bf16.gmra.mxu0 %v378
        %v1394 = vpop.f32.mrf.mxu0
        %v1395 = vadd.f32 %v537, %v1394
        %v1396 = vpop.f32.mrf.mxu0
        %v1397 = vadd.f32 %v537, %v1396
        %1398 = vmatmul.bf16.gmra.mxu0 %v382
        %v1399 = vpop.f32.mrf.mxu0
        %v1400 = vadd.f32 %v537, %v1399
        %v1401 = vpop.f32.mrf.mxu0
        %v1402 = vadd.f32 %v537, %v1401
        %1403 = vmatmul.bf16.gmra.mxu0 %v386
        %v1404 = vpop.f32.mrf.mxu0
        %v1405 = vadd.f32 %v537, %v1404
        %v1406 = vpop.f32.mrf.mxu0
        %v1407 = vadd.f32 %v537, %v1406
        %1408 = vmatmul.bf16.gmra.mxu0 %v390
        %v1409 = vpop.f32.mrf.mxu0
        %v1410 = vadd.f32 %v537, %v1409
        %v1411 = vpop.f32.mrf.mxu0
        %v1412 = vadd.f32 %v537, %v1411
        %1413 = vmatmul.bf16.gmra.mxu0 %v394
        %v1414 = vpop.f32.mrf.mxu0
        %v1415 = vadd.f32 %v537, %v1414
        %v1416 = vpop.f32.mrf.mxu0
        %v1417 = vadd.f32 %v537, %v1416
        %1418 = vmatmul.bf16.gmra.mxu0 %v398
        %v1419 = vpop.f32.mrf.mxu0
        %v1420 = vadd.f32 %v537, %v1419
        %v1421 = vpop.f32.mrf.mxu0
        %v1422 = vadd.f32 %v537, %v1421
        %1423 = vmatmul.bf16.gmra.mxu0 %v402
        %v1424 = vpop.f32.mrf.mxu0
        %v1425 = vadd.f32 %v537, %v1424
        %v1426 = vpop.f32.mrf.mxu0
        %v1427 = vadd.f32 %v537, %v1426
        %1428 = vdwg.mxu0
        %1429 = vmatpush.bf16.msra.mxu0 %v989
        %1430 = vmatpush.bf16.msra.mxu0 %v985
        %1431 = vmatpush.bf16.msra.mxu0 %v981
        %1432 = vmatpush.bf16.msra.mxu0 %v977
        %1433 = vmatpush.bf16.msra.mxu0 %v973
        %1434 = vmatpush.bf16.msra.mxu0 %v969
        %1435 = vmatpush.bf16.msra.mxu0 %v965
        %1436 = vmatpush.bf16.msra.mxu0 %v961
        %1437 = vmatmul.bf16.gmra.mxu0 %v375
        %v1438 = vpop.f32.mrf.mxu0
        %v1439 = vadd.f32 %v1390, %v1438
        %v1440 = vpop.f32.mrf.mxu0
        %v1441 = vadd.f32 %v1392, %v1440
        %1442 = vmatmul.bf16.gmra.mxu0 %v379
        %v1443 = vpop.f32.mrf.mxu0
        %v1444 = vadd.f32 %v1395, %v1443
        %v1445 = vpop.f32.mrf.mxu0
        %v1446 = vadd.f32 %v1397, %v1445
        %1447 = vmatmul.bf16.gmra.mxu0 %v383
        %v1448 = vpop.f32.mrf.mxu0
        %v1449 = vadd.f32 %v1400, %v1448
        %v1450 = vpop.f32.mrf.mxu0
        %v1451 = vadd.f32 %v1402, %v1450
        %1452 = vmatmul.bf16.gmra.mxu0 %v387
        %v1453 = vpop.f32.mrf.mxu0
        %v1454 = vadd.f32 %v1405, %v1453
        %v1455 = vpop.f32.mrf.mxu0
        %v1456 = vadd.f32 %v1407, %v1455
        %1457 = vmatmul.bf16.gmra.mxu0 %v391
        %v1458 = vpop.f32.mrf.mxu0
        %v1459 = vadd.f32 %v1410, %v1458
        %v1460 = vpop.f32.mrf.mxu0
        %v1461 = vadd.f32 %v1412, %v1460
        %1462 = vmatmul.bf16.gmra.mxu0 %v395
        %v1463 = vpop.f32.mrf.mxu0
        %v1464 = vadd.f32 %v1415, %v1463
        %v1465 = vpop.f32.mrf.mxu0
        %v1466 = vadd.f32 %v1417, %v1465
        %1467 = vmatmul.bf16.gmra.mxu0 %v399
        %v1468 = vpop.f32.mrf.mxu0
        %v1469 = vadd.f32 %v1420, %v1468
        %v1470 = vpop.f32.mrf.mxu0
        %v1471 = vadd.f32 %v1422, %v1470
        %1472 = vmatmul.bf16.gmra.mxu0 %v403
        %v1473 = vpop.f32.mrf.mxu0
        %v1474 = vadd.f32 %v1425, %v1473
        %v1475 = vpop.f32.mrf.mxu0
        %v1476 = vadd.f32 %v1427, %v1475
        %1477 = vdwg.mxu0
        %1478 = vmatpush.bf16.msra.mxu0 %v1021
        %1479 = vmatpush.bf16.msra.mxu0 %v1017
        %1480 = vmatpush.bf16.msra.mxu0 %v1013
        %1481 = vmatpush.bf16.msra.mxu0 %v1009
        %1482 = vmatpush.bf16.msra.mxu0 %v1005
        %1483 = vmatpush.bf16.msra.mxu0 %v1001
        %1484 = vmatpush.bf16.msra.mxu0 %v997
        %1485 = vmatpush.bf16.msra.mxu0 %v993
        %1486 = vmatmul.bf16.gmra.mxu0 %v376
        %v1487 = vpop.f32.mrf.mxu0
        %v1488 = vadd.f32 %v1439, %v1487
        %v1489 = vpop.f32.mrf.mxu0
        %v1490 = vadd.f32 %v1441, %v1489
        %1491 = vmatmul.bf16.gmra.mxu0 %v380
        %v1492 = vpop.f32.mrf.mxu0
        %v1493 = vadd.f32 %v1444, %v1492
        %v1494 = vpop.f32.mrf.mxu0
        %v1495 = vadd.f32 %v1446, %v1494
        %1496 = vmatmul.bf16.gmra.mxu0 %v384
        %v1497 = vpop.f32.mrf.mxu0
        %v1498 = vadd.f32 %v1449, %v1497
        %v1499 = vpop.f32.mrf.mxu0
        %v1500 = vadd.f32 %v1451, %v1499
        %1501 = vmatmul.bf16.gmra.mxu0 %v388
        %v1502 = vpop.f32.mrf.mxu0
        %v1503 = vadd.f32 %v1454, %v1502
        %v1504 = vpop.f32.mrf.mxu0
        %v1505 = vadd.f32 %v1456, %v1504
        %1506 = vmatmul.bf16.gmra.mxu0 %v392
        %v1507 = vpop.f32.mrf.mxu0
        %v1508 = vadd.f32 %v1459, %v1507
        %v1509 = vpop.f32.mrf.mxu0
        %v1510 = vadd.f32 %v1461, %v1509
        %1511 = vmatmul.bf16.gmra.mxu0 %v396
        %v1512 = vpop.f32.mrf.mxu0
        %v1513 = vadd.f32 %v1464, %v1512
        %v1514 = vpop.f32.mrf.mxu0
        %v1515 = vadd.f32 %v1466, %v1514
        %1516 = vmatmul.bf16.gmra.mxu0 %v400
        %v1517 = vpop.f32.mrf.mxu0
        %v1518 = vadd.f32 %v1469, %v1517
        %v1519 = vpop.f32.mrf.mxu0
        %v1520 = vadd.f32 %v1471, %v1519
        %1521 = vmatmul.bf16.gmra.mxu0 %v404
        %v1522 = vpop.f32.mrf.mxu0
        %v1523 = vadd.f32 %v1474, %v1522
        %v1524 = vpop.f32.mrf.mxu0
        %v1525 = vadd.f32 %v1476, %v1524
        %1526 = vdwg.mxu0
        %1527 = vmatpush.bf16.msra.mxu0 %v1053
        %1528 = vmatpush.bf16.msra.mxu0 %v1049
        %1529 = vmatpush.bf16.msra.mxu0 %v1045
        %1530 = vmatpush.bf16.msra.mxu0 %v1041
        %1531 = vmatpush.bf16.msra.mxu0 %v1037
        %1532 = vmatpush.bf16.msra.mxu0 %v1033
        %1533 = vmatpush.bf16.msra.mxu0 %v1029
        %1534 = vmatpush.bf16.msra.mxu0 %v1025
        %1535 = vmatmul.bf16.gmra.mxu0 %v377
        %v1536 = vpop.f32.mrf.mxu0
        %v1537 = vadd.f32 %v1488, %v1536
        %v1538 = vpop.f32.mrf.mxu0
        %v1539 = vadd.f32 %v1490, %v1538
        %1540 = vmatmul.bf16.gmra.mxu0 %v381
        %v1541 = vpop.f32.mrf.mxu0
        %v1542 = vadd.f32 %v1493, %v1541
        %v1543 = vpop.f32.mrf.mxu0
        %v1544 = vadd.f32 %v1495, %v1543
        %1545 = vmatmul.bf16.gmra.mxu0 %v385
        %v1546 = vpop.f32.mrf.mxu0
        %v1547 = vadd.f32 %v1498, %v1546
        %v1548 = vpop.f32.mrf.mxu0
        %v1549 = vadd.f32 %v1500, %v1548
        %1550 = vmatmul.bf16.gmra.mxu0 %v389
        %v1551 = vpop.f32.mrf.mxu0
        %v1552 = vadd.f32 %v1503, %v1551
        %v1553 = vpop.f32.mrf.mxu0
        %v1554 = vadd.f32 %v1505, %v1553
        %1555 = vmatmul.bf16.gmra.mxu0 %v393
        %v1556 = vpop.f32.mrf.mxu0
        %v1557 = vadd.f32 %v1508, %v1556
        %v1558 = vpop.f32.mrf.mxu0
        %v1559 = vadd.f32 %v1510, %v1558
        %1560 = vmatmul.bf16.gmra.mxu0 %v397
        %v1561 = vpop.f32.mrf.mxu0
        %v1562 = vadd.f32 %v1513, %v1561
        %v1563 = vpop.f32.mrf.mxu0
        %v1564 = vadd.f32 %v1515, %v1563
        %1565 = vmatmul.bf16.gmra.mxu0 %v401
        %v1566 = vpop.f32.mrf.mxu0
        %v1567 = vadd.f32 %v1518, %v1566
        %v1568 = vpop.f32.mrf.mxu0
        %v1569 = vadd.f32 %v1520, %v1568
        %1570 = vmatmul.bf16.gmra.mxu0 %v405
        %v1571 = vpop.f32.mrf.mxu0
        %v1572 = vadd.f32 %v1523, %v1571
        %v1573 = vpop.f32.mrf.mxu0
        %v1574 = vadd.f32 %v1525, %v1573
        %1575 = vdwg.mxu0
        %1576 = vmatpush.bf16.msra.mxu0 %v958
        %1577 = vmatpush.bf16.msra.mxu0 %v954
        %1578 = vmatpush.bf16.msra.mxu0 %v950
        %1579 = vmatpush.bf16.msra.mxu0 %v946
        %1580 = vmatpush.bf16.msra.mxu0 %v942
        %1581 = vmatpush.bf16.msra.mxu0 %v938
        %1582 = vmatpush.bf16.msra.mxu0 %v934
        %1583 = vmatpush.bf16.msra.mxu0 %v930
        %1584 = vmatmul.bf16.gmra.mxu0 %v374
        %v1585 = vpop.f32.mrf.mxu0
        %v1586 = vadd.f32 %v538, %v1585
        %v1587 = vpop.f32.mrf.mxu0
        %v1588 = vadd.f32 %v538, %v1587
        %1589 = vmatmul.bf16.gmra.mxu0 %v378
        %v1590 = vpop.f32.mrf.mxu0
        %v1591 = vadd.f32 %v538, %v1590
        %v1592 = vpop.f32.mrf.mxu0
        %v1593 = vadd.f32 %v538, %v1592
        %1594 = vmatmul.bf16.gmra.mxu0 %v382
        %v1595 = vpop.f32.mrf.mxu0
        %v1596 = vadd.f32 %v538, %v1595
        %v1597 = vpop.f32.mrf.mxu0
        %v1598 = vadd.f32 %v538, %v1597
        %1599 = vmatmul.bf16.gmra.mxu0 %v386
        %v1600 = vpop.f32.mrf.mxu0
        %v1601 = vadd.f32 %v538, %v1600
        %v1602 = vpop.f32.mrf.mxu0
        %v1603 = vadd.f32 %v538, %v1602
        %1604 = vmatmul.bf16.gmra.mxu0 %v390
        %v1605 = vpop.f32.mrf.mxu0
        %v1606 = vadd.f32 %v538, %v1605
        %v1607 = vpop.f32.mrf.mxu0
        %v1608 = vadd.f32 %v538, %v1607
        %1609 = vmatmul.bf16.gmra.mxu0 %v394
        %v1610 = vpop.f32.mrf.mxu0
        %v1611 = vadd.f32 %v538, %v1610
        %v1612 = vpop.f32.mrf.mxu0
        %v1613 = vadd.f32 %v538, %v1612
        %1614 = vmatmul.bf16.gmra.mxu0 %v398
        %v1615 = vpop.f32.mrf.mxu0
        %v1616 = vadd.f32 %v538, %v1615
        %v1617 = vpop.f32.mrf.mxu0
        %v1618 = vadd.f32 %v538, %v1617
        %1619 = vmatmul.bf16.gmra.mxu0 %v402
        %v1620 = vpop.f32.mrf.mxu0
        %v1621 = vadd.f32 %v538, %v1620
        %v1622 = vpop.f32.mrf.mxu0
        %v1623 = vadd.f32 %v538, %v1622
        %1624 = vdwg.mxu0
        %1625 = vmatpush.bf16.msra.mxu0 %v990
        %1626 = vmatpush.bf16.msra.mxu0 %v986
        %1627 = vmatpush.bf16.msra.mxu0 %v982
        %1628 = vmatpush.bf16.msra.mxu0 %v978
        %1629 = vmatpush.bf16.msra.mxu0 %v974
        %1630 = vmatpush.bf16.msra.mxu0 %v970
        %1631 = vmatpush.bf16.msra.mxu0 %v966
        %1632 = vmatpush.bf16.msra.mxu0 %v962
        %1633 = vmatmul.bf16.gmra.mxu0 %v375
        %v1634 = vpop.f32.mrf.mxu0
        %v1635 = vadd.f32 %v1586, %v1634
        %v1636 = vpop.f32.mrf.mxu0
        %v1637 = vadd.f32 %v1588, %v1636
        %1638 = vmatmul.bf16.gmra.mxu0 %v379
        %v1639 = vpop.f32.mrf.mxu0
        %v1640 = vadd.f32 %v1591, %v1639
        %v1641 = vpop.f32.mrf.mxu0
        %v1642 = vadd.f32 %v1593, %v1641
        %1643 = vmatmul.bf16.gmra.mxu0 %v383
        %v1644 = vpop.f32.mrf.mxu0
        %v1645 = vadd.f32 %v1596, %v1644
        %v1646 = vpop.f32.mrf.mxu0
        %v1647 = vadd.f32 %v1598, %v1646
        %1648 = vmatmul.bf16.gmra.mxu0 %v387
        %v1649 = vpop.f32.mrf.mxu0
        %v1650 = vadd.f32 %v1601, %v1649
        %v1651 = vpop.f32.mrf.mxu0
        %v1652 = vadd.f32 %v1603, %v1651
        %1653 = vmatmul.bf16.gmra.mxu0 %v391
        %v1654 = vpop.f32.mrf.mxu0
        %v1655 = vadd.f32 %v1606, %v1654
        %v1656 = vpop.f32.mrf.mxu0
        %v1657 = vadd.f32 %v1608, %v1656
        %1658 = vmatmul.bf16.gmra.mxu0 %v395
        %v1659 = vpop.f32.mrf.mxu0
        %v1660 = vadd.f32 %v1611, %v1659
        %v1661 = vpop.f32.mrf.mxu0
        %v1662 = vadd.f32 %v1613, %v1661
        %1663 = vmatmul.bf16.gmra.mxu0 %v399
        %v1664 = vpop.f32.mrf.mxu0
        %v1665 = vadd.f32 %v1616, %v1664
        %v1666 = vpop.f32.mrf.mxu0
        %v1667 = vadd.f32 %v1618, %v1666
        %1668 = vmatmul.bf16.gmra.mxu0 %v403
        %v1669 = vpop.f32.mrf.mxu0
        %v1670 = vadd.f32 %v1621, %v1669
        %v1671 = vpop.f32.mrf.mxu0
        %v1672 = vadd.f32 %v1623, %v1671
        %1673 = vdwg.mxu0
        %1674 = vmatpush.bf16.msra.mxu0 %v1022
        %1675 = vmatpush.bf16.msra.mxu0 %v1018
        %1676 = vmatpush.bf16.msra.mxu0 %v1014
        %1677 = vmatpush.bf16.msra.mxu0 %v1010
        %1678 = vmatpush.bf16.msra.mxu0 %v1006
        %1679 = vmatpush.bf16.msra.mxu0 %v1002
        %1680 = vmatpush.bf16.msra.mxu0 %v998
        %1681 = vmatpush.bf16.msra.mxu0 %v994
        %1682 = vmatmul.bf16.gmra.mxu0 %v376
        %v1683 = vpop.f32.mrf.mxu0
        %v1684 = vadd.f32 %v1635, %v1683
        %v1685 = vpop.f32.mrf.mxu0
        %v1686 = vadd.f32 %v1637, %v1685
        %1687 = vmatmul.bf16.gmra.mxu0 %v380
        %v1688 = vpop.f32.mrf.mxu0
        %v1689 = vadd.f32 %v1640, %v1688
        %v1690 = vpop.f32.mrf.mxu0
        %v1691 = vadd.f32 %v1642, %v1690
        %1692 = vmatmul.bf16.gmra.mxu0 %v384
        %v1693 = vpop.f32.mrf.mxu0
        %v1694 = vadd.f32 %v1645, %v1693
        %v1695 = vpop.f32.mrf.mxu0
        %v1696 = vadd.f32 %v1647, %v1695
        %1697 = vmatmul.bf16.gmra.mxu0 %v388
        %v1698 = vpop.f32.mrf.mxu0
        %v1699 = vadd.f32 %v1650, %v1698
        %v1700 = vpop.f32.mrf.mxu0
        %v1701 = vadd.f32 %v1652, %v1700
        %1702 = vmatmul.bf16.gmra.mxu0 %v392
        %v1703 = vpop.f32.mrf.mxu0
        %v1704 = vadd.f32 %v1655, %v1703
        %v1705 = vpop.f32.mrf.mxu0
        %v1706 = vadd.f32 %v1657, %v1705
        %1707 = vmatmul.bf16.gmra.mxu0 %v396
        %v1708 = vpop.f32.mrf.mxu0
        %v1709 = vadd.f32 %v1660, %v1708
        %v1710 = vpop.f32.mrf.mxu0
        %v1711 = vadd.f32 %v1662, %v1710
        %1712 = vmatmul.bf16.gmra.mxu0 %v400
        %v1713 = vpop.f32.mrf.mxu0
        %v1714 = vadd.f32 %v1665, %v1713
        %v1715 = vpop.f32.mrf.mxu0
        %v1716 = vadd.f32 %v1667, %v1715
        %1717 = vmatmul.bf16.gmra.mxu0 %v404
        %v1718 = vpop.f32.mrf.mxu0
        %v1719 = vadd.f32 %v1670, %v1718
        %v1720 = vpop.f32.mrf.mxu0
        %v1721 = vadd.f32 %v1672, %v1720
        %1722 = vdwg.mxu0
        %1723 = vmatpush.bf16.msra.mxu0 %v1054
        %1724 = vmatpush.bf16.msra.mxu0 %v1050
        %1725 = vmatpush.bf16.msra.mxu0 %v1046
        %1726 = vmatpush.bf16.msra.mxu0 %v1042
        %1727 = vmatpush.bf16.msra.mxu0 %v1038
        %1728 = vmatpush.bf16.msra.mxu0 %v1034
        %1729 = vmatpush.bf16.msra.mxu0 %v1030
        %1730 = vmatpush.bf16.msra.mxu0 %v1026
        %1731 = vmatmul.bf16.gmra.mxu0 %v377
        %v1732 = vpop.f32.mrf.mxu0
        %v1733 = vadd.f32 %v1684, %v1732
        %v1734 = vpop.f32.mrf.mxu0
        %v1735 = vadd.f32 %v1686, %v1734
        %1736 = vmatmul.bf16.gmra.mxu0 %v381
        %v1737 = vpop.f32.mrf.mxu0
        %v1738 = vadd.f32 %v1689, %v1737
        %v1739 = vpop.f32.mrf.mxu0
        %v1740 = vadd.f32 %v1691, %v1739
        %1741 = vmatmul.bf16.gmra.mxu0 %v385
        %v1742 = vpop.f32.mrf.mxu0
        %v1743 = vadd.f32 %v1694, %v1742
        %v1744 = vpop.f32.mrf.mxu0
        %v1745 = vadd.f32 %v1696, %v1744
        %1746 = vmatmul.bf16.gmra.mxu0 %v389
        %v1747 = vpop.f32.mrf.mxu0
        %v1748 = vadd.f32 %v1699, %v1747
        %v1749 = vpop.f32.mrf.mxu0
        %v1750 = vadd.f32 %v1701, %v1749
        %1751 = vmatmul.bf16.gmra.mxu0 %v393
        %v1752 = vpop.f32.mrf.mxu0
        %v1753 = vadd.f32 %v1704, %v1752
        %v1754 = vpop.f32.mrf.mxu0
        %v1755 = vadd.f32 %v1706, %v1754
        %1756 = vmatmul.bf16.gmra.mxu0 %v397
        %v1757 = vpop.f32.mrf.mxu0
        %v1758 = vadd.f32 %v1709, %v1757
        %v1759 = vpop.f32.mrf.mxu0
        %v1760 = vadd.f32 %v1711, %v1759
        %1761 = vmatmul.bf16.gmra.mxu0 %v401
        %v1762 = vpop.f32.mrf.mxu0
        %v1763 = vadd.f32 %v1714, %v1762
        %v1764 = vpop.f32.mrf.mxu0
        %v1765 = vadd.f32 %v1716, %v1764
        %1766 = vmatmul.bf16.gmra.mxu0 %v405
        %v1767 = vpop.f32.mrf.mxu0
        %v1768 = vadd.f32 %v1719, %v1767
        %v1769 = vpop.f32.mrf.mxu0
        %v1770 = vadd.f32 %v1721, %v1769
        %1771 = vdwg.mxu0
        %1772 = vmatpush.bf16.msra.mxu0 %v959
        %1773 = vmatpush.bf16.msra.mxu0 %v955
        %1774 = vmatpush.bf16.msra.mxu0 %v951
        %1775 = vmatpush.bf16.msra.mxu0 %v947
        %1776 = vmatpush.bf16.msra.mxu0 %v943
        %1777 = vmatpush.bf16.msra.mxu0 %v939
        %1778 = vmatpush.bf16.msra.mxu0 %v935
        %1779 = vmatpush.bf16.msra.mxu0 %v931
        %1780 = vmatmul.bf16.gmra.mxu0 %v374
        %v1781 = vpop.f32.mrf.mxu0
        %v1782 = vadd.f32 %v539, %v1781
        %v1783 = vpop.f32.mrf.mxu0
        %v1784 = vadd.f32 %v539, %v1783
        %1785 = vmatmul.bf16.gmra.mxu0 %v378
        %v1786 = vpop.f32.mrf.mxu0
        %v1787 = vadd.f32 %v539, %v1786
        %v1788 = vpop.f32.mrf.mxu0
        %v1789 = vadd.f32 %v539, %v1788
        %1790 = vmatmul.bf16.gmra.mxu0 %v382
        %v1791 = vpop.f32.mrf.mxu0
        %v1792 = vadd.f32 %v539, %v1791
        %v1793 = vpop.f32.mrf.mxu0
        %v1794 = vadd.f32 %v539, %v1793
        %1795 = vmatmul.bf16.gmra.mxu0 %v386
        %v1796 = vpop.f32.mrf.mxu0
        %v1797 = vadd.f32 %v539, %v1796
        %v1798 = vpop.f32.mrf.mxu0
        %v1799 = vadd.f32 %v539, %v1798
        %1800 = vmatmul.bf16.gmra.mxu0 %v390
        %v1801 = vpop.f32.mrf.mxu0
        %v1802 = vadd.f32 %v539, %v1801
        %v1803 = vpop.f32.mrf.mxu0
        %v1804 = vadd.f32 %v539, %v1803
        %1805 = vmatmul.bf16.gmra.mxu0 %v394
        %v1806 = vpop.f32.mrf.mxu0
        %v1807 = vadd.f32 %v539, %v1806
        %v1808 = vpop.f32.mrf.mxu0
        %v1809 = vadd.f32 %v539, %v1808
        %1810 = vmatmul.bf16.gmra.mxu0 %v398
        %v1811 = vpop.f32.mrf.mxu0
        %v1812 = vadd.f32 %v539, %v1811
        %v1813 = vpop.f32.mrf.mxu0
        %v1814 = vadd.f32 %v539, %v1813
        %1815 = vmatmul.bf16.gmra.mxu0 %v402
        %v1816 = vpop.f32.mrf.mxu0
        %v1817 = vadd.f32 %v539, %v1816
        %v1818 = vpop.f32.mrf.mxu0
        %v1819 = vadd.f32 %v539, %v1818
        %1820 = vdwg.mxu0
        %1821 = vmatpush.bf16.msra.mxu0 %v991
        %1822 = vmatpush.bf16.msra.mxu0 %v987
        %1823 = vmatpush.bf16.msra.mxu0 %v983
        %1824 = vmatpush.bf16.msra.mxu0 %v979
        %1825 = vmatpush.bf16.msra.mxu0 %v975
        %1826 = vmatpush.bf16.msra.mxu0 %v971
        %1827 = vmatpush.bf16.msra.mxu0 %v967
        %1828 = vmatpush.bf16.msra.mxu0 %v963
        %1829 = vmatmul.bf16.gmra.mxu0 %v375
        %v1830 = vpop.f32.mrf.mxu0
        %v1831 = vadd.f32 %v1782, %v1830
        %v1832 = vpop.f32.mrf.mxu0
        %v1833 = vadd.f32 %v1784, %v1832
        %1834 = vmatmul.bf16.gmra.mxu0 %v379
        %v1835 = vpop.f32.mrf.mxu0
        %v1836 = vadd.f32 %v1787, %v1835
        %v1837 = vpop.f32.mrf.mxu0
        %v1838 = vadd.f32 %v1789, %v1837
        %1839 = vmatmul.bf16.gmra.mxu0 %v383
        %v1840 = vpop.f32.mrf.mxu0
        %v1841 = vadd.f32 %v1792, %v1840
        %v1842 = vpop.f32.mrf.mxu0
        %v1843 = vadd.f32 %v1794, %v1842
        %1844 = vmatmul.bf16.gmra.mxu0 %v387
        %v1845 = vpop.f32.mrf.mxu0
        %v1846 = vadd.f32 %v1797, %v1845
        %v1847 = vpop.f32.mrf.mxu0
        %v1848 = vadd.f32 %v1799, %v1847
        %1849 = vmatmul.bf16.gmra.mxu0 %v391
        %v1850 = vpop.f32.mrf.mxu0
        %v1851 = vadd.f32 %v1802, %v1850
        %v1852 = vpop.f32.mrf.mxu0
        %v1853 = vadd.f32 %v1804, %v1852
        %1854 = vmatmul.bf16.gmra.mxu0 %v395
        %v1855 = vpop.f32.mrf.mxu0
        %v1856 = vadd.f32 %v1807, %v1855
        %v1857 = vpop.f32.mrf.mxu0
        %v1858 = vadd.f32 %v1809, %v1857
        %1859 = vmatmul.bf16.gmra.mxu0 %v399
        %v1860 = vpop.f32.mrf.mxu0
        %v1861 = vadd.f32 %v1812, %v1860
        %v1862 = vpop.f32.mrf.mxu0
        %v1863 = vadd.f32 %v1814, %v1862
        %1864 = vmatmul.bf16.gmra.mxu0 %v403
        %v1865 = vpop.f32.mrf.mxu0
        %v1866 = vadd.f32 %v1817, %v1865
        %v1867 = vpop.f32.mrf.mxu0
        %v1868 = vadd.f32 %v1819, %v1867
        %1869 = vdwg.mxu0
        %1870 = vmatpush.bf16.msra.mxu0 %v1023
        %1871 = vmatpush.bf16.msra.mxu0 %v1019
        %1872 = vmatpush.bf16.msra.mxu0 %v1015
        %1873 = vmatpush.bf16.msra.mxu0 %v1011
        %1874 = vmatpush.bf16.msra.mxu0 %v1007
        %1875 = vmatpush.bf16.msra.mxu0 %v1003
        %1876 = vmatpush.bf16.msra.mxu0 %v999
        %1877 = vmatpush.bf16.msra.mxu0 %v995
        %1878 = vmatmul.bf16.gmra.mxu0 %v376
        %v1879 = vpop.f32.mrf.mxu0
        %v1880 = vadd.f32 %v1831, %v1879
        %v1881 = vpop.f32.mrf.mxu0
        %v1882 = vadd.f32 %v1833, %v1881
        %1883 = vmatmul.bf16.gmra.mxu0 %v380
        %v1884 = vpop.f32.mrf.mxu0
        %v1885 = vadd.f32 %v1836, %v1884
        %v1886 = vpop.f32.mrf.mxu0
        %v1887 = vadd.f32 %v1838, %v1886
        %1888 = vmatmul.bf16.gmra.mxu0 %v384
        %v1889 = vpop.f32.mrf.mxu0
        %v1890 = vadd.f32 %v1841, %v1889
        %v1891 = vpop.f32.mrf.mxu0
        %v1892 = vadd.f32 %v1843, %v1891
        %1893 = vmatmul.bf16.gmra.mxu0 %v388
        %v1894 = vpop.f32.mrf.mxu0
        %v1895 = vadd.f32 %v1846, %v1894
        %v1896 = vpop.f32.mrf.mxu0
        %v1897 = vadd.f32 %v1848, %v1896
        %1898 = vmatmul.bf16.gmra.mxu0 %v392
        %v1899 = vpop.f32.mrf.mxu0
        %v1900 = vadd.f32 %v1851, %v1899
        %v1901 = vpop.f32.mrf.mxu0
        %v1902 = vadd.f32 %v1853, %v1901
        %1903 = vmatmul.bf16.gmra.mxu0 %v396
        %v1904 = vpop.f32.mrf.mxu0
        %v1905 = vadd.f32 %v1856, %v1904
        %v1906 = vpop.f32.mrf.mxu0
        %v1907 = vadd.f32 %v1858, %v1906
        %1908 = vmatmul.bf16.gmra.mxu0 %v400
        %v1909 = vpop.f32.mrf.mxu0
        %v1910 = vadd.f32 %v1861, %v1909
        %v1911 = vpop.f32.mrf.mxu0
        %v1912 = vadd.f32 %v1863, %v1911
        %1913 = vmatmul.bf16.gmra.mxu0 %v404
        %v1914 = vpop.f32.mrf.mxu0
        %v1915 = vadd.f32 %v1866, %v1914
        %v1916 = vpop.f32.mrf.mxu0
        %v1917 = vadd.f32 %v1868, %v1916
        %1918 = vdwg.mxu0
        %1919 = vmatpush.bf16.msra.mxu0 %v1055
        %1920 = vmatpush.bf16.msra.mxu0 %v1051
        %1921 = vmatpush.bf16.msra.mxu0 %v1047
        %1922 = vmatpush.bf16.msra.mxu0 %v1043
        %1923 = vmatpush.bf16.msra.mxu0 %v1039
        %1924 = vmatpush.bf16.msra.mxu0 %v1035
        %1925 = vmatpush.bf16.msra.mxu0 %v1031
        %1926 = vmatpush.bf16.msra.mxu0 %v1027
        %1927 = vmatmul.bf16.gmra.mxu0 %v377
        %v1928 = vpop.f32.mrf.mxu0
        %v1929 = vadd.f32 %v1880, %v1928
        %v1930 = vpop.f32.mrf.mxu0
        %v1931 = vadd.f32 %v1882, %v1930
        %1932 = vmatmul.bf16.gmra.mxu0 %v381
        %v1933 = vpop.f32.mrf.mxu0
        %v1934 = vadd.f32 %v1885, %v1933
        %v1935 = vpop.f32.mrf.mxu0
        %v1936 = vadd.f32 %v1887, %v1935
        %1937 = vmatmul.bf16.gmra.mxu0 %v385
        %v1938 = vpop.f32.mrf.mxu0
        %v1939 = vadd.f32 %v1890, %v1938
        %v1940 = vpop.f32.mrf.mxu0
        %v1941 = vadd.f32 %v1892, %v1940
        %1942 = vmatmul.bf16.gmra.mxu0 %v389
        %v1943 = vpop.f32.mrf.mxu0
        %v1944 = vadd.f32 %v1895, %v1943
        %v1945 = vpop.f32.mrf.mxu0
        %v1946 = vadd.f32 %v1897, %v1945
        %1947 = vmatmul.bf16.gmra.mxu0 %v393
        %v1948 = vpop.f32.mrf.mxu0
        %v1949 = vadd.f32 %v1900, %v1948
        %v1950 = vpop.f32.mrf.mxu0
        %v1951 = vadd.f32 %v1902, %v1950
        %1952 = vmatmul.bf16.gmra.mxu0 %v397
        %v1953 = vpop.f32.mrf.mxu0
        %v1954 = vadd.f32 %v1905, %v1953
        %v1955 = vpop.f32.mrf.mxu0
        %v1956 = vadd.f32 %v1907, %v1955
        %1957 = vmatmul.bf16.gmra.mxu0 %v401
        %v1958 = vpop.f32.mrf.mxu0
        %v1959 = vadd.f32 %v1910, %v1958
        %v1960 = vpop.f32.mrf.mxu0
        %v1961 = vadd.f32 %v1912, %v1960
        %1962 = vmatmul.bf16.gmra.mxu0 %v405
        %v1963 = vpop.f32.mrf.mxu0
        %v1964 = vadd.f32 %v1915, %v1963
        %v1965 = vpop.f32.mrf.mxu0
        %v1966 = vadd.f32 %v1917, %v1965
        %1967 = vdwg.mxu0
        %v1968 = vpack.c.bf16 %v1343, %v1341
        %v1969 = vpack.c.bf16 %v1539, %v1537
        %v1970 = vpack.c.bf16 %v1735, %v1733
        %v1971 = vpack.c.bf16 %v1931, %v1929
        %v1972 = vpack.c.bf16 %v1348, %v1346
        %v1973 = vpack.c.bf16 %v1544, %v1542
        %v1974 = vpack.c.bf16 %v1740, %v1738
        %v1975 = vpack.c.bf16 %v1936, %v1934
        %v1976 = vpack.c.bf16 %v1353, %v1351
        %v1977 = vpack.c.bf16 %v1549, %v1547
        %v1978 = vpack.c.bf16 %v1745, %v1743
        %v1979 = vpack.c.bf16 %v1941, %v1939
        %v1980 = vpack.c.bf16 %v1358, %v1356
        %v1981 = vpack.c.bf16 %v1554, %v1552
        %v1982 = vpack.c.bf16 %v1750, %v1748
        %v1983 = vpack.c.bf16 %v1946, %v1944
        %v1984 = vpack.c.bf16 %v1363, %v1361
        %v1985 = vpack.c.bf16 %v1559, %v1557
        %v1986 = vpack.c.bf16 %v1755, %v1753
        %v1987 = vpack.c.bf16 %v1951, %v1949
        %v1988 = vpack.c.bf16 %v1368, %v1366
        %v1989 = vpack.c.bf16 %v1564, %v1562
        %v1990 = vpack.c.bf16 %v1760, %v1758
        %v1991 = vpack.c.bf16 %v1956, %v1954
        %v1992 = vpack.c.bf16 %v1373, %v1371
        %v1993 = vpack.c.bf16 %v1569, %v1567
        %v1994 = vpack.c.bf16 %v1765, %v1763
        %v1995 = vpack.c.bf16 %v1961, %v1959
        %v1996 = vpack.c.bf16 %v1378, %v1376
        %v1997 = vpack.c.bf16 %v1574, %v1572
        %v1998 = vpack.c.bf16 %v1770, %v1768
        %v1999 = vpack.c.bf16 %v1966, %v1964
        %v2000 = vld [vmem:[#allocation8] sm:$0xff]
        %v2001 = vld [vmem:[#allocation8 + $0x8] sm:$0xff]
        %v2002 = vld [vmem:[#allocation8 + $0x10] sm:$0xff]
        %v2003 = vld [vmem:[#allocation8 + $0x18] sm:$0xff]
        %v2004 = vld [vmem:[#allocation8 + $0x20] sm:$0xff]
        %v2005 = vld [vmem:[#allocation8 + $0x28] sm:$0xff]
        %v2006 = vld [vmem:[#allocation8 + $0x30] sm:$0xff]
        %v2007 = vld [vmem:[#allocation8 + $0x38] sm:$0xff]
        %v2008 = vld [vmem:[#allocation8 + $0x40] sm:$0xff]
        %v2009 = vld [vmem:[#allocation8 + $0x48] sm:$0xff]
        %v2010 = vld [vmem:[#allocation8 + $0x50] sm:$0xff]
        %v2011 = vld [vmem:[#allocation8 + $0x58] sm:$0xff]
        %v2012 = vld [vmem:[#allocation8 + $0x60] sm:$0xff]
        %v2013 = vld [vmem:[#allocation8 + $0x68] sm:$0xff]
        %v2014 = vld [vmem:[#allocation8 + $0x70] sm:$0xff]
        %v2015 = vld [vmem:[#allocation8 + $0x78] sm:$0xff]
        %v2016 = vld [vmem:[#allocation8 + $0x80] sm:$0xff]
        %v2017 = vld [vmem:[#allocation8 + $0x88] sm:$0xff]
        %v2018 = vld [vmem:[#allocation8 + $0x90] sm:$0xff]
        %v2019 = vld [vmem:[#allocation8 + $0x98] sm:$0xff]
        %v2020 = vld [vmem:[#allocation8 + $0xa0] sm:$0xff]
        %v2021 = vld [vmem:[#allocation8 + $0xa8] sm:$0xff]
        %v2022 = vld [vmem:[#allocation8 + $0xb0] sm:$0xff]
        %v2023 = vld [vmem:[#allocation8 + $0xb8] sm:$0xff]
        %v2024 = vld [vmem:[#allocation8 + $0xc0] sm:$0xff]
        %v2025 = vld [vmem:[#allocation8 + $0xc8] sm:$0xff]
        %v2026 = vld [vmem:[#allocation8 + $0xd0] sm:$0xff]
        %v2027 = vld [vmem:[#allocation8 + $0xd8] sm:$0xff]
        %v2028 = vld [vmem:[#allocation8 + $0xe0] sm:$0xff]
        %v2029 = vld [vmem:[#allocation8 + $0xe8] sm:$0xff]
        %v2030 = vld [vmem:[#allocation8 + $0xf0] sm:$0xff]
        %v2031 = vld [vmem:[#allocation8 + $0xf8] sm:$0xff]
        %v2032 = vld [vmem:[#allocation8 + $0x100] sm:$0xff]
        %v2033 = vld [vmem:[#allocation8 + $0x108] sm:$0xff]
        %v2034 = vld [vmem:[#allocation8 + $0x110] sm:$0xff]
        %v2035 = vld [vmem:[#allocation8 + $0x118] sm:$0xff]
        %v2036 = vld [vmem:[#allocation8 + $0x120] sm:$0xff]
        %v2037 = vld [vmem:[#allocation8 + $0x128] sm:$0xff]
        %v2038 = vld [vmem:[#allocation8 + $0x130] sm:$0xff]
        %v2039 = vld [vmem:[#allocation8 + $0x138] sm:$0xff]
        %v2040 = vld [vmem:[#allocation8 + $0x140] sm:$0xff]
        %v2041 = vld [vmem:[#allocation8 + $0x148] sm:$0xff]
        %v2042 = vld [vmem:[#allocation8 + $0x150] sm:$0xff]
        %v2043 = vld [vmem:[#allocation8 + $0x158] sm:$0xff]
        %v2044 = vld [vmem:[#allocation8 + $0x160] sm:$0xff]
        %v2045 = vld [vmem:[#allocation8 + $0x168] sm:$0xff]
        %v2046 = vld [vmem:[#allocation8 + $0x170] sm:$0xff]
        %v2047 = vld [vmem:[#allocation8 + $0x178] sm:$0xff]
        %v2048 = vld [vmem:[#allocation8 + $0x180] sm:$0xff]
        %v2049 = vld [vmem:[#allocation8 + $0x188] sm:$0xff]
        %v2050 = vld [vmem:[#allocation8 + $0x190] sm:$0xff]
        %v2051 = vld [vmem:[#allocation8 + $0x198] sm:$0xff]
        %v2052 = vld [vmem:[#allocation8 + $0x1a0] sm:$0xff]
        %v2053 = vld [vmem:[#allocation8 + $0x1a8] sm:$0xff]
        %v2054 = vld [vmem:[#allocation8 + $0x1b0] sm:$0xff]
        %v2055 = vld [vmem:[#allocation8 + $0x1b8] sm:$0xff]
        %v2056 = vld [vmem:[#allocation8 + $0x1c0] sm:$0xff]
        %v2057 = vld [vmem:[#allocation8 + $0x1c8] sm:$0xff]
        %v2058 = vld [vmem:[#allocation8 + $0x1d0] sm:$0xff]
        %v2059 = vld [vmem:[#allocation8 + $0x1d8] sm:$0xff]
        %v2060 = vld [vmem:[#allocation8 + $0x1e0] sm:$0xff]
        %v2061 = vld [vmem:[#allocation8 + $0x1e8] sm:$0xff]
        %v2062 = vld [vmem:[#allocation8 + $0x1f0] sm:$0xff]
        %v2063 = vld [vmem:[#allocation8 + $0x1f8] sm:$0xff]
        %v2064 = vld [vmem:[#allocation8 + $0x200] sm:$0xff]
        %v2065 = vld [vmem:[#allocation8 + $0x208] sm:$0xff]
        %v2066 = vld [vmem:[#allocation8 + $0x210] sm:$0xff]
        %v2067 = vld [vmem:[#allocation8 + $0x218] sm:$0xff]
        %v2068 = vld [vmem:[#allocation8 + $0x220] sm:$0xff]
        %v2069 = vld [vmem:[#allocation8 + $0x228] sm:$0xff]
        %v2070 = vld [vmem:[#allocation8 + $0x230] sm:$0xff]
        %v2071 = vld [vmem:[#allocation8 + $0x238] sm:$0xff]
        %v2072 = vld [vmem:[#allocation8 + $0x240] sm:$0xff]
        %v2073 = vld [vmem:[#allocation8 + $0x248] sm:$0xff]
        %v2074 = vld [vmem:[#allocation8 + $0x250] sm:$0xff]
        %v2075 = vld [vmem:[#allocation8 + $0x258] sm:$0xff]
        %v2076 = vld [vmem:[#allocation8 + $0x260] sm:$0xff]
        %v2077 = vld [vmem:[#allocation8 + $0x268] sm:$0xff]
        %v2078 = vld [vmem:[#allocation8 + $0x270] sm:$0xff]
        %v2079 = vld [vmem:[#allocation8 + $0x278] sm:$0xff]
        %v2080 = vld [vmem:[#allocation8 + $0x280] sm:$0xff]
        %v2081 = vld [vmem:[#allocation8 + $0x288] sm:$0xff]
        %v2082 = vld [vmem:[#allocation8 + $0x290] sm:$0xff]
        %v2083 = vld [vmem:[#allocation8 + $0x298] sm:$0xff]
        %v2084 = vld [vmem:[#allocation8 + $0x2a0] sm:$0xff]
        %v2085 = vld [vmem:[#allocation8 + $0x2a8] sm:$0xff]
        %v2086 = vld [vmem:[#allocation8 + $0x2b0] sm:$0xff]
        %v2087 = vld [vmem:[#allocation8 + $0x2b8] sm:$0xff]
        %v2088 = vld [vmem:[#allocation8 + $0x2c0] sm:$0xff]
        %v2089 = vld [vmem:[#allocation8 + $0x2c8] sm:$0xff]
        %v2090 = vld [vmem:[#allocation8 + $0x2d0] sm:$0xff]
        %v2091 = vld [vmem:[#allocation8 + $0x2d8] sm:$0xff]
        %v2092 = vld [vmem:[#allocation8 + $0x2e0] sm:$0xff]
        %v2093 = vld [vmem:[#allocation8 + $0x2e8] sm:$0xff]
        %v2094 = vld [vmem:[#allocation8 + $0x2f0] sm:$0xff]
        %v2095 = vld [vmem:[#allocation8 + $0x2f8] sm:$0xff]
        %v2096 = vld [vmem:[#allocation8 + $0x300] sm:$0xff]
        %v2097 = vld [vmem:[#allocation8 + $0x308] sm:$0xff]
        %v2098 = vld [vmem:[#allocation8 + $0x310] sm:$0xff]
        %v2099 = vld [vmem:[#allocation8 + $0x318] sm:$0xff]
        %v2100 = vld [vmem:[#allocation8 + $0x320] sm:$0xff]
        %v2101 = vld [vmem:[#allocation8 + $0x328] sm:$0xff]
        %v2102 = vld [vmem:[#allocation8 + $0x330] sm:$0xff]
        %v2103 = vld [vmem:[#allocation8 + $0x338] sm:$0xff]
        %v2104 = vld [vmem:[#allocation8 + $0x340] sm:$0xff]
        %v2105 = vld [vmem:[#allocation8 + $0x348] sm:$0xff]
        %v2106 = vld [vmem:[#allocation8 + $0x350] sm:$0xff]
        %v2107 = vld [vmem:[#allocation8 + $0x358] sm:$0xff]
        %v2108 = vld [vmem:[#allocation8 + $0x360] sm:$0xff]
        %v2109 = vld [vmem:[#allocation8 + $0x368] sm:$0xff]
        %v2110 = vld [vmem:[#allocation8 + $0x370] sm:$0xff]
        %v2111 = vld [vmem:[#allocation8 + $0x378] sm:$0xff]
        %v2112 = vld [vmem:[#allocation8 + $0x380] sm:$0xff]
        %v2113 = vld [vmem:[#allocation8 + $0x388] sm:$0xff]
        %v2114 = vld [vmem:[#allocation8 + $0x390] sm:$0xff]
        %v2115 = vld [vmem:[#allocation8 + $0x398] sm:$0xff]
        %v2116 = vld [vmem:[#allocation8 + $0x3a0] sm:$0xff]
        %v2117 = vld [vmem:[#allocation8 + $0x3a8] sm:$0xff]
        %v2118 = vld [vmem:[#allocation8 + $0x3b0] sm:$0xff]
        %v2119 = vld [vmem:[#allocation8 + $0x3b8] sm:$0xff]
        %v2120 = vld [vmem:[#allocation8 + $0x3c0] sm:$0xff]
        %v2121 = vld [vmem:[#allocation8 + $0x3c8] sm:$0xff]
        %v2122 = vld [vmem:[#allocation8 + $0x3d0] sm:$0xff]
        %v2123 = vld [vmem:[#allocation8 + $0x3d8] sm:$0xff]
        %v2124 = vld [vmem:[#allocation8 + $0x3e0] sm:$0xff]
        %v2125 = vld [vmem:[#allocation8 + $0x3e8] sm:$0xff]
        %v2126 = vld [vmem:[#allocation8 + $0x3f0] sm:$0xff]
        %v2127 = vld [vmem:[#allocation8 + $0x3f8] sm:$0xff]
        %v2128 = vld [vmem:[#allocation10] sm:$0xf]
        %v2130 = vperm.slane %v2128, 0
        %v2131 = vperm.slane %v2128, 1
        %v2132 = vperm.slane %v2128, 2
        %v2133 = vperm.slane %v2128, 3
        %v2266 = vunpack.c.l.b16 %v2000
        %v2267 = vunpack.c.h.b16 %v2000
        %v2268 = vunpack.c.l.b16 %v2001
        %v2269 = vunpack.c.h.b16 %v2001
        %v2270 = vunpack.c.l.b16 %v2002
        %v2271 = vunpack.c.h.b16 %v2002
        %v2272 = vunpack.c.l.b16 %v2003
        %v2273 = vunpack.c.h.b16 %v2003
        %v2274 = vunpack.c.l.b16 %v2004
        %v2275 = vunpack.c.h.b16 %v2004
        %v2276 = vunpack.c.l.b16 %v2005
        %v2277 = vunpack.c.h.b16 %v2005
        %v2278 = vunpack.c.l.b16 %v2006
        %v2279 = vunpack.c.h.b16 %v2006
        %v2280 = vunpack.c.l.b16 %v2007
        %v2281 = vunpack.c.h.b16 %v2007
        %v2282 = vunpack.c.l.b16 %v2008
        %v2283 = vunpack.c.h.b16 %v2008
        %v2284 = vunpack.c.l.b16 %v2009
        %v2285 = vunpack.c.h.b16 %v2009
        %v2286 = vunpack.c.l.b16 %v2010
        %v2287 = vunpack.c.h.b16 %v2010
        %v2288 = vunpack.c.l.b16 %v2011
        %v2289 = vunpack.c.h.b16 %v2011
        %v2290 = vunpack.c.l.b16 %v2012
        %v2291 = vunpack.c.h.b16 %v2012
        %v2292 = vunpack.c.l.b16 %v2013
        %v2293 = vunpack.c.h.b16 %v2013
        %v2294 = vunpack.c.l.b16 %v2014
        %v2295 = vunpack.c.h.b16 %v2014
        %v2296 = vunpack.c.l.b16 %v2015
        %v2297 = vunpack.c.h.b16 %v2015
        %v2298 = vunpack.c.l.b16 %v2016
        %v2299 = vunpack.c.h.b16 %v2016
        %v2300 = vunpack.c.l.b16 %v2017
        %v2301 = vunpack.c.h.b16 %v2017
        %v2302 = vunpack.c.l.b16 %v2018
        %v2303 = vunpack.c.h.b16 %v2018
        %v2304 = vunpack.c.l.b16 %v2019
        %v2305 = vunpack.c.h.b16 %v2019
        %v2306 = vunpack.c.l.b16 %v2020
        %v2307 = vunpack.c.h.b16 %v2020
        %v2308 = vunpack.c.l.b16 %v2021
        %v2309 = vunpack.c.h.b16 %v2021
        %v2310 = vunpack.c.l.b16 %v2022
        %v2311 = vunpack.c.h.b16 %v2022
        %v2312 = vunpack.c.l.b16 %v2023
        %v2313 = vunpack.c.h.b16 %v2023
        %v2314 = vunpack.c.l.b16 %v2024
        %v2315 = vunpack.c.h.b16 %v2024
        %v2316 = vunpack.c.l.b16 %v2025
        %v2317 = vunpack.c.h.b16 %v2025
        %v2318 = vunpack.c.l.b16 %v2026
        %v2319 = vunpack.c.h.b16 %v2026
        %v2320 = vunpack.c.l.b16 %v2027
        %v2321 = vunpack.c.h.b16 %v2027
        %v2322 = vunpack.c.l.b16 %v2028
        %v2323 = vunpack.c.h.b16 %v2028
        %v2324 = vunpack.c.l.b16 %v2029
        %v2325 = vunpack.c.h.b16 %v2029
        %v2326 = vunpack.c.l.b16 %v2030
        %v2327 = vunpack.c.h.b16 %v2030
        %v2328 = vunpack.c.l.b16 %v2031
        %v2329 = vunpack.c.h.b16 %v2031
        %v2330 = vunpack.c.l.b16 %v2032
        %v2331 = vunpack.c.h.b16 %v2032
        %v2332 = vunpack.c.l.b16 %v2033
        %v2333 = vunpack.c.h.b16 %v2033
        %v2334 = vunpack.c.l.b16 %v2034
        %v2335 = vunpack.c.h.b16 %v2034
        %v2336 = vunpack.c.l.b16 %v2035
        %v2337 = vunpack.c.h.b16 %v2035
        %v2338 = vunpack.c.l.b16 %v2036
        %v2339 = vunpack.c.h.b16 %v2036
        %v2340 = vunpack.c.l.b16 %v2037
        %v2341 = vunpack.c.h.b16 %v2037
        %v2342 = vunpack.c.l.b16 %v2038
        %v2343 = vunpack.c.h.b16 %v2038
        %v2344 = vunpack.c.l.b16 %v2039
        %v2345 = vunpack.c.h.b16 %v2039
        %v2346 = vunpack.c.l.b16 %v2040
        %v2347 = vunpack.c.h.b16 %v2040
        %v2348 = vunpack.c.l.b16 %v2041
        %v2349 = vunpack.c.h.b16 %v2041
        %v2350 = vunpack.c.l.b16 %v2042
        %v2351 = vunpack.c.h.b16 %v2042
        %v2352 = vunpack.c.l.b16 %v2043
        %v2353 = vunpack.c.h.b16 %v2043
        %v2354 = vunpack.c.l.b16 %v2044
        %v2355 = vunpack.c.h.b16 %v2044
        %v2356 = vunpack.c.l.b16 %v2045
        %v2357 = vunpack.c.h.b16 %v2045
        %v2358 = vunpack.c.l.b16 %v2046
        %v2359 = vunpack.c.h.b16 %v2046
        %v2360 = vunpack.c.l.b16 %v2047
        %v2361 = vunpack.c.h.b16 %v2047
        %v2362 = vunpack.c.l.b16 %v2048
        %v2363 = vunpack.c.h.b16 %v2048
        %v2364 = vunpack.c.l.b16 %v2049
        %v2365 = vunpack.c.h.b16 %v2049
        %v2366 = vunpack.c.l.b16 %v2050
        %v2367 = vunpack.c.h.b16 %v2050
        %v2368 = vunpack.c.l.b16 %v2051
        %v2369 = vunpack.c.h.b16 %v2051
        %v2370 = vunpack.c.l.b16 %v2052
        %v2371 = vunpack.c.h.b16 %v2052
        %v2372 = vunpack.c.l.b16 %v2053
        %v2373 = vunpack.c.h.b16 %v2053
        %v2374 = vunpack.c.l.b16 %v2054
        %v2375 = vunpack.c.h.b16 %v2054
        %v2376 = vunpack.c.l.b16 %v2055
        %v2377 = vunpack.c.h.b16 %v2055
        %v2378 = vunpack.c.l.b16 %v2056
        %v2379 = vunpack.c.h.b16 %v2056
        %v2380 = vunpack.c.l.b16 %v2057
        %v2381 = vunpack.c.h.b16 %v2057
        %v2382 = vunpack.c.l.b16 %v2058
        %v2383 = vunpack.c.h.b16 %v2058
        %v2384 = vunpack.c.l.b16 %v2059
        %v2385 = vunpack.c.h.b16 %v2059
        %v2386 = vunpack.c.l.b16 %v2060
        %v2387 = vunpack.c.h.b16 %v2060
        %v2388 = vunpack.c.l.b16 %v2061
        %v2389 = vunpack.c.h.b16 %v2061
        %v2390 = vunpack.c.l.b16 %v2062
        %v2391 = vunpack.c.h.b16 %v2062
        %v2392 = vunpack.c.l.b16 %v2063
        %v2393 = vunpack.c.h.b16 %v2063
        %v2394 = vunpack.c.l.b16 %v2064
        %v2395 = vunpack.c.h.b16 %v2064
        %v2396 = vunpack.c.l.b16 %v2065
        %v2397 = vunpack.c.h.b16 %v2065
        %v2398 = vunpack.c.l.b16 %v2066
        %v2399 = vunpack.c.h.b16 %v2066
        %v2400 = vunpack.c.l.b16 %v2067
        %v2401 = vunpack.c.h.b16 %v2067
        %v2402 = vunpack.c.l.b16 %v2068
        %v2403 = vunpack.c.h.b16 %v2068
        %v2404 = vunpack.c.l.b16 %v2069
        %v2405 = vunpack.c.h.b16 %v2069
        %v2406 = vunpack.c.l.b16 %v2070
        %v2407 = vunpack.c.h.b16 %v2070
        %v2408 = vunpack.c.l.b16 %v2071
        %v2409 = vunpack.c.h.b16 %v2071
        %v2410 = vunpack.c.l.b16 %v2072
        %v2411 = vunpack.c.h.b16 %v2072
        %v2412 = vunpack.c.l.b16 %v2073
        %v2413 = vunpack.c.h.b16 %v2073
        %v2414 = vunpack.c.l.b16 %v2074
        %v2415 = vunpack.c.h.b16 %v2074
        %v2416 = vunpack.c.l.b16 %v2075
        %v2417 = vunpack.c.h.b16 %v2075
        %v2418 = vunpack.c.l.b16 %v2076
        %v2419 = vunpack.c.h.b16 %v2076
        %v2420 = vunpack.c.l.b16 %v2077
        %v2421 = vunpack.c.h.b16 %v2077
        %v2422 = vunpack.c.l.b16 %v2078
        %v2423 = vunpack.c.h.b16 %v2078
        %v2424 = vunpack.c.l.b16 %v2079
        %v2425 = vunpack.c.h.b16 %v2079
        %v2426 = vunpack.c.l.b16 %v2080
        %v2427 = vunpack.c.h.b16 %v2080
        %v2428 = vunpack.c.l.b16 %v2081
        %v2429 = vunpack.c.h.b16 %v2081
        %v2430 = vunpack.c.l.b16 %v2082
        %v2431 = vunpack.c.h.b16 %v2082
        %v2432 = vunpack.c.l.b16 %v2083
        %v2433 = vunpack.c.h.b16 %v2083
        %v2434 = vunpack.c.l.b16 %v2084
        %v2435 = vunpack.c.h.b16 %v2084
        %v2436 = vunpack.c.l.b16 %v2085
        %v2437 = vunpack.c.h.b16 %v2085
        %v2438 = vunpack.c.l.b16 %v2086
        %v2439 = vunpack.c.h.b16 %v2086
        %v2440 = vunpack.c.l.b16 %v2087
        %v2441 = vunpack.c.h.b16 %v2087
        %v2442 = vunpack.c.l.b16 %v2088
        %v2443 = vunpack.c.h.b16 %v2088
        %v2444 = vunpack.c.l.b16 %v2089
        %v2445 = vunpack.c.h.b16 %v2089
        %v2446 = vunpack.c.l.b16 %v2090
        %v2447 = vunpack.c.h.b16 %v2090
        %v2448 = vunpack.c.l.b16 %v2091
        %v2449 = vunpack.c.h.b16 %v2091
        %v2450 = vunpack.c.l.b16 %v2092
        %v2451 = vunpack.c.h.b16 %v2092
        %v2452 = vunpack.c.l.b16 %v2093
        %v2453 = vunpack.c.h.b16 %v2093
        %v2454 = vunpack.c.l.b16 %v2094
        %v2455 = vunpack.c.h.b16 %v2094
        %v2456 = vunpack.c.l.b16 %v2095
        %v2457 = vunpack.c.h.b16 %v2095
        %v2458 = vunpack.c.l.b16 %v2096
        %v2459 = vunpack.c.h.b16 %v2096
        %v2460 = vunpack.c.l.b16 %v2097
        %v2461 = vunpack.c.h.b16 %v2097
        %v2462 = vunpack.c.l.b16 %v2098
        %v2463 = vunpack.c.h.b16 %v2098
        %v2464 = vunpack.c.l.b16 %v2099
        %v2465 = vunpack.c.h.b16 %v2099
        %v2466 = vunpack.c.l.b16 %v2100
        %v2467 = vunpack.c.h.b16 %v2100
        %v2468 = vunpack.c.l.b16 %v2101
        %v2469 = vunpack.c.h.b16 %v2101
        %v2470 = vunpack.c.l.b16 %v2102
        %v2471 = vunpack.c.h.b16 %v2102
        %v2472 = vunpack.c.l.b16 %v2103
        %v2473 = vunpack.c.h.b16 %v2103
        %v2474 = vunpack.c.l.b16 %v2104
        %v2475 = vunpack.c.h.b16 %v2104
        %v2476 = vunpack.c.l.b16 %v2105
        %v2477 = vunpack.c.h.b16 %v2105
        %v2478 = vunpack.c.l.b16 %v2106
        %v2479 = vunpack.c.h.b16 %v2106
        %v2480 = vunpack.c.l.b16 %v2107
        %v2481 = vunpack.c.h.b16 %v2107
        %v2482 = vunpack.c.l.b16 %v2108
        %v2483 = vunpack.c.h.b16 %v2108
        %v2484 = vunpack.c.l.b16 %v2109
        %v2485 = vunpack.c.h.b16 %v2109
        %v2486 = vunpack.c.l.b16 %v2110
        %v2487 = vunpack.c.h.b16 %v2110
        %v2488 = vunpack.c.l.b16 %v2111
        %v2489 = vunpack.c.h.b16 %v2111
        %v2490 = vunpack.c.l.b16 %v2112
        %v2491 = vunpack.c.h.b16 %v2112
        %v2492 = vunpack.c.l.b16 %v2113
        %v2493 = vunpack.c.h.b16 %v2113
        %v2494 = vunpack.c.l.b16 %v2114
        %v2495 = vunpack.c.h.b16 %v2114
        %v2496 = vunpack.c.l.b16 %v2115
        %v2497 = vunpack.c.h.b16 %v2115
        %v2498 = vunpack.c.l.b16 %v2116
        %v2499 = vunpack.c.h.b16 %v2116
        %v2500 = vunpack.c.l.b16 %v2117
        %v2501 = vunpack.c.h.b16 %v2117
        %v2502 = vunpack.c.l.b16 %v2118
        %v2503 = vunpack.c.h.b16 %v2118
        %v2504 = vunpack.c.l.b16 %v2119
        %v2505 = vunpack.c.h.b16 %v2119
        %v2506 = vunpack.c.l.b16 %v2120
        %v2507 = vunpack.c.h.b16 %v2120
        %v2508 = vunpack.c.l.b16 %v2121
        %v2509 = vunpack.c.h.b16 %v2121
        %v2510 = vunpack.c.l.b16 %v2122
        %v2511 = vunpack.c.h.b16 %v2122
        %v2512 = vunpack.c.l.b16 %v2123
        %v2513 = vunpack.c.h.b16 %v2123
        %v2514 = vunpack.c.l.b16 %v2124
        %v2515 = vunpack.c.h.b16 %v2124
        %v2516 = vunpack.c.l.b16 %v2125
        %v2517 = vunpack.c.h.b16 %v2125
        %v2518 = vunpack.c.l.b16 %v2126
        %v2519 = vunpack.c.h.b16 %v2126
        %v2520 = vunpack.c.l.b16 %v2127
        %v2521 = vunpack.c.h.b16 %v2127
        %v2522 = vpack.c.b16 %v2270, %v2266
        %v2523 = vpack.c.b16 %v2271, %v2267
        %v2524 = vpack.c.b16 %v2272, %v2268
        %v2525 = vpack.c.b16 %v2273, %v2269
        %v2526 = vpack.c.b16 %v2278, %v2274
        %v2527 = vpack.c.b16 %v2279, %v2275
        %v2528 = vpack.c.b16 %v2280, %v2276
        %v2529 = vpack.c.b16 %v2281, %v2277
        %v2530 = vpack.c.b16 %v2286, %v2282
        %v2531 = vpack.c.b16 %v2287, %v2283
        %v2532 = vpack.c.b16 %v2288, %v2284
        %v2533 = vpack.c.b16 %v2289, %v2285
        %v2534 = vpack.c.b16 %v2294, %v2290
        %v2535 = vpack.c.b16 %v2295, %v2291
        %v2536 = vpack.c.b16 %v2296, %v2292
        %v2537 = vpack.c.b16 %v2297, %v2293
        %v2538 = vpack.c.b16 %v2302, %v2298
        %v2539 = vpack.c.b16 %v2303, %v2299
        %v2540 = vpack.c.b16 %v2304, %v2300
        %v2541 = vpack.c.b16 %v2305, %v2301
        %v2542 = vpack.c.b16 %v2310, %v2306
        %v2543 = vpack.c.b16 %v2311, %v2307
        %v2544 = vpack.c.b16 %v2312, %v2308
        %v2545 = vpack.c.b16 %v2313, %v2309
        %v2546 = vpack.c.b16 %v2318, %v2314
        %v2547 = vpack.c.b16 %v2319, %v2315
        %v2548 = vpack.c.b16 %v2320, %v2316
        %v2549 = vpack.c.b16 %v2321, %v2317
        %v2550 = vpack.c.b16 %v2326, %v2322
        %v2551 = vpack.c.b16 %v2327, %v2323
        %v2552 = vpack.c.b16 %v2328, %v2324
        %v2553 = vpack.c.b16 %v2329, %v2325
        %v2554 = vpack.c.b16 %v2334, %v2330
        %v2555 = vpack.c.b16 %v2335, %v2331
        %v2556 = vpack.c.b16 %v2336, %v2332
        %v2557 = vpack.c.b16 %v2337, %v2333
        %v2558 = vpack.c.b16 %v2342, %v2338
        %v2559 = vpack.c.b16 %v2343, %v2339
        %v2560 = vpack.c.b16 %v2344, %v2340
        %v2561 = vpack.c.b16 %v2345, %v2341
        %v2562 = vpack.c.b16 %v2350, %v2346
        %v2563 = vpack.c.b16 %v2351, %v2347
        %v2564 = vpack.c.b16 %v2352, %v2348
        %v2565 = vpack.c.b16 %v2353, %v2349
        %v2566 = vpack.c.b16 %v2358, %v2354
        %v2567 = vpack.c.b16 %v2359, %v2355
        %v2568 = vpack.c.b16 %v2360, %v2356
        %v2569 = vpack.c.b16 %v2361, %v2357
        %v2570 = vpack.c.b16 %v2366, %v2362
        %v2571 = vpack.c.b16 %v2367, %v2363
        %v2572 = vpack.c.b16 %v2368, %v2364
        %v2573 = vpack.c.b16 %v2369, %v2365
        %v2574 = vpack.c.b16 %v2374, %v2370
        %v2575 = vpack.c.b16 %v2375, %v2371
        %v2576 = vpack.c.b16 %v2376, %v2372
        %v2577 = vpack.c.b16 %v2377, %v2373
        %v2578 = vpack.c.b16 %v2382, %v2378
        %v2579 = vpack.c.b16 %v2383, %v2379
        %v2580 = vpack.c.b16 %v2384, %v2380
        %v2581 = vpack.c.b16 %v2385, %v2381
        %v2582 = vpack.c.b16 %v2390, %v2386
        %v2583 = vpack.c.b16 %v2391, %v2387
        %v2584 = vpack.c.b16 %v2392, %v2388
        %v2585 = vpack.c.b16 %v2393, %v2389
        %v2586 = vpack.c.b16 %v2398, %v2394
        %v2587 = vpack.c.b16 %v2399, %v2395
        %v2588 = vpack.c.b16 %v2400, %v2396
        %v2589 = vpack.c.b16 %v2401, %v2397
        %v2590 = vpack.c.b16 %v2406, %v2402
        %v2591 = vpack.c.b16 %v2407, %v2403
        %v2592 = vpack.c.b16 %v2408, %v2404
        %v2593 = vpack.c.b16 %v2409, %v2405
        %v2594 = vpack.c.b16 %v2414, %v2410
        %v2595 = vpack.c.b16 %v2415, %v2411
        %v2596 = vpack.c.b16 %v2416, %v2412
        %v2597 = vpack.c.b16 %v2417, %v2413
        %v2598 = vpack.c.b16 %v2422, %v2418
        %v2599 = vpack.c.b16 %v2423, %v2419
        %v2600 = vpack.c.b16 %v2424, %v2420
        %v2601 = vpack.c.b16 %v2425, %v2421
        %v2602 = vpack.c.b16 %v2430, %v2426
        %v2603 = vpack.c.b16 %v2431, %v2427
        %v2604 = vpack.c.b16 %v2432, %v2428
        %v2605 = vpack.c.b16 %v2433, %v2429
        %v2606 = vpack.c.b16 %v2438, %v2434
        %v2607 = vpack.c.b16 %v2439, %v2435
        %v2608 = vpack.c.b16 %v2440, %v2436
        %v2609 = vpack.c.b16 %v2441, %v2437
        %v2610 = vpack.c.b16 %v2446, %v2442
        %v2611 = vpack.c.b16 %v2447, %v2443
        %v2612 = vpack.c.b16 %v2448, %v2444
        %v2613 = vpack.c.b16 %v2449, %v2445
        %v2614 = vpack.c.b16 %v2454, %v2450
        %v2615 = vpack.c.b16 %v2455, %v2451
        %v2616 = vpack.c.b16 %v2456, %v2452
        %v2617 = vpack.c.b16 %v2457, %v2453
        %v2618 = vpack.c.b16 %v2462, %v2458
        %v2619 = vpack.c.b16 %v2463, %v2459
        %v2620 = vpack.c.b16 %v2464, %v2460
        %v2621 = vpack.c.b16 %v2465, %v2461
        %v2622 = vpack.c.b16 %v2470, %v2466
        %v2623 = vpack.c.b16 %v2471, %v2467
        %v2624 = vpack.c.b16 %v2472, %v2468
        %v2625 = vpack.c.b16 %v2473, %v2469
        %v2626 = vpack.c.b16 %v2478, %v2474
        %v2627 = vpack.c.b16 %v2479, %v2475
        %v2628 = vpack.c.b16 %v2480, %v2476
        %v2629 = vpack.c.b16 %v2481, %v2477
        %v2630 = vpack.c.b16 %v2486, %v2482
        %v2631 = vpack.c.b16 %v2487, %v2483
        %v2632 = vpack.c.b16 %v2488, %v2484
        %v2633 = vpack.c.b16 %v2489, %v2485
        %v2634 = vpack.c.b16 %v2494, %v2490
        %v2635 = vpack.c.b16 %v2495, %v2491
        %v2636 = vpack.c.b16 %v2496, %v2492
        %v2637 = vpack.c.b16 %v2497, %v2493
        %v2638 = vpack.c.b16 %v2502, %v2498
        %v2639 = vpack.c.b16 %v2503, %v2499
        %v2640 = vpack.c.b16 %v2504, %v2500
        %v2641 = vpack.c.b16 %v2505, %v2501
        %v2642 = vpack.c.b16 %v2510, %v2506
        %v2643 = vpack.c.b16 %v2511, %v2507
        %v2644 = vpack.c.b16 %v2512, %v2508
        %v2645 = vpack.c.b16 %v2513, %v2509
        %v2646 = vpack.c.b16 %v2518, %v2514
        %v2647 = vpack.c.b16 %v2519, %v2515
        %v2648 = vpack.c.b16 %v2520, %v2516
        %v2649 = vpack.c.b16 %v2521, %v2517
        %2778 = vmatpush.bf16.msra.mxu0 %v2550
        %2779 = vmatpush.bf16.msra.mxu0 %v2546
        %2780 = vmatpush.bf16.msra.mxu0 %v2542
        %2781 = vmatpush.bf16.msra.mxu0 %v2538
        %2782 = vmatpush.bf16.msra.mxu0 %v2534
        %2783 = vmatpush.bf16.msra.mxu0 %v2530
        %2784 = vmatpush.bf16.msra.mxu0 %v2526
        %2785 = vmatpush.bf16.msra.mxu0 %v2522
        %2786 = vmatmul.bf16.gmra.mxu0 %v1968
        %v2787 = vpop.f32.mrf.mxu0
        %v2788 = vadd.f32 %v2130, %v2787
        %v2789 = vpop.f32.mrf.mxu0
        %v2790 = vadd.f32 %v2130, %v2789
        %2791 = vmatmul.bf16.gmra.mxu0 %v1972
        %v2792 = vpop.f32.mrf.mxu0
        %v2793 = vadd.f32 %v2130, %v2792
        %v2794 = vpop.f32.mrf.mxu0
        %v2795 = vadd.f32 %v2130, %v2794
        %2796 = vmatmul.bf16.gmra.mxu0 %v1976
        %v2797 = vpop.f32.mrf.mxu0
        %v2798 = vadd.f32 %v2130, %v2797
        %v2799 = vpop.f32.mrf.mxu0
        %v2800 = vadd.f32 %v2130, %v2799
        %2801 = vmatmul.bf16.gmra.mxu0 %v1980
        %v2802 = vpop.f32.mrf.mxu0
        %v2803 = vadd.f32 %v2130, %v2802
        %v2804 = vpop.f32.mrf.mxu0
        %v2805 = vadd.f32 %v2130, %v2804
        %2806 = vmatmul.bf16.gmra.mxu0 %v1984
        %v2807 = vpop.f32.mrf.mxu0
        %v2808 = vadd.f32 %v2130, %v2807
        %v2809 = vpop.f32.mrf.mxu0
        %v2810 = vadd.f32 %v2130, %v2809
        %2811 = vmatmul.bf16.gmra.mxu0 %v1988
        %v2812 = vpop.f32.mrf.mxu0
        %v2813 = vadd.f32 %v2130, %v2812
        %v2814 = vpop.f32.mrf.mxu0
        %v2815 = vadd.f32 %v2130, %v2814
        %2816 = vmatmul.bf16.gmra.mxu0 %v1992
        %v2817 = vpop.f32.mrf.mxu0
        %v2818 = vadd.f32 %v2130, %v2817
        %v2819 = vpop.f32.mrf.mxu0
        %v2820 = vadd.f32 %v2130, %v2819
        %2821 = vmatmul.bf16.gmra.mxu0 %v1996
        %v2822 = vpop.f32.mrf.mxu0
        %v2823 = vadd.f32 %v2130, %v2822
        %v2824 = vpop.f32.mrf.mxu0
        %v2825 = vadd.f32 %v2130, %v2824
        %2826 = vdwg.mxu0
        %2827 = vmatpush.bf16.msra.mxu0 %v2582
        %2828 = vmatpush.bf16.msra.mxu0 %v2578
        %2829 = vmatpush.bf16.msra.mxu0 %v2574
        %2830 = vmatpush.bf16.msra.mxu0 %v2570
        %2831 = vmatpush.bf16.msra.mxu0 %v2566
        %2832 = vmatpush.bf16.msra.mxu0 %v2562
        %2833 = vmatpush.bf16.msra.mxu0 %v2558
        %2834 = vmatpush.bf16.msra.mxu0 %v2554
        %2835 = vmatmul.bf16.gmra.mxu0 %v1969
        %v2836 = vpop.f32.mrf.mxu0
        %v2837 = vadd.f32 %v2788, %v2836
        %v2838 = vpop.f32.mrf.mxu0
        %v2839 = vadd.f32 %v2790, %v2838
        %2840 = vmatmul.bf16.gmra.mxu0 %v1973
        %v2841 = vpop.f32.mrf.mxu0
        %v2842 = vadd.f32 %v2793, %v2841
        %v2843 = vpop.f32.mrf.mxu0
        %v2844 = vadd.f32 %v2795, %v2843
        %2845 = vmatmul.bf16.gmra.mxu0 %v1977
        %v2846 = vpop.f32.mrf.mxu0
        %v2847 = vadd.f32 %v2798, %v2846
        %v2848 = vpop.f32.mrf.mxu0
        %v2849 = vadd.f32 %v2800, %v2848
        %2850 = vmatmul.bf16.gmra.mxu0 %v1981
        %v2851 = vpop.f32.mrf.mxu0
        %v2852 = vadd.f32 %v2803, %v2851
        %v2853 = vpop.f32.mrf.mxu0
        %v2854 = vadd.f32 %v2805, %v2853
        %2855 = vmatmul.bf16.gmra.mxu0 %v1985
        %v2856 = vpop.f32.mrf.mxu0
        %v2857 = vadd.f32 %v2808, %v2856
        %v2858 = vpop.f32.mrf.mxu0
        %v2859 = vadd.f32 %v2810, %v2858
        %2860 = vmatmul.bf16.gmra.mxu0 %v1989
        %v2861 = vpop.f32.mrf.mxu0
        %v2862 = vadd.f32 %v2813, %v2861
        %v2863 = vpop.f32.mrf.mxu0
        %v2864 = vadd.f32 %v2815, %v2863
        %2865 = vmatmul.bf16.gmra.mxu0 %v1993
        %v2866 = vpop.f32.mrf.mxu0
        %v2867 = vadd.f32 %v2818, %v2866
        %v2868 = vpop.f32.mrf.mxu0
        %v2869 = vadd.f32 %v2820, %v2868
        %2870 = vmatmul.bf16.gmra.mxu0 %v1997
        %v2871 = vpop.f32.mrf.mxu0
        %v2872 = vadd.f32 %v2823, %v2871
        %v2873 = vpop.f32.mrf.mxu0
        %v2874 = vadd.f32 %v2825, %v2873
        %2875 = vdwg.mxu0
        %2876 = vmatpush.bf16.msra.mxu0 %v2614
        %2877 = vmatpush.bf16.msra.mxu0 %v2610
        %2878 = vmatpush.bf16.msra.mxu0 %v2606
        %2879 = vmatpush.bf16.msra.mxu0 %v2602
        %2880 = vmatpush.bf16.msra.mxu0 %v2598
        %2881 = vmatpush.bf16.msra.mxu0 %v2594
        %2882 = vmatpush.bf16.msra.mxu0 %v2590
        %2883 = vmatpush.bf16.msra.mxu0 %v2586
        %2884 = vmatmul.bf16.gmra.mxu0 %v1970
        %v2885 = vpop.f32.mrf.mxu0
        %v2886 = vadd.f32 %v2837, %v2885
        %v2887 = vpop.f32.mrf.mxu0
        %v2888 = vadd.f32 %v2839, %v2887
        %2889 = vmatmul.bf16.gmra.mxu0 %v1974
        %v2890 = vpop.f32.mrf.mxu0
        %v2891 = vadd.f32 %v2842, %v2890
        %v2892 = vpop.f32.mrf.mxu0
        %v2893 = vadd.f32 %v2844, %v2892
        %2894 = vmatmul.bf16.gmra.mxu0 %v1978
        %v2895 = vpop.f32.mrf.mxu0
        %v2896 = vadd.f32 %v2847, %v2895
        %v2897 = vpop.f32.mrf.mxu0
        %v2898 = vadd.f32 %v2849, %v2897
        %2899 = vmatmul.bf16.gmra.mxu0 %v1982
        %v2900 = vpop.f32.mrf.mxu0
        %v2901 = vadd.f32 %v2852, %v2900
        %v2902 = vpop.f32.mrf.mxu0
        %v2903 = vadd.f32 %v2854, %v2902
        %2904 = vmatmul.bf16.gmra.mxu0 %v1986
        %v2905 = vpop.f32.mrf.mxu0
        %v2906 = vadd.f32 %v2857, %v2905
        %v2907 = vpop.f32.mrf.mxu0
        %v2908 = vadd.f32 %v2859, %v2907
        %2909 = vmatmul.bf16.gmra.mxu0 %v1990
        %v2910 = vpop.f32.mrf.mxu0
        %v2911 = vadd.f32 %v2862, %v2910
        %v2912 = vpop.f32.mrf.mxu0
        %v2913 = vadd.f32 %v2864, %v2912
        %2914 = vmatmul.bf16.gmra.mxu0 %v1994
        %v2915 = vpop.f32.mrf.mxu0
        %v2916 = vadd.f32 %v2867, %v2915
        %v2917 = vpop.f32.mrf.mxu0
        %v2918 = vadd.f32 %v2869, %v2917
        %2919 = vmatmul.bf16.gmra.mxu0 %v1998
        %v2920 = vpop.f32.mrf.mxu0
        %v2921 = vadd.f32 %v2872, %v2920
        %v2922 = vpop.f32.mrf.mxu0
        %v2923 = vadd.f32 %v2874, %v2922
        %2924 = vdwg.mxu0
        %2925 = vmatpush.bf16.msra.mxu0 %v2646
        %2926 = vmatpush.bf16.msra.mxu0 %v2642
        %2927 = vmatpush.bf16.msra.mxu0 %v2638
        %2928 = vmatpush.bf16.msra.mxu0 %v2634
        %2929 = vmatpush.bf16.msra.mxu0 %v2630
        %2930 = vmatpush.bf16.msra.mxu0 %v2626
        %2931 = vmatpush.bf16.msra.mxu0 %v2622
        %2932 = vmatpush.bf16.msra.mxu0 %v2618
        %2933 = vmatmul.bf16.gmra.mxu0 %v1971
        %v2934 = vpop.f32.mrf.mxu0
        %v2935 = vadd.f32 %v2886, %v2934
        %v2936 = vpop.f32.mrf.mxu0
        %v2937 = vadd.f32 %v2888, %v2936
        %2938 = vmatmul.bf16.gmra.mxu0 %v1975
        %v2939 = vpop.f32.mrf.mxu0
        %v2940 = vadd.f32 %v2891, %v2939
        %v2941 = vpop.f32.mrf.mxu0
        %v2942 = vadd.f32 %v2893, %v2941
        %2943 = vmatmul.bf16.gmra.mxu0 %v1979
        %v2944 = vpop.f32.mrf.mxu0
        %v2945 = vadd.f32 %v2896, %v2944
        %v2946 = vpop.f32.mrf.mxu0
        %v2947 = vadd.f32 %v2898, %v2946
        %2948 = vmatmul.bf16.gmra.mxu0 %v1983
        %v2949 = vpop.f32.mrf.mxu0
        %v2950 = vadd.f32 %v2901, %v2949
        %v2951 = vpop.f32.mrf.mxu0
        %v2952 = vadd.f32 %v2903, %v2951
        %2953 = vmatmul.bf16.gmra.mxu0 %v1987
        %v2954 = vpop.f32.mrf.mxu0
        %v2955 = vadd.f32 %v2906, %v2954
        %v2956 = vpop.f32.mrf.mxu0
        %v2957 = vadd.f32 %v2908, %v2956
        %2958 = vmatmul.bf16.gmra.mxu0 %v1991
        %v2959 = vpop.f32.mrf.mxu0
        %v2960 = vadd.f32 %v2911, %v2959
        %v2961 = vpop.f32.mrf.mxu0
        %v2962 = vadd.f32 %v2913, %v2961
        %2963 = vmatmul.bf16.gmra.mxu0 %v1995
        %v2964 = vpop.f32.mrf.mxu0
        %v2965 = vadd.f32 %v2916, %v2964
        %v2966 = vpop.f32.mrf.mxu0
        %v2967 = vadd.f32 %v2918, %v2966
        %2968 = vmatmul.bf16.gmra.mxu0 %v1999
        %v2969 = vpop.f32.mrf.mxu0
        %v2970 = vadd.f32 %v2921, %v2969
        %v2971 = vpop.f32.mrf.mxu0
        %v2972 = vadd.f32 %v2923, %v2971
        %2973 = vdwg.mxu0
        %2974 = vmatpush.bf16.msra.mxu0 %v2551
        %2975 = vmatpush.bf16.msra.mxu0 %v2547
        %2976 = vmatpush.bf16.msra.mxu0 %v2543
        %2977 = vmatpush.bf16.msra.mxu0 %v2539
        %2978 = vmatpush.bf16.msra.mxu0 %v2535
        %2979 = vmatpush.bf16.msra.mxu0 %v2531
        %2980 = vmatpush.bf16.msra.mxu0 %v2527
        %2981 = vmatpush.bf16.msra.mxu0 %v2523
        %2982 = vmatmul.bf16.gmra.mxu0 %v1968
        %v2983 = vpop.f32.mrf.mxu0
        %v2984 = vadd.f32 %v2131, %v2983
        %v2985 = vpop.f32.mrf.mxu0
        %v2986 = vadd.f32 %v2131, %v2985
        %2987 = vmatmul.bf16.gmra.mxu0 %v1972
        %v2988 = vpop.f32.mrf.mxu0
        %v2989 = vadd.f32 %v2131, %v2988
        %v2990 = vpop.f32.mrf.mxu0
        %v2991 = vadd.f32 %v2131, %v2990
        %2992 = vmatmul.bf16.gmra.mxu0 %v1976
        %v2993 = vpop.f32.mrf.mxu0
        %v2994 = vadd.f32 %v2131, %v2993
        %v2995 = vpop.f32.mrf.mxu0
        %v2996 = vadd.f32 %v2131, %v2995
        %2997 = vmatmul.bf16.gmra.mxu0 %v1980
        %v2998 = vpop.f32.mrf.mxu0
        %v2999 = vadd.f32 %v2131, %v2998
        %v3000 = vpop.f32.mrf.mxu0
        %v3001 = vadd.f32 %v2131, %v3000
        %3002 = vmatmul.bf16.gmra.mxu0 %v1984
        %v3003 = vpop.f32.mrf.mxu0
        %v3004 = vadd.f32 %v2131, %v3003
        %v3005 = vpop.f32.mrf.mxu0
        %v3006 = vadd.f32 %v2131, %v3005
        %3007 = vmatmul.bf16.gmra.mxu0 %v1988
        %v3008 = vpop.f32.mrf.mxu0
        %v3009 = vadd.f32 %v2131, %v3008
        %v3010 = vpop.f32.mrf.mxu0
        %v3011 = vadd.f32 %v2131, %v3010
        %3012 = vmatmul.bf16.gmra.mxu0 %v1992
        %v3013 = vpop.f32.mrf.mxu0
        %v3014 = vadd.f32 %v2131, %v3013
        %v3015 = vpop.f32.mrf.mxu0
        %v3016 = vadd.f32 %v2131, %v3015
        %3017 = vmatmul.bf16.gmra.mxu0 %v1996
        %v3018 = vpop.f32.mrf.mxu0
        %v3019 = vadd.f32 %v2131, %v3018
        %v3020 = vpop.f32.mrf.mxu0
        %v3021 = vadd.f32 %v2131, %v3020
        %3022 = vdwg.mxu0
        %3023 = vmatpush.bf16.msra.mxu0 %v2583
        %3024 = vmatpush.bf16.msra.mxu0 %v2579
        %3025 = vmatpush.bf16.msra.mxu0 %v2575
        %3026 = vmatpush.bf16.msra.mxu0 %v2571
        %3027 = vmatpush.bf16.msra.mxu0 %v2567
        %3028 = vmatpush.bf16.msra.mxu0 %v2563
        %3029 = vmatpush.bf16.msra.mxu0 %v2559
        %3030 = vmatpush.bf16.msra.mxu0 %v2555
        %3031 = vmatmul.bf16.gmra.mxu0 %v1969
        %v3032 = vpop.f32.mrf.mxu0
        %v3033 = vadd.f32 %v2984, %v3032
        %v3034 = vpop.f32.mrf.mxu0
        %v3035 = vadd.f32 %v2986, %v3034
        %3036 = vmatmul.bf16.gmra.mxu0 %v1973
        %v3037 = vpop.f32.mrf.mxu0
        %v3038 = vadd.f32 %v2989, %v3037
        %v3039 = vpop.f32.mrf.mxu0
        %v3040 = vadd.f32 %v2991, %v3039
        %3041 = vmatmul.bf16.gmra.mxu0 %v1977
        %v3042 = vpop.f32.mrf.mxu0
        %v3043 = vadd.f32 %v2994, %v3042
        %v3044 = vpop.f32.mrf.mxu0
        %v3045 = vadd.f32 %v2996, %v3044
        %3046 = vmatmul.bf16.gmra.mxu0 %v1981
        %v3047 = vpop.f32.mrf.mxu0
        %v3048 = vadd.f32 %v2999, %v3047
        %v3049 = vpop.f32.mrf.mxu0
        %v3050 = vadd.f32 %v3001, %v3049
        %3051 = vmatmul.bf16.gmra.mxu0 %v1985
        %v3052 = vpop.f32.mrf.mxu0
        %v3053 = vadd.f32 %v3004, %v3052
        %v3054 = vpop.f32.mrf.mxu0
        %v3055 = vadd.f32 %v3006, %v3054
        %3056 = vmatmul.bf16.gmra.mxu0 %v1989
        %v3057 = vpop.f32.mrf.mxu0
        %v3058 = vadd.f32 %v3009, %v3057
        %v3059 = vpop.f32.mrf.mxu0
        %v3060 = vadd.f32 %v3011, %v3059
        %3061 = vmatmul.bf16.gmra.mxu0 %v1993
        %v3062 = vpop.f32.mrf.mxu0
        %v3063 = vadd.f32 %v3014, %v3062
        %v3064 = vpop.f32.mrf.mxu0
        %v3065 = vadd.f32 %v3016, %v3064
        %3066 = vmatmul.bf16.gmra.mxu0 %v1997
        %v3067 = vpop.f32.mrf.mxu0
        %v3068 = vadd.f32 %v3019, %v3067
        %v3069 = vpop.f32.mrf.mxu0
        %v3070 = vadd.f32 %v3021, %v3069
        %3071 = vdwg.mxu0
        %3072 = vmatpush.bf16.msra.mxu0 %v2615
        %3073 = vmatpush.bf16.msra.mxu0 %v2611
        %3074 = vmatpush.bf16.msra.mxu0 %v2607
        %3075 = vmatpush.bf16.msra.mxu0 %v2603
        %3076 = vmatpush.bf16.msra.mxu0 %v2599
        %3077 = vmatpush.bf16.msra.mxu0 %v2595
        %3078 = vmatpush.bf16.msra.mxu0 %v2591
        %3079 = vmatpush.bf16.msra.mxu0 %v2587
        %3080 = vmatmul.bf16.gmra.mxu0 %v1970
        %v3081 = vpop.f32.mrf.mxu0
        %v3082 = vadd.f32 %v3033, %v3081
        %v3083 = vpop.f32.mrf.mxu0
        %v3084 = vadd.f32 %v3035, %v3083
        %3085 = vmatmul.bf16.gmra.mxu0 %v1974
        %v3086 = vpop.f32.mrf.mxu0
        %v3087 = vadd.f32 %v3038, %v3086
        %v3088 = vpop.f32.mrf.mxu0
        %v3089 = vadd.f32 %v3040, %v3088
        %3090 = vmatmul.bf16.gmra.mxu0 %v1978
        %v3091 = vpop.f32.mrf.mxu0
        %v3092 = vadd.f32 %v3043, %v3091
        %v3093 = vpop.f32.mrf.mxu0
        %v3094 = vadd.f32 %v3045, %v3093
        %3095 = vmatmul.bf16.gmra.mxu0 %v1982
        %v3096 = vpop.f32.mrf.mxu0
        %v3097 = vadd.f32 %v3048, %v3096
        %v3098 = vpop.f32.mrf.mxu0
        %v3099 = vadd.f32 %v3050, %v3098
        %3100 = vmatmul.bf16.gmra.mxu0 %v1986
        %v3101 = vpop.f32.mrf.mxu0
        %v3102 = vadd.f32 %v3053, %v3101
        %v3103 = vpop.f32.mrf.mxu0
        %v3104 = vadd.f32 %v3055, %v3103
        %3105 = vmatmul.bf16.gmra.mxu0 %v1990
        %v3106 = vpop.f32.mrf.mxu0
        %v3107 = vadd.f32 %v3058, %v3106
        %v3108 = vpop.f32.mrf.mxu0
        %v3109 = vadd.f32 %v3060, %v3108
        %3110 = vmatmul.bf16.gmra.mxu0 %v1994
        %v3111 = vpop.f32.mrf.mxu0
        %v3112 = vadd.f32 %v3063, %v3111
        %v3113 = vpop.f32.mrf.mxu0
        %v3114 = vadd.f32 %v3065, %v3113
        %3115 = vmatmul.bf16.gmra.mxu0 %v1998
        %v3116 = vpop.f32.mrf.mxu0
        %v3117 = vadd.f32 %v3068, %v3116
        %v3118 = vpop.f32.mrf.mxu0
        %v3119 = vadd.f32 %v3070, %v3118
        %3120 = vdwg.mxu0
        %3121 = vmatpush.bf16.msra.mxu0 %v2647
        %3122 = vmatpush.bf16.msra.mxu0 %v2643
        %3123 = vmatpush.bf16.msra.mxu0 %v2639
        %3124 = vmatpush.bf16.msra.mxu0 %v2635
        %3125 = vmatpush.bf16.msra.mxu0 %v2631
        %3126 = vmatpush.bf16.msra.mxu0 %v2627
        %3127 = vmatpush.bf16.msra.mxu0 %v2623
        %3128 = vmatpush.bf16.msra.mxu0 %v2619
        %3129 = vmatmul.bf16.gmra.mxu0 %v1971
        %v3130 = vpop.f32.mrf.mxu0
        %v3131 = vadd.f32 %v3082, %v3130
        %v3132 = vpop.f32.mrf.mxu0
        %v3133 = vadd.f32 %v3084, %v3132
        %3134 = vmatmul.bf16.gmra.mxu0 %v1975
        %v3135 = vpop.f32.mrf.mxu0
        %v3136 = vadd.f32 %v3087, %v3135
        %v3137 = vpop.f32.mrf.mxu0
        %v3138 = vadd.f32 %v3089, %v3137
        %3139 = vmatmul.bf16.gmra.mxu0 %v1979
        %v3140 = vpop.f32.mrf.mxu0
        %v3141 = vadd.f32 %v3092, %v3140
        %v3142 = vpop.f32.mrf.mxu0
        %v3143 = vadd.f32 %v3094, %v3142
        %3144 = vmatmul.bf16.gmra.mxu0 %v1983
        %v3145 = vpop.f32.mrf.mxu0
        %v3146 = vadd.f32 %v3097, %v3145
        %v3147 = vpop.f32.mrf.mxu0
        %v3148 = vadd.f32 %v3099, %v3147
        %3149 = vmatmul.bf16.gmra.mxu0 %v1987
        %v3150 = vpop.f32.mrf.mxu0
        %v3151 = vadd.f32 %v3102, %v3150
        %v3152 = vpop.f32.mrf.mxu0
        %v3153 = vadd.f32 %v3104, %v3152
        %3154 = vmatmul.bf16.gmra.mxu0 %v1991
        %v3155 = vpop.f32.mrf.mxu0
        %v3156 = vadd.f32 %v3107, %v3155
        %v3157 = vpop.f32.mrf.mxu0
        %v3158 = vadd.f32 %v3109, %v3157
        %3159 = vmatmul.bf16.gmra.mxu0 %v1995
        %v3160 = vpop.f32.mrf.mxu0
        %v3161 = vadd.f32 %v3112, %v3160
        %v3162 = vpop.f32.mrf.mxu0
        %v3163 = vadd.f32 %v3114, %v3162
        %3164 = vmatmul.bf16.gmra.mxu0 %v1999
        %v3165 = vpop.f32.mrf.mxu0
        %v3166 = vadd.f32 %v3117, %v3165
        %v3167 = vpop.f32.mrf.mxu0
        %v3168 = vadd.f32 %v3119, %v3167
        %3169 = vdwg.mxu0
        %3170 = vmatpush.bf16.msra.mxu0 %v2552
        %3171 = vmatpush.bf16.msra.mxu0 %v2548
        %3172 = vmatpush.bf16.msra.mxu0 %v2544
        %3173 = vmatpush.bf16.msra.mxu0 %v2540
        %3174 = vmatpush.bf16.msra.mxu0 %v2536
        %3175 = vmatpush.bf16.msra.mxu0 %v2532
        %3176 = vmatpush.bf16.msra.mxu0 %v2528
        %3177 = vmatpush.bf16.msra.mxu0 %v2524
        %3178 = vmatmul.bf16.gmra.mxu0 %v1968
        %v3179 = vpop.f32.mrf.mxu0
        %v3180 = vadd.f32 %v2132, %v3179
        %v3181 = vpop.f32.mrf.mxu0
        %v3182 = vadd.f32 %v2132, %v3181
        %3183 = vmatmul.bf16.gmra.mxu0 %v1972
        %v3184 = vpop.f32.mrf.mxu0
        %v3185 = vadd.f32 %v2132, %v3184
        %v3186 = vpop.f32.mrf.mxu0
        %v3187 = vadd.f32 %v2132, %v3186
        %3188 = vmatmul.bf16.gmra.mxu0 %v1976
        %v3189 = vpop.f32.mrf.mxu0
        %v3190 = vadd.f32 %v2132, %v3189
        %v3191 = vpop.f32.mrf.mxu0
        %v3192 = vadd.f32 %v2132, %v3191
        %3193 = vmatmul.bf16.gmra.mxu0 %v1980
        %v3194 = vpop.f32.mrf.mxu0
        %v3195 = vadd.f32 %v2132, %v3194
        %v3196 = vpop.f32.mrf.mxu0
        %v3197 = vadd.f32 %v2132, %v3196
        %3198 = vmatmul.bf16.gmra.mxu0 %v1984
        %v3199 = vpop.f32.mrf.mxu0
        %v3200 = vadd.f32 %v2132, %v3199
        %v3201 = vpop.f32.mrf.mxu0
        %v3202 = vadd.f32 %v2132, %v3201
        %3203 = vmatmul.bf16.gmra.mxu0 %v1988
        %v3204 = vpop.f32.mrf.mxu0
        %v3205 = vadd.f32 %v2132, %v3204
        %v3206 = vpop.f32.mrf.mxu0
        %v3207 = vadd.f32 %v2132, %v3206
        %3208 = vmatmul.bf16.gmra.mxu0 %v1992
        %v3209 = vpop.f32.mrf.mxu0
        %v3210 = vadd.f32 %v2132, %v3209
        %v3211 = vpop.f32.mrf.mxu0
        %v3212 = vadd.f32 %v2132, %v3211
        %3213 = vmatmul.bf16.gmra.mxu0 %v1996
        %v3214 = vpop.f32.mrf.mxu0
        %v3215 = vadd.f32 %v2132, %v3214
        %v3216 = vpop.f32.mrf.mxu0
        %v3217 = vadd.f32 %v2132, %v3216
        %3218 = vdwg.mxu0
        %3219 = vmatpush.bf16.msra.mxu0 %v2584
        %3220 = vmatpush.bf16.msra.mxu0 %v2580
        %3221 = vmatpush.bf16.msra.mxu0 %v2576
        %3222 = vmatpush.bf16.msra.mxu0 %v2572
        %3223 = vmatpush.bf16.msra.mxu0 %v2568
        %3224 = vmatpush.bf16.msra.mxu0 %v2564
        %3225 = vmatpush.bf16.msra.mxu0 %v2560
        %3226 = vmatpush.bf16.msra.mxu0 %v2556
        %3227 = vmatmul.bf16.gmra.mxu0 %v1969
        %v3228 = vpop.f32.mrf.mxu0
        %v3229 = vadd.f32 %v3180, %v3228
        %v3230 = vpop.f32.mrf.mxu0
        %v3231 = vadd.f32 %v3182, %v3230
        %3232 = vmatmul.bf16.gmra.mxu0 %v1973
        %v3233 = vpop.f32.mrf.mxu0
        %v3234 = vadd.f32 %v3185, %v3233
        %v3235 = vpop.f32.mrf.mxu0
        %v3236 = vadd.f32 %v3187, %v3235
        %3237 = vmatmul.bf16.gmra.mxu0 %v1977
        %v3238 = vpop.f32.mrf.mxu0
        %v3239 = vadd.f32 %v3190, %v3238
        %v3240 = vpop.f32.mrf.mxu0
        %v3241 = vadd.f32 %v3192, %v3240
        %3242 = vmatmul.bf16.gmra.mxu0 %v1981
        %v3243 = vpop.f32.mrf.mxu0
        %v3244 = vadd.f32 %v3195, %v3243
        %v3245 = vpop.f32.mrf.mxu0
        %v3246 = vadd.f32 %v3197, %v3245
        %3247 = vmatmul.bf16.gmra.mxu0 %v1985
        %v3248 = vpop.f32.mrf.mxu0
        %v3249 = vadd.f32 %v3200, %v3248
        %v3250 = vpop.f32.mrf.mxu0
        %v3251 = vadd.f32 %v3202, %v3250
        %3252 = vmatmul.bf16.gmra.mxu0 %v1989
        %v3253 = vpop.f32.mrf.mxu0
        %v3254 = vadd.f32 %v3205, %v3253
        %v3255 = vpop.f32.mrf.mxu0
        %v3256 = vadd.f32 %v3207, %v3255
        %3257 = vmatmul.bf16.gmra.mxu0 %v1993
        %v3258 = vpop.f32.mrf.mxu0
        %v3259 = vadd.f32 %v3210, %v3258
        %v3260 = vpop.f32.mrf.mxu0
        %v3261 = vadd.f32 %v3212, %v3260
        %3262 = vmatmul.bf16.gmra.mxu0 %v1997
        %v3263 = vpop.f32.mrf.mxu0
        %v3264 = vadd.f32 %v3215, %v3263
        %v3265 = vpop.f32.mrf.mxu0
        %v3266 = vadd.f32 %v3217, %v3265
        %3267 = vdwg.mxu0
        %3268 = vmatpush.bf16.msra.mxu0 %v2616
        %3269 = vmatpush.bf16.msra.mxu0 %v2612
        %3270 = vmatpush.bf16.msra.mxu0 %v2608
        %3271 = vmatpush.bf16.msra.mxu0 %v2604
        %3272 = vmatpush.bf16.msra.mxu0 %v2600
        %3273 = vmatpush.bf16.msra.mxu0 %v2596
        %3274 = vmatpush.bf16.msra.mxu0 %v2592
        %3275 = vmatpush.bf16.msra.mxu0 %v2588
        %3276 = vmatmul.bf16.gmra.mxu0 %v1970
        %v3277 = vpop.f32.mrf.mxu0
        %v3278 = vadd.f32 %v3229, %v3277
        %v3279 = vpop.f32.mrf.mxu0
        %v3280 = vadd.f32 %v3231, %v3279
        %3281 = vmatmul.bf16.gmra.mxu0 %v1974
        %v3282 = vpop.f32.mrf.mxu0
        %v3283 = vadd.f32 %v3234, %v3282
        %v3284 = vpop.f32.mrf.mxu0
        %v3285 = vadd.f32 %v3236, %v3284
        %3286 = vmatmul.bf16.gmra.mxu0 %v1978
        %v3287 = vpop.f32.mrf.mxu0
        %v3288 = vadd.f32 %v3239, %v3287
        %v3289 = vpop.f32.mrf.mxu0
        %v3290 = vadd.f32 %v3241, %v3289
        %3291 = vmatmul.bf16.gmra.mxu0 %v1982
        %v3292 = vpop.f32.mrf.mxu0
        %v3293 = vadd.f32 %v3244, %v3292
        %v3294 = vpop.f32.mrf.mxu0
        %v3295 = vadd.f32 %v3246, %v3294
        %3296 = vmatmul.bf16.gmra.mxu0 %v1986
        %v3297 = vpop.f32.mrf.mxu0
        %v3298 = vadd.f32 %v3249, %v3297
        %v3299 = vpop.f32.mrf.mxu0
        %v3300 = vadd.f32 %v3251, %v3299
        %3301 = vmatmul.bf16.gmra.mxu0 %v1990
        %v3302 = vpop.f32.mrf.mxu0
        %v3303 = vadd.f32 %v3254, %v3302
        %v3304 = vpop.f32.mrf.mxu0
        %v3305 = vadd.f32 %v3256, %v3304
        %3306 = vmatmul.bf16.gmra.mxu0 %v1994
        %v3307 = vpop.f32.mrf.mxu0
        %v3308 = vadd.f32 %v3259, %v3307
        %v3309 = vpop.f32.mrf.mxu0
        %v3310 = vadd.f32 %v3261, %v3309
        %3311 = vmatmul.bf16.gmra.mxu0 %v1998
        %v3312 = vpop.f32.mrf.mxu0
        %v3313 = vadd.f32 %v3264, %v3312
        %v3314 = vpop.f32.mrf.mxu0
        %v3315 = vadd.f32 %v3266, %v3314
        %3316 = vdwg.mxu0
        %3317 = vmatpush.bf16.msra.mxu0 %v2648
        %3318 = vmatpush.bf16.msra.mxu0 %v2644
        %3319 = vmatpush.bf16.msra.mxu0 %v2640
        %3320 = vmatpush.bf16.msra.mxu0 %v2636
        %3321 = vmatpush.bf16.msra.mxu0 %v2632
        %3322 = vmatpush.bf16.msra.mxu0 %v2628
        %3323 = vmatpush.bf16.msra.mxu0 %v2624
        %3324 = vmatpush.bf16.msra.mxu0 %v2620
        %3325 = vmatmul.bf16.gmra.mxu0 %v1971
        %v3326 = vpop.f32.mrf.mxu0
        %v3327 = vadd.f32 %v3278, %v3326
        %v3328 = vpop.f32.mrf.mxu0
        %v3329 = vadd.f32 %v3280, %v3328
        %3330 = vmatmul.bf16.gmra.mxu0 %v1975
        %v3331 = vpop.f32.mrf.mxu0
        %v3332 = vadd.f32 %v3283, %v3331
        %v3333 = vpop.f32.mrf.mxu0
        %v3334 = vadd.f32 %v3285, %v3333
        %3335 = vmatmul.bf16.gmra.mxu0 %v1979
        %v3336 = vpop.f32.mrf.mxu0
        %v3337 = vadd.f32 %v3288, %v3336
        %v3338 = vpop.f32.mrf.mxu0
        %v3339 = vadd.f32 %v3290, %v3338
        %3340 = vmatmul.bf16.gmra.mxu0 %v1983
        %v3341 = vpop.f32.mrf.mxu0
        %v3342 = vadd.f32 %v3293, %v3341
        %v3343 = vpop.f32.mrf.mxu0
        %v3344 = vadd.f32 %v3295, %v3343
        %3345 = vmatmul.bf16.gmra.mxu0 %v1987
        %v3346 = vpop.f32.mrf.mxu0
        %v3347 = vadd.f32 %v3298, %v3346
        %v3348 = vpop.f32.mrf.mxu0
        %v3349 = vadd.f32 %v3300, %v3348
        %3350 = vmatmul.bf16.gmra.mxu0 %v1991
        %v3351 = vpop.f32.mrf.mxu0
        %v3352 = vadd.f32 %v3303, %v3351
        %v3353 = vpop.f32.mrf.mxu0
        %v3354 = vadd.f32 %v3305, %v3353
        %3355 = vmatmul.bf16.gmra.mxu0 %v1995
        %v3356 = vpop.f32.mrf.mxu0
        %v3357 = vadd.f32 %v3308, %v3356
        %v3358 = vpop.f32.mrf.mxu0
        %v3359 = vadd.f32 %v3310, %v3358
        %3360 = vmatmul.bf16.gmra.mxu0 %v1999
        %v3361 = vpop.f32.mrf.mxu0
        %v3362 = vadd.f32 %v3313, %v3361
        %v3363 = vpop.f32.mrf.mxu0
        %v3364 = vadd.f32 %v3315, %v3363
        %3365 = vdwg.mxu0
        %3366 = vmatpush.bf16.msra.mxu0 %v2553
        %3367 = vmatpush.bf16.msra.mxu0 %v2549
        %3368 = vmatpush.bf16.msra.mxu0 %v2545
        %3369 = vmatpush.bf16.msra.mxu0 %v2541
        %3370 = vmatpush.bf16.msra.mxu0 %v2537
        %3371 = vmatpush.bf16.msra.mxu0 %v2533
        %3372 = vmatpush.bf16.msra.mxu0 %v2529
        %3373 = vmatpush.bf16.msra.mxu0 %v2525
        %3374 = vmatmul.bf16.gmra.mxu0 %v1968
        %v3375 = vpop.f32.mrf.mxu0
        %v3376 = vadd.f32 %v2133, %v3375
        %v3377 = vpop.f32.mrf.mxu0
        %v3378 = vadd.f32 %v2133, %v3377
        %3379 = vmatmul.bf16.gmra.mxu0 %v1972
        %v3380 = vpop.f32.mrf.mxu0
        %v3381 = vadd.f32 %v2133, %v3380
        %v3382 = vpop.f32.mrf.mxu0
        %v3383 = vadd.f32 %v2133, %v3382
        %3384 = vmatmul.bf16.gmra.mxu0 %v1976
        %v3385 = vpop.f32.mrf.mxu0
        %v3386 = vadd.f32 %v2133, %v3385
        %v3387 = vpop.f32.mrf.mxu0
        %v3388 = vadd.f32 %v2133, %v3387
        %3389 = vmatmul.bf16.gmra.mxu0 %v1980
        %v3390 = vpop.f32.mrf.mxu0
        %v3391 = vadd.f32 %v2133, %v3390
        %v3392 = vpop.f32.mrf.mxu0
        %v3393 = vadd.f32 %v2133, %v3392
        %3394 = vmatmul.bf16.gmra.mxu0 %v1984
        %v3395 = vpop.f32.mrf.mxu0
        %v3396 = vadd.f32 %v2133, %v3395
        %v3397 = vpop.f32.mrf.mxu0
        %v3398 = vadd.f32 %v2133, %v3397
        %3399 = vmatmul.bf16.gmra.mxu0 %v1988
        %v3400 = vpop.f32.mrf.mxu0
        %v3401 = vadd.f32 %v2133, %v3400
        %v3402 = vpop.f32.mrf.mxu0
        %v3403 = vadd.f32 %v2133, %v3402
        %3404 = vmatmul.bf16.gmra.mxu0 %v1992
        %v3405 = vpop.f32.mrf.mxu0
        %v3406 = vadd.f32 %v2133, %v3405
        %v3407 = vpop.f32.mrf.mxu0
        %v3408 = vadd.f32 %v2133, %v3407
        %3409 = vmatmul.bf16.gmra.mxu0 %v1996
        %v3410 = vpop.f32.mrf.mxu0
        %v3411 = vadd.f32 %v2133, %v3410
        %v3412 = vpop.f32.mrf.mxu0
        %v3413 = vadd.f32 %v2133, %v3412
        %3414 = vdwg.mxu0
        %3415 = vmatpush.bf16.msra.mxu0 %v2585
        %3416 = vmatpush.bf16.msra.mxu0 %v2581
        %3417 = vmatpush.bf16.msra.mxu0 %v2577
        %3418 = vmatpush.bf16.msra.mxu0 %v2573
        %3419 = vmatpush.bf16.msra.mxu0 %v2569
        %3420 = vmatpush.bf16.msra.mxu0 %v2565
        %3421 = vmatpush.bf16.msra.mxu0 %v2561
        %3422 = vmatpush.bf16.msra.mxu0 %v2557
        %3423 = vmatmul.bf16.gmra.mxu0 %v1969
        %v3424 = vpop.f32.mrf.mxu0
        %v3425 = vadd.f32 %v3376, %v3424
        %v3426 = vpop.f32.mrf.mxu0
        %v3427 = vadd.f32 %v3378, %v3426
        %3428 = vmatmul.bf16.gmra.mxu0 %v1973
        %v3429 = vpop.f32.mrf.mxu0
        %v3430 = vadd.f32 %v3381, %v3429
        %v3431 = vpop.f32.mrf.mxu0
        %v3432 = vadd.f32 %v3383, %v3431
        %3433 = vmatmul.bf16.gmra.mxu0 %v1977
        %v3434 = vpop.f32.mrf.mxu0
        %v3435 = vadd.f32 %v3386, %v3434
        %v3436 = vpop.f32.mrf.mxu0
        %v3437 = vadd.f32 %v3388, %v3436
        %3438 = vmatmul.bf16.gmra.mxu0 %v1981
        %v3439 = vpop.f32.mrf.mxu0
        %v3440 = vadd.f32 %v3391, %v3439
        %v3441 = vpop.f32.mrf.mxu0
        %v3442 = vadd.f32 %v3393, %v3441
        %3443 = vmatmul.bf16.gmra.mxu0 %v1985
        %v3444 = vpop.f32.mrf.mxu0
        %v3445 = vadd.f32 %v3396, %v3444
        %v3446 = vpop.f32.mrf.mxu0
        %v3447 = vadd.f32 %v3398, %v3446
        %3448 = vmatmul.bf16.gmra.mxu0 %v1989
        %v3449 = vpop.f32.mrf.mxu0
        %v3450 = vadd.f32 %v3401, %v3449
        %v3451 = vpop.f32.mrf.mxu0
        %v3452 = vadd.f32 %v3403, %v3451
        %3453 = vmatmul.bf16.gmra.mxu0 %v1993
        %v3454 = vpop.f32.mrf.mxu0
        %v3455 = vadd.f32 %v3406, %v3454
        %v3456 = vpop.f32.mrf.mxu0
        %v3457 = vadd.f32 %v3408, %v3456
        %3458 = vmatmul.bf16.gmra.mxu0 %v1997
        %v3459 = vpop.f32.mrf.mxu0
        %v3460 = vadd.f32 %v3411, %v3459
        %v3461 = vpop.f32.mrf.mxu0
        %v3462 = vadd.f32 %v3413, %v3461
        %3463 = vdwg.mxu0
        %3464 = vmatpush.bf16.msra.mxu0 %v2617
        %3465 = vmatpush.bf16.msra.mxu0 %v2613
        %3466 = vmatpush.bf16.msra.mxu0 %v2609
        %3467 = vmatpush.bf16.msra.mxu0 %v2605
        %3468 = vmatpush.bf16.msra.mxu0 %v2601
        %3469 = vmatpush.bf16.msra.mxu0 %v2597
        %3470 = vmatpush.bf16.msra.mxu0 %v2593
        %3471 = vmatpush.bf16.msra.mxu0 %v2589
        %3472 = vmatmul.bf16.gmra.mxu0 %v1970
        %v3473 = vpop.f32.mrf.mxu0
        %v3474 = vadd.f32 %v3425, %v3473
        %v3475 = vpop.f32.mrf.mxu0
        %v3476 = vadd.f32 %v3427, %v3475
        %3477 = vmatmul.bf16.gmra.mxu0 %v1974
        %v3478 = vpop.f32.mrf.mxu0
        %v3479 = vadd.f32 %v3430, %v3478
        %v3480 = vpop.f32.mrf.mxu0
        %v3481 = vadd.f32 %v3432, %v3480
        %3482 = vmatmul.bf16.gmra.mxu0 %v1978
        %v3483 = vpop.f32.mrf.mxu0
        %v3484 = vadd.f32 %v3435, %v3483
        %v3485 = vpop.f32.mrf.mxu0
        %v3486 = vadd.f32 %v3437, %v3485
        %3487 = vmatmul.bf16.gmra.mxu0 %v1982
        %v3488 = vpop.f32.mrf.mxu0
        %v3489 = vadd.f32 %v3440, %v3488
        %v3490 = vpop.f32.mrf.mxu0
        %v3491 = vadd.f32 %v3442, %v3490
        %3492 = vmatmul.bf16.gmra.mxu0 %v1986
        %v3493 = vpop.f32.mrf.mxu0
        %v3494 = vadd.f32 %v3445, %v3493
        %v3495 = vpop.f32.mrf.mxu0
        %v3496 = vadd.f32 %v3447, %v3495
        %3497 = vmatmul.bf16.gmra.mxu0 %v1990
        %v3498 = vpop.f32.mrf.mxu0
        %v3499 = vadd.f32 %v3450, %v3498
        %v3500 = vpop.f32.mrf.mxu0
        %v3501 = vadd.f32 %v3452, %v3500
        %3502 = vmatmul.bf16.gmra.mxu0 %v1994
        %v3503 = vpop.f32.mrf.mxu0
        %v3504 = vadd.f32 %v3455, %v3503
        %v3505 = vpop.f32.mrf.mxu0
        %v3506 = vadd.f32 %v3457, %v3505
        %3507 = vmatmul.bf16.gmra.mxu0 %v1998
        %v3508 = vpop.f32.mrf.mxu0
        %v3509 = vadd.f32 %v3460, %v3508
        %v3510 = vpop.f32.mrf.mxu0
        %v3511 = vadd.f32 %v3462, %v3510
        %3512 = vdwg.mxu0
        %3513 = vmatpush.bf16.msra.mxu0 %v2649
        %3514 = vmatpush.bf16.msra.mxu0 %v2645
        %3515 = vmatpush.bf16.msra.mxu0 %v2641
        %3516 = vmatpush.bf16.msra.mxu0 %v2637
        %3517 = vmatpush.bf16.msra.mxu0 %v2633
        %3518 = vmatpush.bf16.msra.mxu0 %v2629
        %3519 = vmatpush.bf16.msra.mxu0 %v2625
        %3520 = vmatpush.bf16.msra.mxu0 %v2621
        %3521 = vmatmul.bf16.gmra.mxu0 %v1971
        %v3522 = vpop.f32.mrf.mxu0
        %v3523 = vadd.f32 %v3474, %v3522
        %v3524 = vpop.f32.mrf.mxu0
        %v3525 = vadd.f32 %v3476, %v3524
        %3526 = vmatmul.bf16.gmra.mxu0 %v1975
        %v3527 = vpop.f32.mrf.mxu0
        %v3528 = vadd.f32 %v3479, %v3527
        %v3529 = vpop.f32.mrf.mxu0
        %v3530 = vadd.f32 %v3481, %v3529
        %3531 = vmatmul.bf16.gmra.mxu0 %v1979
        %v3532 = vpop.f32.mrf.mxu0
        %v3533 = vadd.f32 %v3484, %v3532
        %v3534 = vpop.f32.mrf.mxu0
        %v3535 = vadd.f32 %v3486, %v3534
        %3536 = vmatmul.bf16.gmra.mxu0 %v1983
        %v3537 = vpop.f32.mrf.mxu0
        %v3538 = vadd.f32 %v3489, %v3537
        %v3539 = vpop.f32.mrf.mxu0
        %v3540 = vadd.f32 %v3491, %v3539
        %3541 = vmatmul.bf16.gmra.mxu0 %v1987
        %v3542 = vpop.f32.mrf.mxu0
        %v3543 = vadd.f32 %v3494, %v3542
        %v3544 = vpop.f32.mrf.mxu0
        %v3545 = vadd.f32 %v3496, %v3544
        %3546 = vmatmul.bf16.gmra.mxu0 %v1991
        %v3547 = vpop.f32.mrf.mxu0
        %v3548 = vadd.f32 %v3499, %v3547
        %v3549 = vpop.f32.mrf.mxu0
        %v3550 = vadd.f32 %v3501, %v3549
        %3551 = vmatmul.bf16.gmra.mxu0 %v1995
        %v3552 = vpop.f32.mrf.mxu0
        %v3553 = vadd.f32 %v3504, %v3552
        %v3554 = vpop.f32.mrf.mxu0
        %v3555 = vadd.f32 %v3506, %v3554
        %3556 = vmatmul.bf16.gmra.mxu0 %v1999
        %v3557 = vpop.f32.mrf.mxu0
        %v3558 = vadd.f32 %v3509, %v3557
        %v3559 = vpop.f32.mrf.mxu0
        %v3560 = vadd.f32 %v3511, %v3559
        %3561 = vdwg.mxu0
        %v3562 = vpack.c.bf16 %v3131, %v2935
        %v3563 = vpack.c.bf16 %v3523, %v3327
        %v3564 = vpack.c.bf16 %v3133, %v2937
        %v3565 = vpack.c.bf16 %v3525, %v3329
        %v3566 = vpack.c.bf16 %v3136, %v2940
        %v3567 = vpack.c.bf16 %v3528, %v3332
        %v3568 = vpack.c.bf16 %v3138, %v2942
        %v3569 = vpack.c.bf16 %v3530, %v3334
        %v3570 = vpack.c.bf16 %v3141, %v2945
        %v3571 = vpack.c.bf16 %v3533, %v3337
        %v3572 = vpack.c.bf16 %v3143, %v2947
        %v3573 = vpack.c.bf16 %v3535, %v3339
        %v3574 = vpack.c.bf16 %v3146, %v2950
        %v3575 = vpack.c.bf16 %v3538, %v3342
        %v3576 = vpack.c.bf16 %v3148, %v2952
        %v3577 = vpack.c.bf16 %v3540, %v3344
        %v3578 = vpack.c.bf16 %v3151, %v2955
        %v3579 = vpack.c.bf16 %v3543, %v3347
        %v3580 = vpack.c.bf16 %v3153, %v2957
        %v3581 = vpack.c.bf16 %v3545, %v3349
        %v3582 = vpack.c.bf16 %v3156, %v2960
        %v3583 = vpack.c.bf16 %v3548, %v3352
        %v3584 = vpack.c.bf16 %v3158, %v2962
        %v3585 = vpack.c.bf16 %v3550, %v3354
        %v3586 = vpack.c.bf16 %v3161, %v2965
        %v3587 = vpack.c.bf16 %v3553, %v3357
        %v3588 = vpack.c.bf16 %v3163, %v2967
        %v3589 = vpack.c.bf16 %v3555, %v3359
        %v3590 = vpack.c.bf16 %v3166, %v2970
        %v3591 = vpack.c.bf16 %v3558, %v3362
        %v3592 = vpack.c.bf16 %v3168, %v2972
        %v3593 = vpack.c.bf16 %v3560, %v3364
        %3594 = vst [vmem:[%s307] sm:$0xff] %v3562
        %3595 = vst [vmem:[%s307 + $0x8] sm:$0xff] %v3563
        %3596 = vst [vmem:[%s307 + $0x10] sm:$0xff] %v3564
        %3597 = vst [vmem:[%s307 + $0x18] sm:$0xff] %v3565
        %3598 = vst [vmem:[%s307 + $0x20] sm:$0xff] %v3566
        %3599 = vst [vmem:[%s307 + $0x28] sm:$0xff] %v3567
        %3600 = vst [vmem:[%s307 + $0x30] sm:$0xff] %v3568
        %3601 = vst [vmem:[%s307 + $0x38] sm:$0xff] %v3569
        %3602 = vst [vmem:[%s307 + $0x40] sm:$0xff] %v3570
        %3603 = vst [vmem:[%s307 + $0x48] sm:$0xff] %v3571
        %3604 = vst [vmem:[%s307 + $0x50] sm:$0xff] %v3572
        %3605 = vst [vmem:[%s307 + $0x58] sm:$0xff] %v3573
        %3606 = vst [vmem:[%s307 + $0x60] sm:$0xff] %v3574
        %3607 = vst [vmem:[%s307 + $0x68] sm:$0xff] %v3575
        %3608 = vst [vmem:[%s307 + $0x70] sm:$0xff] %v3576
        %3609 = vst [vmem:[%s307 + $0x78] sm:$0xff] %v3577
        %3610 = vst [vmem:[%s307 + $0x80] sm:$0xff] %v3578
        %3611 = vst [vmem:[%s307 + $0x88] sm:$0xff] %v3579
        %3612 = vst [vmem:[%s307 + $0x90] sm:$0xff] %v3580
        %3613 = vst [vmem:[%s307 + $0x98] sm:$0xff] %v3581
        %3614 = vst [vmem:[%s307 + $0xa0] sm:$0xff] %v3582
        %3615 = vst [vmem:[%s307 + $0xa8] sm:$0xff] %v3583
        %3616 = vst [vmem:[%s307 + $0xb0] sm:$0xff] %v3584
        %3617 = vst [vmem:[%s307 + $0xb8] sm:$0xff] %v3585
        %3618 = vst [vmem:[%s307 + $0xc0] sm:$0xff] %v3586
        %3619 = vst [vmem:[%s307 + $0xc8] sm:$0xff] %v3587
        %3620 = vst [vmem:[%s307 + $0xd0] sm:$0xff] %v3588
        %3621 = vst [vmem:[%s307 + $0xd8] sm:$0xff] %v3589
        %3622 = vst [vmem:[%s307 + $0xe0] sm:$0xff] %v3590
        %3623 = vst [vmem:[%s307 + $0xe8] sm:$0xff] %v3591
        %3624 = vst [vmem:[%s307 + $0xf0] sm:$0xff] %v3592
        %3625 = vst [vmem:[%s307 + $0xf8] sm:$0xff] %v3593
        %s3626 = sand.u32 %s142, 1
        %s3627 = scalar_lea.sflag [#allocation4], %s3626
        %s3628 = sand.u32 %s142, 1
        %s3629 = smul.addr %s3628, 256
        %s3630 = scalar_lea.vmem [#allocation11], %s3629
        // Predicated region
        $region61: #{offload_decoder_forward.1} parent=39 // pred_check
          %p3631 = pneg %p152
        $region62: #{offload_decoder_forward.1} parent=39 // pred_check_branch
          %3633 = sbr.rel (%p3631) target = $region64
        $region63: #{offload_decoder_forward.1} parent=39 // pred_region
          %s3634 = smul.u32 16, %s24
          %3636 = vsyncadd %s3627, 0
          %s3637 = smul.addr %s3634, 4
          %s3638 = smul.addr %s3637, 4
          %s3639 = scalar_lea.hbm %s5, %s3638
          %s3640 = sshll.u32 %s3630, 4
          %s3641 = int_to_ptr.vmem [resolvable:$true] %s3640
          %s3642 = sshll.u32 %s3639, 4
          %s3643 = int_to_ptr.hbm [resolvable:$true] %s3642
          %3648 = dma.vmem_to_hbm [thread:$0]  %s3641, 4096, %s3643, %s3627, 256, 256, 16
        $region64: #{offload_decoder_forward.1} parent=39 // pred_fallthru
          _
      $region40: #{offload_decoder_forward.1} parent=5 // pred_fallthru
        _
      %p3649 = scmp.le.s32.totalorder 2, %s19
      // Predicated region
      $region65: #{offload_decoder_forward.1} parent=5 // pred_check
        %p3650 = pneg %p3649
      $region66: #{offload_decoder_forward.1} parent=5 // pred_check_branch
        %3652 = sbr.rel (%p3650) target = $region68
      $region67: #{offload_decoder_forward.1} parent=5 // pred_region
        %s3653 = ssub.s32 %s19, 2
        // Predicated region
        $region69: #{offload_decoder_forward.1} parent=67 // pred_check
          %p3654 = pneg %p158
        $region70: #{offload_decoder_forward.1} parent=67 // pred_check_branch
          %3656 = sbr.rel (%p3654) target = $region72
        $region71: #{offload_decoder_forward.1} parent=67 // pred_region
          %s3657 = sand.u32 %s143, 1
          %s3658 = scalar_lea.sflag [#allocation4], %s3657
          %s3659 = sand.u32 %s143, 1
          %s3660 = smul.addr %s3659, 256
          %s3661 = scalar_lea.vmem [#allocation11], %s3660
          %3663 = dma.done %s3658, 4096
        $region72: #{offload_decoder_forward.1} parent=67 // pred_fallthru
          _
      $region68: #{offload_decoder_forward.1} parent=5 // pred_fallthru
        _
    $region6: #{offload_decoder_forward.1} parent=1 // loop_footer
      %s23 = sadd.s32 1, %s19
    $region7: #{offload_decoder_forward.1} parent=1 // loop_footer_branch
      %18 = sbr.rel target = $region3
    $region8: #{offload_decoder_forward.1} parent=1 // loop_exit
      _
    %3664 = vsyncpa [#allocation3], 1
    %s3665 = scalar_lea.sflag [#allocation3], 1
    %3666 = vsyncpa %s3665, 1
    %3667 = vsyncpa [#allocation6], 1
    %3668 = vsyncpa [#allocation9], 1
    %3669 = vsyncpa [#allocation4], 1
    %s3670 = scalar_lea.sflag [#allocation4], 1
    %3671 = vsyncpa %s3670, 1

</llo_original>
